<compile_context>
chip_gen: v7x
topology: tpu7x:2x2x1
jax: 0.10.0
libtpu: 0.0.40
codegen_flags: <defaults>
</compile_context>

<pallas_src>
import functools

import jax
import jax.numpy as jnp
from jax.experimental import pallas as pl
from jax.experimental.pallas import tpu as pltpu

_BN_EPS = 1e-5
_LANE = 128
_SUBLANE = 8
EXPANSION = 4


# ---------------------------------------------------------------------------
# small helpers
# ---------------------------------------------------------------------------
def _round_up(x, m):
    return (x + m - 1) // m * m


def _pick_tile_m(m, target=512):
    """Row tile for the flattened (M, C) kernels (512 rows ~ 85%+ of HBM roofline)."""
    if m >= target:
        return target
    return max(_SUBLANE, _round_up(m, _SUBLANE))


def _pick_row_tile(ho, target=8):
    """Output-row tile for the fused 3x3 conv; must divide Ho exactly."""
    for th in range(min(target, ho), 0, -1):
        if ho % th == 0:
            return th
    return 1


def _vmem_limit(bytes_needed):
    # generous 2x headroom over the estimated footprint, floor 16 MiB,
    # capped at 48 MiB (safe on v7x's 64 MiB physical VMEM).
    return int(min(max(2 * int(bytes_needed) + (4 << 20), 16 << 20), 48 << 20))


def _compiler_params(semantics, bytes_needed):
    return pltpu.CompilerParams(dimension_semantics=semantics,
                                vmem_limit_bytes=_vmem_limit(bytes_needed))


def _resident_spec(shape):
    """BlockSpec covering the whole (small) array, constant across the grid."""
    nd = len(shape)
    return pl.BlockSpec(shape, lambda *_: (0,) * nd)


def _pad2d(a, rows, cols):
    r, c = a.shape
    if r == rows and c == cols:
        return a
    return jnp.pad(a, ((0, rows - r), (0, cols - c)))


def _pad_param_vec(v, cols):
    v = v.reshape(1, -1).astype(jnp.float32)
    if v.shape[1] != cols:
        v = jnp.pad(v, ((0, 0), (0, cols - v.shape[1])))
    return v


# ---------------------------------------------------------------------------
# Pallas kernels
# ---------------------------------------------------------------------------
def _matmul_stats_kernel(x_ref, w_ref, y_ref, stats_ref):
    """Pass A: y = x @ w (bf16 MXU, f32 accum) + per-channel sum / sumsq."""
    @pl.when(pl.program_id(0) == 0)
    def _init():
        stats_ref[...] = jnp.zeros_like(stats_ref)

    y = jnp.dot(x_ref[...], w_ref[...], preferred_element_type=jnp.float32)
    y_ref[...] = y
    stats_ref[...] += jnp.concatenate(
        [jnp.sum(y, axis=0, keepdims=True),
         jnp.sum(y * y, axis=0, keepdims=True)], axis=0)


def _conv3x3_stats_kernel(xp_ref, w_ref, y_ref, stats_ref, *, th, wo):
    """Pass A of the 3x3/stride-1 conv: 9 shifted-window matmuls, no HBM im2col.

    Grid = (batch, Ho // th).  xp_ref is the full spatially-padded image of one
    batch element (VMEM resident across the row-tile axis); stats are
    accumulated per image so the batch axis can be 'parallel'.
    """
    @pl.when(pl.program_id(1) == 0)
    def _init():
        stats_ref[...] = jnp.zeros_like(stats_ref)

    h0 = pl.program_id(1) * th
    cin = xp_ref.shape[-1]
    cout = w_ref.shape[-1]
    acc = jnp.zeros((th * wo, cout), jnp.float32)
    for k in range(9):
        kh, kw = k // 3, k % 3
        patch = xp_ref[pl.ds(h0 + kh, th), pl.ds(kw, wo), :]      # (th, wo, cin)
        acc = acc + jnp.dot(patch.reshape(th * wo, cin), w_ref[k],
                            preferred_element_type=jnp.float32)
    y_ref[...] = acc.reshape(th, wo, cout)
    stats_ref[...] += jnp.concatenate(
        [jnp.sum(acc, axis=0, keepdims=True),
         jnp.sum(acc * acc, axis=0, keepdims=True)], axis=0)


def _bn_scale_shift(stats, gamma, beta, count):
    """Per-channel affine from accumulated sum/sumsq (biased variance, f32)."""
    inv_n = 1.0 / count
    mean = stats[0:1, :] * inv_n
    var = jnp.maximum(stats[1:2, :] * inv_n - mean * mean, 0.0)
    scale = jax.lax.rsqrt(var + _BN_EPS) * gamma
    shift = beta - mean * scale
    return scale, shift


def _bn_act_kernel(y_ref, stats_ref, g_ref, b_ref, o_ref, *, count, relu, mask_tail):
    """Pass B: normalize + affine + optional ReLU (+ zero the M-padding tail)."""
    scale, shift = _bn_scale_shift(stats_ref[...], g_ref[...], b_ref[...], count)
    out = y_ref[...] * scale + shift
    if relu:
        out = jnp.maximum(out, 0.0)
    if mask_tail:
        rows = (pl.program_id(0) * y_ref.shape[0]
                + jax.lax.broadcasted_iota(jnp.int32, out.shape, 0))
        out = jnp.where(rows < count, out, 0.0)
    o_ref[...] = out.astype(o_ref.dtype)


def _bn_add_bn_relu_kernel(y_ref, s_ref, g_ref, b_ref,
                           r_ref, rs_ref, rg_ref, rb_ref, o_ref, *, count):
    """Final pass B with conv shortcut: BN(main) + BN(shortcut) -> add -> ReLU."""
    scale, shift = _bn_scale_shift(s_ref[...], g_ref[...], b_ref[...], count)
    rscale, rshift = _bn_scale_shift(rs_ref[...], rg_ref[...], rb_ref[...], count)
    out = (y_ref[...] * scale + shift) + (r_ref[...] * rscale + rshift)
    o_ref[...] = jnp.maximum(out, 0.0).astype(o_ref.dtype)


def _bn_add_identity_relu_kernel(y_ref, s_ref, g_ref, b_ref, r_ref, o_ref, *, count):
    """Final pass B with identity shortcut: BN(main) + x -> ReLU."""
    scale, shift = _bn_scale_shift(s_ref[...], g_ref[...], b_ref[...], count)
    out = (y_ref[...] * scale + shift) + r_ref[...].astype(jnp.float32)
    o_ref[...] = jnp.maximum(out, 0.0).astype(o_ref.dtype)


# ---------------------------------------------------------------------------
# pallas_call wrappers
# ---------------------------------------------------------------------------
def matmul_stats(x, w, *, tile_m):
    m, k = x.shape
    c = w.shape[1]
    tile_bytes = tile_m * k * x.dtype.itemsize + tile_m * c * 4
    resident = k * c * w.dtype.itemsize + 2 * c * 4
    cost = pl.CostEstimate(
        flops=int(2 * m * k * c + 3 * m * c),
        transcendentals=0,
        bytes_accessed=int(m * k * x.dtype.itemsize + k * c * w.dtype.itemsize
                           + m * c * 4 + 2 * c * 4))
    return pl.pallas_call(
        _matmul_stats_kernel,
        out_shape=(jax.ShapeDtypeStruct((m, c), jnp.float32),
                   jax.ShapeDtypeStruct((2, c), jnp.float32)),
        grid=(m // tile_m,),
        in_specs=[pl.BlockSpec((tile_m, k), lambda i: (i, 0)),
                  _resident_spec((k, c))],
        out_specs=(pl.BlockSpec((tile_m, c), lambda i: (i, 0)),
                   _resident_spec((2, c))),
        compiler_params=_compiler_params(("arbitrary",), 2 * tile_bytes + resident),
        cost_estimate=cost,
    )(x, w)


def conv3x3_stats(xp, w_taps, *, th):
    n, hp, wp, cin = xp.shape
    cout = w_taps.shape[-1]
    ho, wo = hp - 2, wp - 2
    m = n * ho * wo
    kernel = functools.partial(_conv3x3_stats_kernel, th=th, wo=wo)
    tile_bytes = hp * wp * cin * 2 + th * wo * cout * 4
    resident = 9 * cin * cout * 2 + n * 2 * cout * 4
    cost = pl.CostEstimate(
        flops=int(2 * m * 9 * cin * cout + 3 * m * cout),
        transcendentals=0,
        bytes_accessed=int(n * hp * wp * cin * 2 + 9 * cin * cout * 2
                           + m * cout * 4 + n * 2 * cout * 4))
    return pl.pallas_call(
        kernel,
        out_shape=(jax.ShapeDtypeStruct((n, ho, wo, cout), jnp.float32),
                   jax.ShapeDtypeStruct((n, 2, cout), jnp.float32)),
        grid=(n, ho // th),
        in_specs=[pl.BlockSpec((None, hp, wp, cin), lambda i, j: (i, 0, 0, 0)),
                  _resident_spec((9, cin, cout))],
        out_specs=(pl.BlockSpec((None, th, wo, cout), lambda i, j: (i, j, 0, 0)),
                   pl.BlockSpec((None, 2, cout), lambda i, j: (i, 0, 0))),
        compiler_params=_compiler_params(("parallel", "arbitrary"),
                                         2 * tile_bytes + resident),
        cost_estimate=cost,
    )(xp, w_taps)


def bn_act(y, stats, gamma, beta, *, count, relu, out_dtype, mask_tail, tile_m):
    m, c = y.shape
    out_bytes = jnp.dtype(out_dtype).itemsize
    kernel = functools.partial(_bn_act_kernel, count=count, relu=relu,
                               mask_tail=mask_tail)
    tile_bytes = tile_m * c * (4 + out_bytes)
    cost = pl.CostEstimate(flops=int(4 * m * c), transcendentals=0,
                           bytes_accessed=int(m * c * (4 + out_bytes)))
    return pl.pallas_call(
        kernel,
        out_shape=jax.ShapeDtypeStruct((m, c), out_dtype),
        grid=(m // tile_m,),
        in_specs=[pl.BlockSpec((tile_m, c), lambda i: (i, 0)),
                  _resident_spec((2, c)),
                  _resident_spec((1, c)),
                  _resident_spec((1, c))],
        out_specs=pl.BlockSpec((tile_m, c), lambda i: (i, 0)),
        compiler_params=_compiler_params(("parallel",), 2 * tile_bytes + 4 * c * 4),
        cost_estimate=cost,
    )(y, stats, gamma, beta)


def bn_add_bn_relu(y, s, g, b, r, rs, rg, rb, *, count, tile_m):
    m, c = y.shape
    kernel = functools.partial(_bn_add_bn_relu_kernel, count=count)
    tile_bytes = 3 * tile_m * c * 4
    cost = pl.CostEstimate(flops=int(9 * m * c), transcendentals=0,
                           bytes_accessed=int(3 * m * c * 4))
    return pl.pallas_call(
        kernel,
        out_shape=jax.ShapeDtypeStruct((m, c), jnp.float32),
        grid=(m // tile_m,),
        in_specs=[pl.BlockSpec((tile_m, c), lambda i: (i, 0)),
                  _resident_spec((2, c)), _resident_spec((1, c)), _resident_spec((1, c)),
                  pl.BlockSpec((tile_m, c), lambda i: (i, 0)),
                  _resident_spec((2, c)), _resident_spec((1, c)), _resident_spec((1, c))],
        out_specs=pl.BlockSpec((tile_m, c), lambda i: (i, 0)),
        compiler_params=_compiler_params(("parallel",), 2 * tile_bytes + 8 * c * 4),
        cost_estimate=cost,
    )(y, s, g, b, r, rs, rg, rb)


def bn_add_identity_relu(y, s, g, b, r, *, count, tile_m):
    m, c = y.shape
    rbytes = r.dtype.itemsize
    kernel = functools.partial(_bn_add_identity_relu_kernel, count=count)
    tile_bytes = tile_m * c * (8 + rbytes)
    cost = pl.CostEstimate(flops=int(5 * m * c), transcendentals=0,
                           bytes_accessed=int(m * c * (8 + rbytes)))
    return pl.pallas_call(
        kernel,
        out_shape=jax.ShapeDtypeStruct((m, c), jnp.float32),
        grid=(m // tile_m,),
        in_specs=[pl.BlockSpec((tile_m, c), lambda i: (i, 0)),
                  _resident_spec((2, c)), _resident_spec((1, c)), _resident_spec((1, c)),
                  pl.BlockSpec((tile_m, c), lambda i: (i, 0))],
        out_specs=pl.BlockSpec((tile_m, c), lambda i: (i, 0)),
        compiler_params=_compiler_params(("parallel",), 2 * tile_bytes + 4 * c * 4),
        cost_estimate=cost,
    )(y, s, g, b, r)


# ---------------------------------------------------------------------------
# glue for the (rare) strided 3x3 path
# ---------------------------------------------------------------------------
def _im2col_3x3(x_nhwc, stride):
    """Wrapper-level im2col, used only for stride != 1 (column order kh,kw,cin)."""
    n, h, w, c = x_nhwc.shape
    xp = jnp.pad(x_nhwc, ((0, 0), (1, 1), (1, 1), (0, 0)))
    ho = (h + 2 - 3) // stride + 1
    wo = (w + 2 - 3) // stride + 1
    cols = []
    for kh in range(3):
        for kw in range(3):
            cols.append(xp[:, kh:kh + stride * ho:stride,
                           kw:kw + stride * wo:stride, :])
    return jnp.concatenate(cols, axis=-1).reshape(n * ho * wo, 9 * c)


# ---------------------------------------------------------------------------
# Bottleneck parameters + forward
# ---------------------------------------------------------------------------
def init_bottleneck_params(key, in_channels, zip_channels, stride=1):
    out_channels = EXPANSION * zip_channels
    k1, k2, k3, k4 = jax.random.split(key, 4)

    def kaiming(k, shape, fan_in):
        return jax.random.normal(k, shape, jnp.float32) * (2.0 / fan_in) ** 0.5

    params = {
        # 1x1 conv: (Cin, zip)
        "w1": kaiming(k1, (in_channels, zip_channels), in_channels),
        "g1": jnp.ones((zip_channels,), jnp.float32),
        "b1": jnp.zeros((zip_channels,), jnp.float32),
        # 3x3 conv in HWIO layout (kh, kw, cin, cout).
        # NOTE: PyTorch OIHW weights must be permuted (2, 3, 1, 0) to import.
        "w2": kaiming(k2, (3, 3, zip_channels, zip_channels), 9 * zip_channels),
        "g2": jnp.ones((zip_channels,), jnp.float32),
        "b2": jnp.zeros((zip_channels,), jnp.float32),
        # 1x1 conv: (zip, out)
        "w3": kaiming(k3, (zip_channels, out_channels), zip_channels),
        "g3": jnp.ones((out_channels,), jnp.float32),
        "b3": jnp.zeros((out_channels,), jnp.float32),
    }
    if stride != 1 or in_channels != out_channels:
        params["ws"] = kaiming(k4, (in_channels, out_channels), in_channels)
        params["gs"] = jnp.ones((out_channels,), jnp.float32)
        params["bs"] = jnp.zeros((out_channels,), jnp.float32)
    return params


def bottleneck_forward(x_nchw, params, stride=1):
    n, cin, h, w = x_nchw.shape
    zip_c = params["w1"].shape[1]
    out_c = params["w3"].shape[1]
    cin_p = _round_up(cin, _LANE)
    zip_p = _round_up(zip_c, _LANE)
    out_p = _round_up(out_c, _LANE)

    ho = (h + 2 - 3) // stride + 1
    wo = (w + 2 - 3) // stride + 1
    m1, m2 = n * h * w, n * ho * wo
    tile1, tile2 = _pick_tile_m(m1), _pick_tile_m(m2)
    m1p, m2p = _round_up(m1, tile1), _round_up(m2, tile2)

    # ---- layout glue: NCHW -> NHWC, lane/row padding, bf16 MXU operands -----
    # TODO(synk): fold the NCHW->NHWC transpose into the stage-1 BlockSpec to
    # save one activation round trip.
    x_nhwc = jnp.transpose(x_nchw, (0, 2, 3, 1)).astype(jnp.float32)
    x2d_f32 = _pad2d(x_nhwc.reshape(m1, cin), m1p, cin_p)
    x2d = x2d_f32.astype(jnp.bfloat16)

    w1 = _pad2d(params["w1"], cin_p, zip_p).astype(jnp.bfloat16)
    g1, b1 = _pad_param_vec(params["g1"], zip_p), _pad_param_vec(params["b1"], zip_p)
    w2 = jnp.pad(params["w2"], ((0, 0), (0, 0), (0, zip_p - zip_c),
                                (0, zip_p - zip_c))).astype(jnp.bfloat16)
    g2, b2 = _pad_param_vec(params["g2"], zip_p), _pad_param_vec(params["b2"], zip_p)
    w3 = _pad2d(params["w3"], zip_p, out_p).astype(jnp.bfloat16)
    g3, b3 = _pad_param_vec(params["g3"], out_p), _pad_param_vec(params["b3"], out_p)

    # ---- stage 1: 1x1 conv + BN + ReLU --------------------------------------
    y1_pre, s1 = matmul_stats(x2d, w1, tile_m=tile1)
    y1 = bn_act(y1_pre, s1, g1, b1, count=m1, relu=True,
                out_dtype=jnp.bfloat16, mask_tail=m1p > m1, tile_m=tile1)

    # ---- stage 2: 3x3 conv (stride, pad=1) + BN + ReLU ----------------------
    y1_img = y1[:m1].reshape(n, h, w, zip_p)
    if stride == 1:
        th = _pick_row_tile(ho)
        xp = jnp.pad(y1_img, ((0, 0), (1, 1), (1, 1), (0, 0)))
        y2_img, s2n = conv3x3_stats(xp, w2.reshape(9, zip_p, zip_p), th=th)
        s2 = jnp.sum(s2n, axis=0)              # tiny (n,2,C) -> (2,C) combine
        y2_pre = y2_img.reshape(m2, zip_p)
        if m2p > m2:
            y2_pre = jnp.pad(y2_pre, ((0, m2p - m2), (0, 0)))
    else:
        # TODO(synk): fuse the strided im2col into the conv kernel (shifted
        # strided windows via manual DMA) instead of materializing it in HBM.
        cols = _pad2d(_im2col_3x3(y1_img, stride), m2p, 9 * zip_p)
        y2_pre, s2 = matmul_stats(cols, w2.reshape(9 * zip_p, zip_p), tile_m=tile2)
    y2 = bn_act(y2_pre, s2, g2, b2, count=m2, relu=True,
                out_dtype=jnp.bfloat16, mask_tail=m2p > m2, tile_m=tile2)

    # ---- stage 3 matmul (BN + residual + ReLU are fused in the final pass) --
    y3_pre, s3 = matmul_stats(y2, w3, tile_m=tile2)

    # ---- shortcut branch + fused BN + residual add + ReLU -------------------
    if "ws" in params:
        ws = _pad2d(params["ws"], cin_p, out_p).astype(jnp.bfloat16)
        gs, bs = _pad_param_vec(params["gs"], out_p), _pad_param_vec(params["bs"], out_p)
        if stride == 1:
            xs = x2d
        else:
            xs = _pad2d(x_nhwc[:, ::stride, ::stride, :].reshape(m2, cin),
                        m2p, cin_p).astype(jnp.bfloat16)
        r_pre, ss = matmul_stats(xs, ws, tile_m=tile2)
        out2d = bn_add_bn_relu(y3_pre, s3, g3, b3, r_pre, ss, gs, bs,
                               count=m2, tile_m=tile2)
    else:
        # identity shortcut (stride == 1 and cin == out_c, so cin_p == out_p)
        out2d = bn_add_identity_relu(y3_pre, s3, g3, b3, x2d_f32,
                                     count=m2, tile_m=tile2)

    out = out2d[:m2, :out_c].reshape(n, ho, wo, out_c)
    return jnp.transpose(out, (0, 3, 1, 2))


# ---------------------------------------------------------------------------
# plain-JAX f32 reference (for validation only)
# ---------------------------------------------------------------------------
def _reference_forward(x_nchw, params, stride=1):
    x = jnp.transpose(x_nchw, (0, 2, 3, 1)).astype(jnp.float32)

    def bn(y, g, b):
        mean = jnp.mean(y, axis=(0, 1, 2), keepdims=True)
        var = jnp.mean(jnp.square(y - mean), axis=(0, 1, 2), keepdims=True)
        return (y - mean) * jax.lax.rsqrt(var + _BN_EPS) * g + b

    def conv(y, wgt, s, pad):
        return jax.lax.conv_general_dilated(
            y, wgt, window_strides=(s, s), padding=pad,
            dimension_numbers=("NHWC", "HWIO", "NHWC"))

    y = jax.nn.relu(bn(conv(x, params["w1"][None, None], 1, "VALID"),
                       params["g1"], params["b1"]))
    y = jax.nn.relu(bn(conv(y, params["w2"], stride, [(1, 1), (1, 1)]),
                       params["g2"], params["b2"]))
    y = bn(conv(y, params["w3"][None, None], 1, "VALID"), params["g3"], params["b3"])
    if "ws" in params:
        sc = bn(conv(x, params["ws"][None, None], stride, "VALID"),
                params["gs"], params["bs"])
    else:
        sc = x
    return jnp.transpose(jax.nn.relu(y + sc), (0, 3, 1, 2))


if __name__ == "__main__":
    key = jax.random.PRNGKey(0)
    kx, kp = jax.random.split(key)

    batch, in_channels, spatial = 2, 4, 16
    zip_channels, stride = 4, 1        # out_channels = 16 -> conv shortcut path

    x = jax.random.normal(kx, (batch, in_channels, spatial, spatial), jnp.float32)
    params = init_bottleneck_params(kp, in_channels, zip_channels, stride)

    fwd = jax.jit(functools.partial(bottleneck_forward, stride=stride))
    out = jax.block_until_ready(fwd(x, params))

    expected_shape = (batch, EXPANSION * zip_channels,
                      spatial // stride, spatial // stride)
    assert out.shape == expected_shape, (out.shape, expected_shape)
    assert bool(jnp.all(out >= 0.0))            # final ReLU
    assert bool(jnp.all(jnp.isfinite(out)))

    # Validate against a plain-JAX f32 reference (kernel uses bf16 MXU
    # operands, so use a loose elementwise tolerance).
    ref = jax.block_until_ready(_reference_forward(x, params, stride=stride))
    max_err = float(jnp.max(jnp.abs(out - ref)))
    assert max_err < 0.25, max_err

    print("KERNEL_OK")
</pallas_src>

<mosaic_0001>
module attributes {stable_mosaic.version = 11 : i64} {
  func.func @_matmul_stats_kernel(%arg0: i32, %arg1: memref<512x128xbf16, #tpu.memory_space<vmem>>, %arg2: memref<128x128xbf16, #tpu.memory_space<vmem>>, %arg3: memref<512x128xf32, #tpu.memory_space<vmem>>, %arg4: memref<2x128xf32, #tpu.memory_space<vmem>>) attributes {dimension_semantics = [#tpu.dimension_semantics<arbitrary>], iteration_bounds = array<i64: 1>, scalar_prefetch = 0 : i64, scratch_operands = 0 : i64, tpu.core_type = #tpu.core_type<tc>, window_params = [{transform_indices = @transform_0, window_bounds = array<i64: 512, 128>}, {pipeline_mode = #tpu.pipeline_mode<synchronous>, transform_indices = @transform_1, window_bounds = array<i64: 128, 128>}, {transform_indices = @transform_2, window_bounds = array<i64: 512, 128>}, {pipeline_mode = #tpu.pipeline_mode<synchronous>, transform_indices = @transform_3, window_bounds = array<i64: 2, 128>}]} {
    %c0_i32 = arith.constant 0 : i32
    %0 = arith.cmpi eq, %arg0, %c0_i32 : i32
    %1 = arith.extui %0 : i1 to i32
    %c0_i32_0 = arith.constant 0 : i32
    %2 = arith.cmpi ne, %1, %c0_i32_0 : i32
    scf.if %2 {
      %cst_12 = arith.constant 0.000000e+00 : f32
      %16 = vector.broadcast %cst_12 : f32 to vector<2x128xf32>
      %c0_13 = arith.constant 0 : index
      %c0_14 = arith.constant 0 : index
      %17 = vector.load %arg4[%c0_13, %c0_14] : memref<2x128xf32, #tpu.memory_space<vmem>>, vector<2x128xf32>
      tpu.vector_store %arg4[%c0_13, %c0_14], %16 {strides = array<i32>} : memref<2x128xf32, #tpu.memory_space<vmem>>, vector<2x128xf32>,
    } else {
    }
    %c0 = arith.constant 0 : index
    %c0_1 = arith.constant 0 : index
    %3 = vector.load %arg1[%c0, %c0_1] : memref<512x128xbf16, #tpu.memory_space<vmem>>, vector<512x128xbf16>
    %c0_2 = arith.constant 0 : index
    %c0_3 = arith.constant 0 : index
    %4 = vector.load %arg2[%c0_2, %c0_3] : memref<128x128xbf16, #tpu.memory_space<vmem>>, vector<128x128xbf16>
    %cst = arith.constant dense<0.000000e+00> : vector<512x128xf32>
    %5 = tpu.matmul %3, %4, %cst {dimension_numbers = #tpu.dot_dimension_numbers<[1], [0], [0], [1], [0, 0, 1, 1], [], []>} : vector<512x128xbf16>, vector<128x128xbf16>, vector<512x128xf32> -> vector<512x128xf32>
    %c0_4 = arith.constant 0 : index
    %c0_5 = arith.constant 0 : index
    %6 = vector.load %arg3[%c0_4, %c0_5] : memref<512x128xf32, #tpu.memory_space<vmem>>, vector<512x128xf32>
    tpu.vector_store %arg3[%c0_4, %c0_5], %5 {strides = array<i32>} : memref<512x128xf32, #tpu.memory_space<vmem>>, vector<512x128xf32>,
    %c0_6 = arith.constant 0 : index
    %c0_7 = arith.constant 0 : index
    %7 = vector.load %arg4[%c0_6, %c0_7] : memref<2x128xf32, #tpu.memory_space<vmem>>, vector<2x128xf32>
    %cst_8 = arith.constant dense<0.000000e+00> : vector<128xf32>
    %8 = vector.multi_reduction <add>, %5, %cst_8 [0] : vector<512x128xf32> to vector<128xf32>
    %9 = vector.shape_cast %8 : vector<128xf32> to vector<1x128xf32>
    %10 = arith.mulf %5, %5 : vector<512x128xf32>
    %cst_9 = arith.constant dense<0.000000e+00> : vector<128xf32>
    %11 = vector.multi_reduction <add>, %10, %cst_9 [0] : vector<512x128xf32> to vector<128xf32>
    %12 = vector.shape_cast %11 : vector<128xf32> to vector<1x128xf32>
    %13 = tpu.concatenate %9, %12 in 0 : vector<1x128xf32>, vector<1x128xf32> -> vector<2x128xf32>
    %14 = arith.addf %7, %13 : vector<2x128xf32>
    %c0_10 = arith.constant 0 : index
    %c0_11 = arith.constant 0 : index
    %15 = vector.load %arg4[%c0_10, %c0_11] : memref<2x128xf32, #tpu.memory_space<vmem>>, vector<2x128xf32>
    tpu.vector_store %arg4[%c0_10, %c0_11], %14 {strides = array<i32>} : memref<2x128xf32, #tpu.memory_space<vmem>>, vector<2x128xf32>,
    return
  }
  func.func @transform_0(%arg0: i32) -> (i32, i32) {
    %c0_i32 = arith.constant 0 : i32
    %c0_i32_0 = arith.constant 0 : i32
    return %arg0, %c0_i32 : i32, i32
  }
  func.func @transform_1(%arg0: i32) -> (i32, i32) {
    %c0_i32 = arith.constant 0 : i32
    %c0_i32_0 = arith.constant 0 : i32
    %c0_i32_1 = arith.constant 0 : i32
    return %c0_i32, %c0_i32_0 : i32, i32
  }
  func.func @transform_2(%arg0: i32) -> (i32, i32) {
    %c0_i32 = arith.constant 0 : i32
    %c0_i32_0 = arith.constant 0 : i32
    return %arg0, %c0_i32 : i32, i32
  }
  func.func @transform_3(%arg0: i32) -> (i32, i32) {
    %c0_i32 = arith.constant 0 : i32
    %c0_i32_0 = arith.constant 0 : i32
    %c0_i32_1 = arith.constant 0 : i32
    return %c0_i32, %c0_i32_0 : i32, i32
  }
}

module attributes {stable_mosaic.version = 11 : i64} {
  func.func @_bn_act_kernel(%arg0: i32, %arg1: memref<512x128xf32, #tpu.memory_space<vmem>>, %arg2: memref<2x128xf32, #tpu.memory_space<vmem>>, %arg3: memref<1x128xf32, #tpu.memory_space<vmem>>, %arg4: memref<1x128xf32, #tpu.memory_space<vmem>>, %arg5: memref<512x128xbf16, #tpu.memory_space<vmem>>) attributes {dimension_semantics = [#tpu.dimension_semantics<parallel>], iteration_bounds = array<i64: 1>, scalar_prefetch = 0 : i64, scratch_operands = 0 : i64, tpu.core_type = #tpu.core_type<tc>, window_params = [{transform_indices = @transform_0, window_bounds = array<i64: 512, 128>}, {pipeline_mode = #tpu.pipeline_mode<synchronous>, transform_indices = @transform_1, window_bounds = array<i64: 2, 128>}, {pipeline_mode = #tpu.pipeline_mode<synchronous>, transform_indices = @transform_2, window_bounds = array<i64: 1, 128>}, {pipeline_mode = #tpu.pipeline_mode<synchronous>, transform_indices = @transform_3, window_bounds = array<i64: 1, 128>}, {transform_indices = @transform_4, window_bounds = array<i64: 512, 128>}]} {
    %c0 = arith.constant 0 : index
    %c0_0 = arith.constant 0 : index
    %0 = vector.load %arg2[%c0, %c0_0] : memref<2x128xf32, #tpu.memory_space<vmem>>, vector<2x128xf32>
    %c0_1 = arith.constant 0 : index
    %c0_2 = arith.constant 0 : index
    %1 = vector.load %arg3[%c0_1, %c0_2] : memref<1x128xf32, #tpu.memory_space<vmem>>, vector<1x128xf32>
    %c0_3 = arith.constant 0 : index
    %c0_4 = arith.constant 0 : index
    %2 = vector.load %arg4[%c0_3, %c0_4] : memref<1x128xf32, #tpu.memory_space<vmem>>, vector<1x128xf32>
    %3 = vector.extract_strided_slice %0 {offsets = [0, 0], sizes = [1, 128], strides = [1, 1]} : vector<2x128xf32> to vector<1x128xf32>
    %cst = arith.constant 0.001953125 : f32
    %4 = vector.broadcast %cst : f32 to vector<1x128xf32>
    %5 = arith.mulf %3, %4 : vector<1x128xf32>
    %6 = vector.extract_strided_slice %0 {offsets = [1, 0], sizes = [1, 128], strides = [1, 1]} : vector<2x128xf32> to vector<1x128xf32>
    %cst_5 = arith.constant 0.001953125 : f32
    %7 = vector.broadcast %cst_5 : f32 to vector<1x128xf32>
    %8 = arith.mulf %6, %7 : vector<1x128xf32>
    %9 = arith.mulf %5, %5 : vector<1x128xf32>
    %10 = arith.subf %8, %9 : vector<1x128xf32>
    %cst_6 = arith.constant 0.000000e+00 : f32
    %11 = vector.broadcast %cst_6 : f32 to vector<1x128xf32>
    %12 = arith.maximumf %10, %11 : vector<1x128xf32>
    %cst_7 = arith.constant 9.99999974E-6 : f32
    %13 = vector.broadcast %cst_7 : f32 to vector<1x128xf32>
    %14 = arith.addf %12, %13 : vector<1x128xf32>
    %15 = math.rsqrt %14 : vector<1x128xf32>
    %16 = arith.mulf %15, %1 : vector<1x128xf32>
    %17 = arith.mulf %5, %16 : vector<1x128xf32>
    %18 = arith.subf %2, %17 : vector<1x128xf32>
    %c0_8 = arith.constant 0 : index
    %c0_9 = arith.constant 0 : index
    %19 = vector.load %arg1[%c0_8, %c0_9] : memref<512x128xf32, #tpu.memory_space<vmem>>, vector<512x128xf32>
    %20 = vector.broadcast %16 : vector<1x128xf32> to vector<512x128xf32>
    %21 = arith.mulf %19, %20 : vector<512x128xf32>
    %22 = vector.broadcast %18 : vector<1x128xf32> to vector<512x128xf32>
    %23 = arith.addf %21, %22 : vector<512x128xf32>
    %cst_10 = arith.constant 0.000000e+00 : f32
    %24 = vector.broadcast %cst_10 : f32 to vector<512x128xf32>
    %25 = arith.maximumf %23, %24 : vector<512x128xf32>
    %26 = arith.truncf %25 : vector<512x128xf32> to vector<512x128xbf16>
    %c0_11 = arith.constant 0 : index
    %c0_12 = arith.constant 0 : index
    %27 = vector.load %arg5[%c0_11, %c0_12] : memref<512x128xbf16, #tpu.memory_space<vmem>>, vector<512x128xbf16>
    tpu.vector_store %arg5[%c0_11, %c0_12], %26 {strides = array<i32>} : memref<512x128xbf16, #tpu.memory_space<vmem>>, vector<512x128xbf16>,
    return
  }
  func.func @transform_0(%arg0: i32) -> (i32, i32) {
    %c0_i32 = arith.constant 0 : i32
    %c0_i32_0 = arith.constant 0 : i32
    return %arg0, %c0_i32 : i32, i32
  }
  func.func @transform_1(%arg0: i32) -> (i32, i32) {
    %c0_i32 = arith.constant 0 : i32
    %c0_i32_0 = arith.constant 0 : i32
    %c0_i32_1 = arith.constant 0 : i32
    return %c0_i32, %c0_i32_0 : i32, i32
  }
  func.func @transform_2(%arg0: i32) -> (i32, i32) {
    %c0_i32 = arith.constant 0 : i32
    %c0_i32_0 = arith.constant 0 : i32
    %c0_i32_1 = arith.constant 0 : i32
    return %c0_i32, %c0_i32_0 : i32, i32
  }
  func.func @transform_3(%arg0: i32) -> (i32, i32) {
    %c0_i32 = arith.constant 0 : i32
    %c0_i32_0 = arith.constant 0 : i32
    %c0_i32_1 = arith.constant 0 : i32
    return %c0_i32, %c0_i32_0 : i32, i32
  }
  func.func @transform_4(%arg0: i32) -> (i32, i32) {
    %c0_i32 = arith.constant 0 : i32
    %c0_i32_0 = arith.constant 0 : i32
    return %arg0, %c0_i32 : i32, i32
  }
}

module attributes {stable_mosaic.version = 11 : i64} {
  func.func @_conv3x3_stats_kernel(%arg0: i32, %arg1: i32, %arg2: memref<1x18x18x128xbf16, #tpu.memory_space<vmem>>, %arg3: memref<9x128x128xbf16, #tpu.memory_space<vmem>>, %arg4: memref<1x8x16x128xf32, #tpu.memory_space<vmem>>, %arg5: memref<1x2x128xf32, #tpu.memory_space<vmem>>) attributes {dimension_semantics = [#tpu.dimension_semantics<parallel>, #tpu.dimension_semantics<arbitrary>], iteration_bounds = array<i64: 2, 2>, scalar_prefetch = 0 : i64, scratch_operands = 0 : i64, tpu.core_type = #tpu.core_type<tc>, window_params = [{transform_indices = @transform_0, window_bounds = array<i64: 1, 18, 18, 128>}, {pipeline_mode = #tpu.pipeline_mode<synchronous>, transform_indices = @transform_1, window_bounds = array<i64: 9, 128, 128>}, {transform_indices = @transform_2, window_bounds = array<i64: 1, 8, 16, 128>}, {transform_indices = @transform_3, window_bounds = array<i64: 1, 2, 128>}]} {
    %c0_i32 = arith.constant 0 : i32
    %0 = arith.cmpi eq, %arg1, %c0_i32 : i32
    %1 = arith.extui %0 : i1 to i32
    %c0_i32_0 = arith.constant 0 : i32
    %2 = arith.cmpi ne, %1, %c0_i32_0 : i32
    scf.if %2 {
      %cst_74 = arith.constant 0.000000e+00 : f32
      %102 = vector.broadcast %cst_74 : f32 to vector<2x128xf32>
      %c0_75 = arith.constant 0 : index
      %c0_76 = arith.constant 0 : index
      %c0_77 = arith.constant 0 : index
      %103 = vector.load %arg5[%c0_75, %c0_76, %c0_77] : memref<1x2x128xf32, #tpu.memory_space<vmem>>, vector<1x2x128xf32>
      %104 = vector.shape_cast %103 : vector<1x2x128xf32> to vector<2x128xf32>
      %105 = vector.shape_cast %102 : vector<2x128xf32> to vector<1x2x128xf32>
      tpu.vector_store %arg5[%c0_75, %c0_76, %c0_77], %105 {strides = array<i32>} : memref<1x2x128xf32, #tpu.memory_space<vmem>>, vector<1x2x128xf32>,
    } else {
    }
    %c8_i32 = arith.constant 8 : i32
    %3 = arith.muli %arg1, %c8_i32 : i32
    %cst = arith.constant 0.000000e+00 : f32
    %4 = vector.broadcast %cst : f32 to vector<128x128xf32>
    %c0_i32_1 = arith.constant 0 : i32
    %5 = arith.addi %3, %c0_i32_1 : i32
    %c0 = arith.constant 0 : index
    %6 = arith.index_cast %5 : i32 to index
    %c0_2 = arith.constant 0 : index
    %c0_3 = arith.constant 0 : index
    %7 = vector.load %arg2[%c0, %6, %c0_2, %c0_3] : memref<1x18x18x128xbf16, #tpu.memory_space<vmem>>, vector<1x8x16x128xbf16>
    %8 = vector.shape_cast %7 : vector<1x8x16x128xbf16> to vector<8x16x128xbf16>
    %9 = vector.shape_cast %8 : vector<8x16x128xbf16> to vector<128x128xbf16>
    %c0_4 = arith.constant 0 : index
    %c0_5 = arith.constant 0 : index
    %c0_6 = arith.constant 0 : index
    %10 = vector.load %arg3[%c0_4, %c0_5, %c0_6] : memref<9x128x128xbf16, #tpu.memory_space<vmem>>, vector<1x128x128xbf16>
    %11 = vector.shape_cast %10 : vector<1x128x128xbf16> to vector<128x128xbf16>
    %cst_7 = arith.constant dense<0.000000e+00> : vector<128x128xf32>
    %12 = tpu.matmul %9, %11, %cst_7 {dimension_numbers = #tpu.dot_dimension_numbers<[1], [0], [0], [1], [0, 0, 1, 1], [], []>} : vector<128x128xbf16>, vector<128x128xbf16>, vector<128x128xf32> -> vector<128x128xf32>
    %13 = arith.addf %4, %12 : vector<128x128xf32>
    %c0_i32_8 = arith.constant 0 : i32
    %14 = arith.addi %3, %c0_i32_8 : i32
    %c0_9 = arith.constant 0 : index
    %15 = arith.index_cast %14 : i32 to index
    %c1 = arith.constant 1 : index
    %c0_10 = arith.constant 0 : index
    %16 = vector.load %arg2[%c0_9, %15, %c1, %c0_10] : memref<1x18x18x128xbf16, #tpu.memory_space<vmem>>, vector<1x8x16x128xbf16>
    %17 = vector.shape_cast %16 : vector<1x8x16x128xbf16> to vector<8x16x128xbf16>
    %18 = vector.shape_cast %17 : vector<8x16x128xbf16> to vector<128x128xbf16>
    %c1_11 = arith.constant 1 : index
    %c0_12 = arith.constant 0 : index
    %c0_13 = arith.constant 0 : index
    %19 = vector.load %arg3[%c1_11, %c0_12, %c0_13] : memref<9x128x128xbf16, #tpu.memory_space<vmem>>, vector<1x128x128xbf16>
    %20 = vector.shape_cast %19 : vector<1x128x128xbf16> to vector<128x128xbf16>
    %cst_14 = arith.constant dense<0.000000e+00> : vector<128x128xf32>
    %21 = tpu.matmul %18, %20, %cst_14 {dimension_numbers = #tpu.dot_dimension_numbers<[1], [0], [0], [1], [0, 0, 1, 1], [], []>} : vector<128x128xbf16>, vector<128x128xbf16>, vector<128x128xf32> -> vector<128x128xf32>
    %22 = arith.addf %13, %21 : vector<128x128xf32>
    %c0_i32_15 = arith.constant 0 : i32
    %23 = arith.addi %3, %c0_i32_15 : i32
    %c0_16 = arith.constant 0 : index
    %24 = arith.index_cast %23 : i32 to index
    %c2 = arith.constant 2 : index
    %c0_17 = arith.constant 0 : index
    %25 = vector.load %arg2[%c0_16, %24, %c2, %c0_17] : memref<1x18x18x128xbf16, #tpu.memory_space<vmem>>, vector<1x8x16x128xbf16>
    %26 = vector.shape_cast %25 : vector<1x8x16x128xbf16> to vector<8x16x128xbf16>
    %27 = vector.shape_cast %26 : vector<8x16x128xbf16> to vector<128x128xbf16>
    %c2_18 = arith.constant 2 : index
    %c0_19 = arith.constant 0 : index
    %c0_20 = arith.constant 0 : index
    %28 = vector.load %arg3[%c2_18, %c0_19, %c0_20] : memref<9x128x128xbf16, #tpu.memory_space<vmem>>, vector<1x128x128xbf16>
    %29 = vector.shape_cast %28 : vector<1x128x128xbf16> to vector<128x128xbf16>
    %cst_21 = arith.constant dense<0.000000e+00> : vector<128x128xf32>
    %30 = tpu.matmul %27, %29, %cst_21 {dimension_numbers = #tpu.dot_dimension_numbers<[1], [0], [0], [1], [0, 0, 1, 1], [], []>} : vector<128x128xbf16>, vector<128x128xbf16>, vector<128x128xf32> -> vector<128x128xf32>
    %31 = arith.addf %22, %30 : vector<128x128xf32>
    %c1_i32 = arith.constant 1 : i32
    %32 = arith.addi %3, %c1_i32 : i32
    %c0_22 = arith.constant 0 : index
    %33 = arith.index_cast %32 : i32 to index
    %c0_23 = arith.constant 0 : index
    %c0_24 = arith.constant 0 : index
    %34 = vector.load %arg2[%c0_22, %33, %c0_23, %c0_24] : memref<1x18x18x128xbf16, #tpu.memory_space<vmem>>, vector<1x8x16x128xbf16>
    %35 = vector.shape_cast %34 : vector<1x8x16x128xbf16> to vector<8x16x128xbf16>
    %36 = vector.shape_cast %35 : vector<8x16x128xbf16> to vector<128x128xbf16>
    %c3 = arith.constant 3 : index
    %c0_25 = arith.constant 0 : index
    %c0_26 = arith.constant 0 : index
    %37 = vector.load %arg3[%c3, %c0_25, %c0_26] : memref<9x128x128xbf16, #tpu.memory_space<vmem>>, vector<1x128x128xbf16>
    %38 = vector.shape_cast %37 : vector<1x128x128xbf16> to vector<128x128xbf16>
    %cst_27 = arith.constant dense<0.000000e+00> : vector<128x128xf32>
    %39 = tpu.matmul %36, %38, %cst_27 {dimension_numbers = #tpu.dot_dimension_numbers<[1], [0], [0], [1], [0, 0, 1, 1], [], []>} : vector<128x128xbf16>, vector<128x128xbf16>, vector<128x128xf32> -> vector<128x128xf32>
    %40 = arith.addf %31, %39 : vector<128x128xf32>
    %c1_i32_28 = arith.constant 1 : i32
    %41 = arith.addi %3, %c1_i32_28 : i32
    %c0_29 = arith.constant 0 : index
    %42 = arith.index_cast %41 : i32 to index
    %c1_30 = arith.constant 1 : index
    %c0_31 = arith.constant 0 : index
    %43 = vector.load %arg2[%c0_29, %42, %c1_30, %c0_31] : memref<1x18x18x128xbf16, #tpu.memory_space<vmem>>, vector<1x8x16x128xbf16>
    %44 = vector.shape_cast %43 : vector<1x8x16x128xbf16> to vector<8x16x128xbf16>
    %45 = vector.shape_cast %44 : vector<8x16x128xbf16> to vector<128x128xbf16>
    %c4 = arith.constant 4 : index
    %c0_32 = arith.constant 0 : index
    %c0_33 = arith.constant 0 : index
    %46 = vector.load %arg3[%c4, %c0_32, %c0_33] : memref<9x128x128xbf16, #tpu.memory_space<vmem>>, vector<1x128x128xbf16>
    %47 = vector.shape_cast %46 : vector<1x128x128xbf16> to vector<128x128xbf16>
    %cst_34 = arith.constant dense<0.000000e+00> : vector<128x128xf32>
    %48 = tpu.matmul %45, %47, %cst_34 {dimension_numbers = #tpu.dot_dimension_numbers<[1], [0], [0], [1], [0, 0, 1, 1], [], []>} : vector<128x128xbf16>, vector<128x128xbf16>, vector<128x128xf32> -> vector<128x128xf32>
    %49 = arith.addf %40, %48 : vector<128x128xf32>
    %c1_i32_35 = arith.constant 1 : i32
    %50 = arith.addi %3, %c1_i32_35 : i32
    %c0_36 = arith.constant 0 : index
    %51 = arith.index_cast %50 : i32 to index
    %c2_37 = arith.constant 2 : index
    %c0_38 = arith.constant 0 : index
    %52 = vector.load %arg2[%c0_36, %51, %c2_37, %c0_38] : memref<1x18x18x128xbf16, #tpu.memory_space<vmem>>, vector<1x8x16x128xbf16>
    %53 = vector.shape_cast %52 : vector<1x8x16x128xbf16> to vector<8x16x128xbf16>
    %54 = vector.shape_cast %53 : vector<8x16x128xbf16> to vector<128x128xbf16>
    %c5 = arith.constant 5 : index
    %c0_39 = arith.constant 0 : index
    %c0_40 = arith.constant 0 : index
    %55 = vector.load %arg3[%c5, %c0_39, %c0_40] : memref<9x128x128xbf16, #tpu.memory_space<vmem>>, vector<1x128x128xbf16>
    %56 = vector.shape_cast %55 : vector<1x128x128xbf16> to vector<128x128xbf16>
    %cst_41 = arith.constant dense<0.000000e+00> : vector<128x128xf32>
    %57 = tpu.matmul %54, %56, %cst_41 {dimension_numbers = #tpu.dot_dimension_numbers<[1], [0], [0], [1], [0, 0, 1, 1], [], []>} : vector<128x128xbf16>, vector<128x128xbf16>, vector<128x128xf32> -> vector<128x128xf32>
    %58 = arith.addf %49, %57 : vector<128x128xf32>
    %c2_i32 = arith.constant 2 : i32
    %59 = arith.addi %3, %c2_i32 : i32
    %c0_42 = arith.constant 0 : index
    %60 = arith.index_cast %59 : i32 to index
    %c0_43 = arith.constant 0 : index
    %c0_44 = arith.constant 0 : index
    %61 = vector.load %arg2[%c0_42, %60, %c0_43, %c0_44] : memref<1x18x18x128xbf16, #tpu.memory_space<vmem>>, vector<1x8x16x128xbf16>
    %62 = vector.shape_cast %61 : vector<1x8x16x128xbf16> to vector<8x16x128xbf16>
    %63 = vector.shape_cast %62 : vector<8x16x128xbf16> to vector<128x128xbf16>
    %c6 = arith.constant 6 : index
    %c0_45 = arith.constant 0 : index
    %c0_46 = arith.constant 0 : index
    %64 = vector.load %arg3[%c6, %c0_45, %c0_46] : memref<9x128x128xbf16, #tpu.memory_space<vmem>>, vector<1x128x128xbf16>
    %65 = vector.shape_cast %64 : vector<1x128x128xbf16> to vector<128x128xbf16>
    %cst_47 = arith.constant dense<0.000000e+00> : vector<128x128xf32>
    %66 = tpu.matmul %63, %65, %cst_47 {dimension_numbers = #tpu.dot_dimension_numbers<[1], [0], [0], [1], [0, 0, 1, 1], [], []>} : vector<128x128xbf16>, vector<128x128xbf16>, vector<128x128xf32> -> vector<128x128xf32>
    %67 = arith.addf %58, %66 : vector<128x128xf32>
    %c2_i32_48 = arith.constant 2 : i32
    %68 = arith.addi %3, %c2_i32_48 : i32
    %c0_49 = arith.constant 0 : index
    %69 = arith.index_cast %68 : i32 to index
    %c1_50 = arith.constant 1 : index
    %c0_51 = arith.constant 0 : index
    %70 = vector.load %arg2[%c0_49, %69, %c1_50, %c0_51] : memref<1x18x18x128xbf16, #tpu.memory_space<vmem>>, vector<1x8x16x128xbf16>
    %71 = vector.shape_cast %70 : vector<1x8x16x128xbf16> to vector<8x16x128xbf16>
    %72 = vector.shape_cast %71 : vector<8x16x128xbf16> to vector<128x128xbf16>
    %c7 = arith.constant 7 : index
    %c0_52 = arith.constant 0 : index
    %c0_53 = arith.constant 0 : index
    %73 = vector.load %arg3[%c7, %c0_52, %c0_53] : memref<9x128x128xbf16, #tpu.memory_space<vmem>>, vector<1x128x128xbf16>
    %74 = vector.shape_cast %73 : vector<1x128x128xbf16> to vector<128x128xbf16>
    %cst_54 = arith.constant dense<0.000000e+00> : vector<128x128xf32>
    %75 = tpu.matmul %72, %74, %cst_54 {dimension_numbers = #tpu.dot_dimension_numbers<[1], [0], [0], [1], [0, 0, 1, 1], [], []>} : vector<128x128xbf16>, vector<128x128xbf16>, vector<128x128xf32> -> vector<128x128xf32>
    %76 = arith.addf %67, %75 : vector<128x128xf32>
    %c2_i32_55 = arith.constant 2 : i32
    %77 = arith.addi %3, %c2_i32_55 : i32
    %c0_56 = arith.constant 0 : index
    %78 = arith.index_cast %77 : i32 to index
    %c2_57 = arith.constant 2 : index
    %c0_58 = arith.constant 0 : index
    %79 = vector.load %arg2[%c0_56, %78, %c2_57, %c0_58] : memref<1x18x18x128xbf16, #tpu.memory_space<vmem>>, vector<1x8x16x128xbf16>
    %80 = vector.shape_cast %79 : vector<1x8x16x128xbf16> to vector<8x16x128xbf16>
    %81 = vector.shape_cast %80 : vector<8x16x128xbf16> to vector<128x128xbf16>
    %c8 = arith.constant 8 : index
    %c0_59 = arith.constant 0 : index
    %c0_60 = arith.constant 0 : index
    %82 = vector.load %arg3[%c8, %c0_59, %c0_60] : memref<9x128x128xbf16, #tpu.memory_space<vmem>>, vector<1x128x128xbf16>
    %83 = vector.shape_cast %82 : vector<1x128x128xbf16> to vector<128x128xbf16>
    %cst_61 = arith.constant dense<0.000000e+00> : vector<128x128xf32>
    %84 = tpu.matmul %81, %83, %cst_61 {dimension_numbers = #tpu.dot_dimension_numbers<[1], [0], [0], [1], [0, 0, 1, 1], [], []>} : vector<128x128xbf16>, vector<128x128xbf16>, vector<128x128xf32> -> vector<128x128xf32>
    %85 = arith.addf %76, %84 : vector<128x128xf32>
    %86 = vector.shape_cast %85 : vector<128x128xf32> to vector<8x16x128xf32>
    %c0_62 = arith.constant 0 : index
    %c0_63 = arith.constant 0 : index
    %c0_64 = arith.constant 0 : index
    %c0_65 = arith.constant 0 : index
    %87 = vector.load %arg4[%c0_62, %c0_63, %c0_64, %c0_65] : memref<1x8x16x128xf32, #tpu.memory_space<vmem>>, vector<1x8x16x128xf32>
    %88 = vector.shape_cast %87 : vector<1x8x16x128xf32> to vector<8x16x128xf32>
    %89 = vector.shape_cast %86 : vector<8x16x128xf32> to vector<1x8x16x128xf32>
    tpu.vector_store %arg4[%c0_62, %c0_63, %c0_64, %c0_65], %89 {strides = array<i32>} : memref<1x8x16x128xf32, #tpu.memory_space<vmem>>, vector<1x8x16x128xf32>,
    %c0_66 = arith.constant 0 : index
    %c0_67 = arith.constant 0 : index
    %c0_68 = arith.constant 0 : index
    %90 = vector.load %arg5[%c0_66, %c0_67, %c0_68] : memref<1x2x128xf32, #tpu.memory_space<vmem>>, vector<1x2x128xf32>
    %91 = vector.shape_cast %90 : vector<1x2x128xf32> to vector<2x128xf32>
    %cst_69 = arith.constant dense<0.000000e+00> : vector<128xf32>
    %92 = vector.multi_reduction <add>, %85, %cst_69 [0] : vector<128x128xf32> to vector<128xf32>
    %93 = vector.shape_cast %92 : vector<128xf32> to vector<1x128xf32>
    %94 = arith.mulf %85, %85 : vector<128x128xf32>
    %cst_70 = arith.constant dense<0.000000e+00> : vector<128xf32>
    %95 = vector.multi_reduction <add>, %94, %cst_70 [0] : vector<128x128xf32> to vector<128xf32>
    %96 = vector.shape_cast %95 : vector<128xf32> to vector<1x128xf32>
    %97 = tpu.concatenate %93, %96 in 0 : vector<1x128xf32>, vector<1x128xf32> -> vector<2x128xf32>
    %98 = arith.addf %91, %97 : vector<2x128xf32>
    %c0_71 = arith.constant 0 : index
    %c0_72 = arith.constant 0 : index
    %c0_73 = arith.constant 0 : index
    %99 = vector.load %arg5[%c0_71, %c0_72, %c0_73] : memref<1x2x128xf32, #tpu.memory_space<vmem>>, vector<1x2x128xf32>
    %100 = vector.shape_cast %99 : vector<1x2x128xf32> to vector<2x128xf32>
    %101 = vector.shape_cast %98 : vector<2x128xf32> to vector<1x2x128xf32>
    tpu.vector_store %arg5[%c0_71, %c0_72, %c0_73], %101 {strides = array<i32>} : memref<1x2x128xf32, #tpu.memory_space<vmem>>, vector<1x2x128xf32>,
    return
  }
  func.func @transform_0(%arg0: i32, %arg1: i32) -> (i32, i32, i32, i32) {
    %c0_i32 = arith.constant 0 : i32
    %c0_i32_0 = arith.constant 0 : i32
    %c0_i32_1 = arith.constant 0 : i32
    %c0_i32_2 = arith.constant 0 : i32
    return %arg0, %c0_i32, %c0_i32_0, %c0_i32_1 : i32, i32, i32, i32
  }
  func.func @transform_1(%arg0: i32, %arg1: i32) -> (i32, i32, i32) {
    %c0_i32 = arith.constant 0 : i32
    %c0_i32_0 = arith.constant 0 : i32
    %c0_i32_1 = arith.constant 0 : i32
    %c0_i32_2 = arith.constant 0 : i32
    return %c0_i32, %c0_i32_0, %c0_i32_1 : i32, i32, i32
  }
  func.func @transform_2(%arg0: i32, %arg1: i32) -> (i32, i32, i32, i32) {
    %c0_i32 = arith.constant 0 : i32
    %c0_i32_0 = arith.constant 0 : i32
    %c0_i32_1 = arith.constant 0 : i32
    return %arg0, %arg1, %c0_i32, %c0_i32_0 : i32, i32, i32, i32
  }
  func.func @transform_3(%arg0: i32, %arg1: i32) -> (i32, i32, i32) {
    %c0_i32 = arith.constant 0 : i32
    %c0_i32_0 = arith.constant 0 : i32
    %c0_i32_1 = arith.constant 0 : i32
    return %arg0, %c0_i32, %c0_i32_0 : i32, i32, i32
  }
}

module attributes {stable_mosaic.version = 11 : i64} {
  func.func @_bn_add_bn_relu_kernel(%arg0: i32, %arg1: memref<512x128xf32, #tpu.memory_space<vmem>>, %arg2: memref<2x128xf32, #tpu.memory_space<vmem>>, %arg3: memref<1x128xf32, #tpu.memory_space<vmem>>, %arg4: memref<1x128xf32, #tpu.memory_space<vmem>>, %arg5: memref<512x128xf32, #tpu.memory_space<vmem>>, %arg6: memref<2x128xf32, #tpu.memory_space<vmem>>, %arg7: memref<1x128xf32, #tpu.memory_space<vmem>>, %arg8: memref<1x128xf32, #tpu.memory_space<vmem>>, %arg9: memref<512x128xf32, #tpu.memory_space<vmem>>) attributes {dimension_semantics = [#tpu.dimension_semantics<parallel>], iteration_bounds = array<i64: 1>, scalar_prefetch = 0 : i64, scratch_operands = 0 : i64, tpu.core_type = #tpu.core_type<tc>, window_params = [{transform_indices = @transform_0, window_bounds = array<i64: 512, 128>}, {pipeline_mode = #tpu.pipeline_mode<synchronous>, transform_indices = @transform_1, window_bounds = array<i64: 2, 128>}, {pipeline_mode = #tpu.pipeline_mode<synchronous>, transform_indices = @transform_2, window_bounds = array<i64: 1, 128>}, {pipeline_mode = #tpu.pipeline_mode<synchronous>, transform_indices = @transform_3, window_bounds = array<i64: 1, 128>}, {transform_indices = @transform_4, window_bounds = array<i64: 512, 128>}, {pipeline_mode = #tpu.pipeline_mode<synchronous>, transform_indices = @transform_5, window_bounds = array<i64: 2, 128>}, {pipeline_mode = #tpu.pipeline_mode<synchronous>, transform_indices = @transform_6, window_bounds = array<i64: 1, 128>}, {pipeline_mode = #tpu.pipeline_mode<synchronous>, transform_indices = @transform_7, window_bounds = array<i64: 1, 128>}, {transform_indices = @transform_8, window_bounds = array<i64: 512, 128>}]} {
    %c0 = arith.constant 0 : index
    %c0_0 = arith.constant 0 : index
    %0 = vector.load %arg2[%c0, %c0_0] : memref<2x128xf32, #tpu.memory_space<vmem>>, vector<2x128xf32>
    %c0_1 = arith.constant 0 : index
    %c0_2 = arith.constant 0 : index
    %1 = vector.load %arg3[%c0_1, %c0_2] : memref<1x128xf32, #tpu.memory_space<vmem>>, vector<1x128xf32>
    %c0_3 = arith.constant 0 : index
    %c0_4 = arith.constant 0 : index
    %2 = vector.load %arg4[%c0_3, %c0_4] : memref<1x128xf32, #tpu.memory_space<vmem>>, vector<1x128xf32>
    %3 = vector.extract_strided_slice %0 {offsets = [0, 0], sizes = [1, 128], strides = [1, 1]} : vector<2x128xf32> to vector<1x128xf32>
    %cst = arith.constant 0.001953125 : f32
    %4 = vector.broadcast %cst : f32 to vector<1x128xf32>
    %5 = arith.mulf %3, %4 : vector<1x128xf32>
    %6 = vector.extract_strided_slice %0 {offsets = [1, 0], sizes = [1, 128], strides = [1, 1]} : vector<2x128xf32> to vector<1x128xf32>
    %cst_5 = arith.constant 0.001953125 : f32
    %7 = vector.broadcast %cst_5 : f32 to vector<1x128xf32>
    %8 = arith.mulf %6, %7 : vector<1x128xf32>
    %9 = arith.mulf %5, %5 : vector<1x128xf32>
    %10 = arith.subf %8, %9 : vector<1x128xf32>
    %cst_6 = arith.constant 0.000000e+00 : f32
    %11 = vector.broadcast %cst_6 : f32 to vector<1x128xf32>
    %12 = arith.maximumf %10, %11 : vector<1x128xf32>
    %cst_7 = arith.constant 9.99999974E-6 : f32
    %13 = vector.broadcast %cst_7 : f32 to vector<1x128xf32>
    %14 = arith.addf %12, %13 : vector<1x128xf32>
    %15 = math.rsqrt %14 : vector<1x128xf32>
    %16 = arith.mulf %15, %1 : vector<1x128xf32>
    %17 = arith.mulf %5, %16 : vector<1x128xf32>
    %18 = arith.subf %2, %17 : vector<1x128xf32>
    %c0_8 = arith.constant 0 : index
    %c0_9 = arith.constant 0 : index
    %19 = vector.load %arg6[%c0_8, %c0_9] : memref<2x128xf32, #tpu.memory_space<vmem>>, vector<2x128xf32>
    %c0_10 = arith.constant 0 : index
    %c0_11 = arith.constant 0 : index
    %20 = vector.load %arg7[%c0_10, %c0_11] : memref<1x128xf32, #tpu.memory_space<vmem>>, vector<1x128xf32>
    %c0_12 = arith.constant 0 : index
    %c0_13 = arith.constant 0 : index
    %21 = vector.load %arg8[%c0_12, %c0_13] : memref<1x128xf32, #tpu.memory_space<vmem>>, vector<1x128xf32>
    %22 = vector.extract_strided_slice %19 {offsets = [0, 0], sizes = [1, 128], strides = [1, 1]} : vector<2x128xf32> to vector<1x128xf32>
    %cst_14 = arith.constant 0.001953125 : f32
    %23 = vector.broadcast %cst_14 : f32 to vector<1x128xf32>
    %24 = arith.mulf %22, %23 : vector<1x128xf32>
    %25 = vector.extract_strided_slice %19 {offsets = [1, 0], sizes = [1, 128], strides = [1, 1]} : vector<2x128xf32> to vector<1x128xf32>
    %cst_15 = arith.constant 0.001953125 : f32
    %26 = vector.broadcast %cst_15 : f32 to vector<1x128xf32>
    %27 = arith.mulf %25, %26 : vector<1x128xf32>
    %28 = arith.mulf %24, %24 : vector<1x128xf32>
    %29 = arith.subf %27, %28 : vector<1x128xf32>
    %cst_16 = arith.constant 0.000000e+00 : f32
    %30 = vector.broadcast %cst_16 : f32 to vector<1x128xf32>
    %31 = arith.maximumf %29, %30 : vector<1x128xf32>
    %cst_17 = arith.constant 9.99999974E-6 : f32
    %32 = vector.broadcast %cst_17 : f32 to vector<1x128xf32>
    %33 = arith.addf %31, %32 : vector<1x128xf32>
    %34 = math.rsqrt %33 : vector<1x128xf32>
    %35 = arith.mulf %34, %20 : vector<1x128xf32>
    %36 = arith.mulf %24, %35 : vector<1x128xf32>
    %37 = arith.subf %21, %36 : vector<1x128xf32>
    %c0_18 = arith.constant 0 : index
    %c0_19 = arith.constant 0 : index
    %38 = vector.load %arg1[%c0_18, %c0_19] : memref<512x128xf32, #tpu.memory_space<vmem>>, vector<512x128xf32>
    %39 = vector.broadcast %16 : vector<1x128xf32> to vector<512x128xf32>
    %40 = arith.mulf %38, %39 : vector<512x128xf32>
    %41 = vector.broadcast %18 : vector<1x128xf32> to vector<512x128xf32>
    %42 = arith.addf %40, %41 : vector<512x128xf32>
    %c0_20 = arith.constant 0 : index
    %c0_21 = arith.constant 0 : index
    %43 = vector.load %arg5[%c0_20, %c0_21] : memref<512x128xf32, #tpu.memory_space<vmem>>, vector<512x128xf32>
    %44 = vector.broadcast %35 : vector<1x128xf32> to vector<512x128xf32>
    %45 = arith.mulf %43, %44 : vector<512x128xf32>
    %46 = vector.broadcast %37 : vector<1x128xf32> to vector<512x128xf32>
    %47 = arith.addf %45, %46 : vector<512x128xf32>
    %48 = arith.addf %42, %47 : vector<512x128xf32>
    %cst_22 = arith.constant 0.000000e+00 : f32
    %49 = vector.broadcast %cst_22 : f32 to vector<512x128xf32>
    %50 = arith.maximumf %48, %49 : vector<512x128xf32>
    %c0_23 = arith.constant 0 : index
    %c0_24 = arith.constant 0 : index
    %51 = vector.load %arg9[%c0_23, %c0_24] : memref<512x128xf32, #tpu.memory_space<vmem>>, vector<512x128xf32>
    tpu.vector_store %arg9[%c0_23, %c0_24], %50 {strides = array<i32>} : memref<512x128xf32, #tpu.memory_space<vmem>>, vector<512x128xf32>,
    return
  }
  func.func @transform_0(%arg0: i32) -> (i32, i32) {
    %c0_i32 = arith.constant 0 : i32
    %c0_i32_0 = arith.constant 0 : i32
    return %arg0, %c0_i32 : i32, i32
  }
  func.func @transform_1(%arg0: i32) -> (i32, i32) {
    %c0_i32 = arith.constant 0 : i32
    %c0_i32_0 = arith.constant 0 : i32
    %c0_i32_1 = arith.constant 0 : i32
    return %c0_i32, %c0_i32_0 : i32, i32
  }
  func.func @transform_2(%arg0: i32) -> (i32, i32) {
    %c0_i32 = arith.constant 0 : i32
    %c0_i32_0 = arith.constant 0 : i32
    %c0_i32_1 = arith.constant 0 : i32
    return %c0_i32, %c0_i32_0 : i32, i32
  }
  func.func @transform_3(%arg0: i32) -> (i32, i32) {
    %c0_i32 = arith.constant 0 : i32
    %c0_i32_0 = arith.constant 0 : i32
    %c0_i32_1 = arith.constant 0 : i32
    return %c0_i32, %c0_i32_0 : i32, i32
  }
  func.func @transform_4(%arg0: i32) -> (i32, i32) {
    %c0_i32 = arith.constant 0 : i32
    %c0_i32_0 = arith.constant 0 : i32
    return %arg0, %c0_i32 : i32, i32
  }
  func.func @transform_5(%arg0: i32) -> (i32, i32) {
    %c0_i32 = arith.constant 0 : i32
    %c0_i32_0 = arith.constant 0 : i32
    %c0_i32_1 = arith.constant 0 : i32
    return %c0_i32, %c0_i32_0 : i32, i32
  }
  func.func @transform_6(%arg0: i32) -> (i32, i32) {
    %c0_i32 = arith.constant 0 : i32
    %c0_i32_0 = arith.constant 0 : i32
    %c0_i32_1 = arith.constant 0 : i32
    return %c0_i32, %c0_i32_0 : i32, i32
  }
  func.func @transform_7(%arg0: i32) -> (i32, i32) {
    %c0_i32 = arith.constant 0 : i32
    %c0_i32_0 = arith.constant 0 : i32
    %c0_i32_1 = arith.constant 0 : i32
    return %c0_i32, %c0_i32_0 : i32, i32
  }
  func.func @transform_8(%arg0: i32) -> (i32, i32) {
    %c0_i32 = arith.constant 0 : i32
    %c0_i32_0 = arith.constant 0 : i32
    return %arg0, %c0_i32 : i32, i32
  }
}

</mosaic_0001>

<llo_original>
// kernel: bottleneck_forward.7
$region0: #{bottleneck_forward.7}
  #allocation0 [shape = 'u32[]', space=smem, size = 0x4, offset = 0x4, fixed_abs, tag = 'smem constant byte address 0x4 - core index']
  #allocation1 [shape = 'u32[144,128]{1,0:T(1,128)}', space=vmem, size = 0x12000, scoped, tag = 'internal scratch']
  %s0 = inlined_call_operand.vmem [shape: bf16[512,128], index: 0, kind: input, shape index: {}]
  %s1 = inlined_call_operand.vmem [shape: bf16[128,128], index: 1, kind: input, shape index: {}]
  %s2 = inlined_call_operand.vmem [shape: f32[512,128], index: 2, kind: output, shape index: {0}]
  %s3 = inlined_call_operand.vmem [shape: f32[2,128], index: 3, kind: output, shape index: {1}]
  %4 = xla_tuple %s2, %s3
  %s5 = sld [smem:[#allocation0]]
  $region30: #{bottleneck_forward.7} parent=0
    _
  %s7 = ssub.s32 1, %s5
  %s8 = scalar_select 0, %s7, %s5
  // Predicated region
  $region2: #{bottleneck_forward.7} parent=0 // pred_check
    _
  $region3: #{bottleneck_forward.7} parent=0 // pred_check_branch
    %10 = sbr.rel (0) target = $region5
  $region4: #{bottleneck_forward.7} parent=0 // pred_region
    _
  $region5: #{bottleneck_forward.7} parent=0 // pred_fallthru
    _
  // Predicated region
  $region6: #{bottleneck_forward.7} parent=0 // pred_check
    _
  $region7: #{bottleneck_forward.7} parent=0 // pred_check_branch
    %12 = sbr.rel (0) target = $region9
  $region8: #{bottleneck_forward.7} parent=0 // pred_region
    _
  $region9: #{bottleneck_forward.7} parent=0 // pred_fallthru
    _
  %p14 = scmp.eq.s32.totalorder 0, 0
  // Predicated region
  $region10: #{bottleneck_forward.7} parent=0 // pred_check
    %p15 = pneg %p14
  $region11: #{bottleneck_forward.7} parent=0 // pred_check_branch
    %17 = sbr.rel (%p15) target = $region13
  $region12: #{bottleneck_forward.7} parent=0 // pred_region
    %18 = vst [vmem:[%s3] sm:$0x3] 0.0
  $region13: #{bottleneck_forward.7} parent=0 // pred_fallthru
    _
  %v19 = vld [vmem:[%s0] sm:$0xf]
  %v20 = vld [vmem:[%s0 + $0x4] sm:$0xf]
  %v21 = vld [vmem:[%s0 + $0x8] sm:$0xf]
  %v22 = vld [vmem:[%s0 + $0xc] sm:$0xf]
  %v23 = vld [vmem:[%s0 + $0x10] sm:$0xf]
  %v24 = vld [vmem:[%s0 + $0x14] sm:$0xf]
  %v25 = vld [vmem:[%s0 + $0x18] sm:$0xf]
  %v26 = vld [vmem:[%s0 + $0x1c] sm:$0xf]
  %v27 = vld [vmem:[%s0 + $0x20] sm:$0xf]
  %v28 = vld [vmem:[%s0 + $0x24] sm:$0xf]
  %v29 = vld [vmem:[%s0 + $0x28] sm:$0xf]
  %v30 = vld [vmem:[%s0 + $0x2c] sm:$0xf]
  %v31 = vld [vmem:[%s0 + $0x30] sm:$0xf]
  %v32 = vld [vmem:[%s0 + $0x34] sm:$0xf]
  %v33 = vld [vmem:[%s0 + $0x38] sm:$0xf]
  %v34 = vld [vmem:[%s0 + $0x3c] sm:$0xf]
  %v35 = vld [vmem:[%s0 + $0x40] sm:$0xf]
  %v36 = vld [vmem:[%s0 + $0x44] sm:$0xf]
  %v37 = vld [vmem:[%s0 + $0x48] sm:$0xf]
  %v38 = vld [vmem:[%s0 + $0x4c] sm:$0xf]
  %v39 = vld [vmem:[%s0 + $0x50] sm:$0xf]
  %v40 = vld [vmem:[%s0 + $0x54] sm:$0xf]
  %v41 = vld [vmem:[%s0 + $0x58] sm:$0xf]
  %v42 = vld [vmem:[%s0 + $0x5c] sm:$0xf]
  %v43 = vld [vmem:[%s0 + $0x60] sm:$0xf]
  %v44 = vld [vmem:[%s0 + $0x64] sm:$0xf]
  %v45 = vld [vmem:[%s0 + $0x68] sm:$0xf]
  %v46 = vld [vmem:[%s0 + $0x6c] sm:$0xf]
  %v47 = vld [vmem:[%s0 + $0x70] sm:$0xf]
  %v48 = vld [vmem:[%s0 + $0x74] sm:$0xf]
  %v49 = vld [vmem:[%s0 + $0x78] sm:$0xf]
  %v50 = vld [vmem:[%s0 + $0x7c] sm:$0xf]
  %v51 = vld [vmem:[%s0 + $0x80] sm:$0xf]
  %v52 = vld [vmem:[%s0 + $0x84] sm:$0xf]
  %v53 = vld [vmem:[%s0 + $0x88] sm:$0xf]
  %v54 = vld [vmem:[%s0 + $0x8c] sm:$0xf]
  %v55 = vld [vmem:[%s0 + $0x90] sm:$0xf]
  %v56 = vld [vmem:[%s0 + $0x94] sm:$0xf]
  %v57 = vld [vmem:[%s0 + $0x98] sm:$0xf]
  %v58 = vld [vmem:[%s0 + $0x9c] sm:$0xf]
  %v59 = vld [vmem:[%s0 + $0xa0] sm:$0xf]
  %v60 = vld [vmem:[%s0 + $0xa4] sm:$0xf]
  %v61 = vld [vmem:[%s0 + $0xa8] sm:$0xf]
  %v62 = vld [vmem:[%s0 + $0xac] sm:$0xf]
  %v63 = vld [vmem:[%s0 + $0xb0] sm:$0xf]
  %v64 = vld [vmem:[%s0 + $0xb4] sm:$0xf]
  %v65 = vld [vmem:[%s0 + $0xb8] sm:$0xf]
  %v66 = vld [vmem:[%s0 + $0xbc] sm:$0xf]
  %v67 = vld [vmem:[%s0 + $0xc0] sm:$0xf]
  %v68 = vld [vmem:[%s0 + $0xc4] sm:$0xf]
  %v69 = vld [vmem:[%s0 + $0xc8] sm:$0xf]
  %v70 = vld [vmem:[%s0 + $0xcc] sm:$0xf]
  %v71 = vld [vmem:[%s0 + $0xd0] sm:$0xf]
  %v72 = vld [vmem:[%s0 + $0xd4] sm:$0xf]
  %v73 = vld [vmem:[%s0 + $0xd8] sm:$0xf]
  %v74 = vld [vmem:[%s0 + $0xdc] sm:$0xf]
  %v75 = vld [vmem:[%s0 + $0xe0] sm:$0xf]
  %v76 = vld [vmem:[%s0 + $0xe4] sm:$0xf]
  %v77 = vld [vmem:[%s0 + $0xe8] sm:$0xf]
  %v78 = vld [vmem:[%s0 + $0xec] sm:$0xf]
  %v79 = vld [vmem:[%s0 + $0xf0] sm:$0xf]
  %v80 = vld [vmem:[%s0 + $0xf4] sm:$0xf]
  %v81 = vld [vmem:[%s0 + $0xf8] sm:$0xf]
  %v82 = vld [vmem:[%s0 + $0xfc] sm:$0xf]
  %v83 = vld [vmem:[%s1] sm:$0xf]
  %v84 = vld [vmem:[%s1 + $0x4] sm:$0xf]
  %v85 = vld [vmem:[%s1 + $0x8] sm:$0xf]
  %v86 = vld [vmem:[%s1 + $0xc] sm:$0xf]
  %v87 = vld [vmem:[%s1 + $0x10] sm:$0xf]
  %v88 = vld [vmem:[%s1 + $0x14] sm:$0xf]
  %v89 = vld [vmem:[%s1 + $0x18] sm:$0xf]
  %v90 = vld [vmem:[%s1 + $0x1c] sm:$0xf]
  %v91 = vld [vmem:[%s1 + $0x20] sm:$0xf]
  %v92 = vld [vmem:[%s1 + $0x24] sm:$0xf]
  %v93 = vld [vmem:[%s1 + $0x28] sm:$0xf]
  %v94 = vld [vmem:[%s1 + $0x2c] sm:$0xf]
  %v95 = vld [vmem:[%s1 + $0x30] sm:$0xf]
  %v96 = vld [vmem:[%s1 + $0x34] sm:$0xf]
  %v97 = vld [vmem:[%s1 + $0x38] sm:$0xf]
  %v98 = vld [vmem:[%s1 + $0x3c] sm:$0xf]
  %v163 = vunpack.c.l.b16 %v19
  %v164 = vunpack.c.l.b16 %v20
  %v165 = vunpack.c.l.b16 %v21
  %v166 = vunpack.c.l.b16 %v22
  %v167 = vunpack.c.l.b16 %v23
  %v168 = vunpack.c.l.b16 %v24
  %v169 = vunpack.c.l.b16 %v25
  %v170 = vunpack.c.l.b16 %v26
  %v171 = vunpack.c.l.b16 %v27
  %v172 = vunpack.c.l.b16 %v28
  %v173 = vunpack.c.l.b16 %v29
  %v174 = vunpack.c.l.b16 %v30
  %v175 = vunpack.c.l.b16 %v31
  %v176 = vunpack.c.l.b16 %v32
  %v177 = vunpack.c.l.b16 %v33
  %v178 = vunpack.c.l.b16 %v34
  %v179 = vunpack.c.l.b16 %v35
  %v180 = vunpack.c.l.b16 %v36
  %v181 = vunpack.c.l.b16 %v37
  %v182 = vunpack.c.l.b16 %v38
  %v183 = vunpack.c.l.b16 %v39
  %v184 = vunpack.c.l.b16 %v40
  %v185 = vunpack.c.l.b16 %v41
  %v186 = vunpack.c.l.b16 %v42
  %v187 = vunpack.c.l.b16 %v43
  %v188 = vunpack.c.l.b16 %v44
  %v189 = vunpack.c.l.b16 %v45
  %v190 = vunpack.c.l.b16 %v46
  %v191 = vunpack.c.l.b16 %v47
  %v192 = vunpack.c.l.b16 %v48
  %v193 = vunpack.c.l.b16 %v49
  %v194 = vunpack.c.l.b16 %v50
  %v195 = vunpack.c.l.b16 %v51
  %v196 = vunpack.c.l.b16 %v52
  %v197 = vunpack.c.l.b16 %v53
  %v198 = vunpack.c.l.b16 %v54
  %v199 = vunpack.c.l.b16 %v55
  %v200 = vunpack.c.l.b16 %v56
  %v201 = vunpack.c.l.b16 %v57
  %v202 = vunpack.c.l.b16 %v58
  %v203 = vunpack.c.l.b16 %v59
  %v204 = vunpack.c.l.b16 %v60
  %v205 = vunpack.c.l.b16 %v61
  %v206 = vunpack.c.l.b16 %v62
  %v207 = vunpack.c.l.b16 %v63
  %v208 = vunpack.c.l.b16 %v64
  %v209 = vunpack.c.l.b16 %v65
  %v210 = vunpack.c.l.b16 %v66
  %v211 = vunpack.c.l.b16 %v67
  %v212 = vunpack.c.l.b16 %v68
  %v213 = vunpack.c.l.b16 %v69
  %v214 = vunpack.c.l.b16 %v70
  %v215 = vunpack.c.l.b16 %v71
  %v216 = vunpack.c.l.b16 %v72
  %v217 = vunpack.c.l.b16 %v73
  %v218 = vunpack.c.l.b16 %v74
  %v219 = vunpack.c.l.b16 %v75
  %v220 = vunpack.c.l.b16 %v76
  %v221 = vunpack.c.l.b16 %v77
  %v222 = vunpack.c.l.b16 %v78
  %v223 = vunpack.c.l.b16 %v79
  %v224 = vunpack.c.l.b16 %v80
  %v225 = vunpack.c.l.b16 %v81
  %v226 = vunpack.c.l.b16 %v82
  %v227 = vpack.c.b16 %v164, %v163
  %v228 = vpack.c.b16 %v166, %v165
  %v229 = vpack.c.b16 %v168, %v167
  %v230 = vpack.c.b16 %v170, %v169
  %v231 = vpack.c.b16 %v172, %v171
  %v232 = vpack.c.b16 %v174, %v173
  %v233 = vpack.c.b16 %v176, %v175
  %v234 = vpack.c.b16 %v178, %v177
  %v235 = vpack.c.b16 %v180, %v179
  %v236 = vpack.c.b16 %v182, %v181
  %v237 = vpack.c.b16 %v184, %v183
  %v238 = vpack.c.b16 %v186, %v185
  %v239 = vpack.c.b16 %v188, %v187
  %v240 = vpack.c.b16 %v190, %v189
  %v241 = vpack.c.b16 %v192, %v191
  %v242 = vpack.c.b16 %v194, %v193
  %v243 = vpack.c.b16 %v196, %v195
  %v244 = vpack.c.b16 %v198, %v197
  %v245 = vpack.c.b16 %v200, %v199
  %v246 = vpack.c.b16 %v202, %v201
  %v247 = vpack.c.b16 %v204, %v203
  %v248 = vpack.c.b16 %v206, %v205
  %v249 = vpack.c.b16 %v208, %v207
  %v250 = vpack.c.b16 %v210, %v209
  %v251 = vpack.c.b16 %v212, %v211
  %v252 = vpack.c.b16 %v214, %v213
  %v253 = vpack.c.b16 %v216, %v215
  %v254 = vpack.c.b16 %v218, %v217
  %v255 = vpack.c.b16 %v220, %v219
  %v256 = vpack.c.b16 %v222, %v221
  %v257 = vpack.c.b16 %v224, %v223
  %v258 = vpack.c.b16 %v226, %v225
  %v307 = vunpack.c.l.b16 %v83
  %v308 = vunpack.c.l.b16 %v84
  %v309 = vunpack.c.l.b16 %v85
  %v310 = vunpack.c.l.b16 %v86
  %v311 = vunpack.c.l.b16 %v87
  %v312 = vunpack.c.l.b16 %v88
  %v313 = vunpack.c.l.b16 %v89
  %v314 = vunpack.c.l.b16 %v90
  %v315 = vunpack.c.l.b16 %v91
  %v316 = vunpack.c.l.b16 %v92
  %v317 = vunpack.c.l.b16 %v93
  %v318 = vunpack.c.l.b16 %v94
  %v319 = vunpack.c.l.b16 %v95
  %v320 = vunpack.c.l.b16 %v96
  %v321 = vunpack.c.l.b16 %v97
  %v322 = vunpack.c.l.b16 %v98
  %v323 = vpack.c.b16 %v308, %v307
  %v324 = vpack.c.b16 %v310, %v309
  %v325 = vpack.c.b16 %v312, %v311
  %v326 = vpack.c.b16 %v314, %v313
  %v327 = vpack.c.b16 %v316, %v315
  %v328 = vpack.c.b16 %v318, %v317
  %v329 = vpack.c.b16 %v320, %v319
  %v330 = vpack.c.b16 %v322, %v321
  %339 = vmatprep.subr.bf16.mxu0 0
  %340 = vmatpush1.bf16.msra.mxu0 %v323
  %341 = vmatprep.subr.bf16.mxu0 0
  %342 = vmatpush1.bf16.msra.mxu0 %v324
  %343 = vmatprep.subr.bf16.mxu0 0
  %344 = vmatpush1.bf16.msra.mxu0 %v325
  %345 = vmatprep.subr.bf16.mxu0 0
  %346 = vmatpush1.bf16.msra.mxu0 %v326
  %347 = vmatprep.subr.bf16.mxu0 0
  %348 = vmatpush1.bf16.msra.mxu0 %v327
  %349 = vmatprep.subr.bf16.mxu0 0
  %350 = vmatpush1.bf16.msra.mxu0 %v328
  %351 = vmatprep.subr.bf16.mxu0 0
  %352 = vmatpush1.bf16.msra.mxu0 %v329
  %353 = vmatprep.subr.bf16.mxu0 0
  %354 = vmatpush1.bf16.msra.mxu0 %v330
  %355 = vmatprep.subr.bf16.mxu0 0
  %356 = vmatpush1.bf16.msra.mxu0 0
  %357 = vmatprep.subr.bf16.mxu0 0
  %358 = vmatpush1.bf16.msra.mxu0 0
  %359 = vmatprep.subr.bf16.mxu0 0
  %360 = vmatpush1.bf16.msra.mxu0 0
  %361 = vmatprep.subr.bf16.mxu0 0
  %362 = vmatpush1.bf16.msra.mxu0 0
  %363 = vmatprep.subr.bf16.mxu0 0
  %364 = vmatpush1.bf16.msra.mxu0 0
  %365 = vmatprep.subr.bf16.mxu0 0
  %366 = vmatpush1.bf16.msra.mxu0 0
  %367 = vmatprep.subr.bf16.mxu0 0
  %368 = vmatpush1.bf16.msra.mxu0 0
  %369 = vmatprep.subr.bf16.mxu0 0
  %370 = vmatpush1.bf16.msra.mxu0 0
  %371 = vmatprep.mubr.bf16.mxu0 0
  %372 = vmatmul.mubr.bf16.gmra.mrb[0].mxu0 %v227
  %v373 = vpop.f32.mrb[0].mxu0
  %v374 = vadd.f32 0.0, %v373
  %v375 = vpop.f32.mrb[0].mxu0
  %v376 = vpop.f32.mrb[0].mxu0
  %v377 = vadd.f32 0.0, %v376
  %v378 = vpop.f32.mrb[0].mxu0
  %379 = vmatprep.mubr.bf16.mxu0 0
  %380 = vmatmul.mubr.bf16.gmra.mrb[0].mxu0 %v228
  %v381 = vpop.f32.mrb[0].mxu0
  %v382 = vadd.f32 0.0, %v381
  %v383 = vpop.f32.mrb[0].mxu0
  %v384 = vpop.f32.mrb[0].mxu0
  %v385 = vadd.f32 0.0, %v384
  %v386 = vpop.f32.mrb[0].mxu0
  %387 = vmatprep.mubr.bf16.mxu0 0
  %388 = vmatmul.mubr.bf16.gmra.mrb[0].mxu0 %v229
  %v389 = vpop.f32.mrb[0].mxu0
  %v390 = vadd.f32 0.0, %v389
  %v391 = vpop.f32.mrb[0].mxu0
  %v392 = vpop.f32.mrb[0].mxu0
  %v393 = vadd.f32 0.0, %v392
  %v394 = vpop.f32.mrb[0].mxu0
  %395 = vmatprep.mubr.bf16.mxu0 0
  %396 = vmatmul.mubr.bf16.gmra.mrb[0].mxu0 %v230
  %v397 = vpop.f32.mrb[0].mxu0
  %v398 = vadd.f32 0.0, %v397
  %v399 = vpop.f32.mrb[0].mxu0
  %v400 = vpop.f32.mrb[0].mxu0
  %v401 = vadd.f32 0.0, %v400
  %v402 = vpop.f32.mrb[0].mxu0
  %403 = vmatprep.mubr.bf16.mxu0 0
  %404 = vmatmul.mubr.bf16.gmra.mrb[0].mxu0 %v231
  %v405 = vpop.f32.mrb[0].mxu0
  %v406 = vadd.f32 0.0, %v405
  %v407 = vpop.f32.mrb[0].mxu0
  %v408 = vpop.f32.mrb[0].mxu0
  %v409 = vadd.f32 0.0, %v408
  %v410 = vpop.f32.mrb[0].mxu0
  %411 = vmatprep.mubr.bf16.mxu0 0
  %412 = vmatmul.mubr.bf16.gmra.mrb[0].mxu0 %v232
  %v413 = vpop.f32.mrb[0].mxu0
  %v414 = vadd.f32 0.0, %v413
  %v415 = vpop.f32.mrb[0].mxu0
  %v416 = vpop.f32.mrb[0].mxu0
  %v417 = vadd.f32 0.0, %v416
  %v418 = vpop.f32.mrb[0].mxu0
  %419 = vmatprep.mubr.bf16.mxu0 0
  %420 = vmatmul.mubr.bf16.gmra.mrb[0].mxu0 %v233
  %v421 = vpop.f32.mrb[0].mxu0
  %v422 = vadd.f32 0.0, %v421
  %v423 = vpop.f32.mrb[0].mxu0
  %v424 = vpop.f32.mrb[0].mxu0
  %v425 = vadd.f32 0.0, %v424
  %v426 = vpop.f32.mrb[0].mxu0
  %427 = vmatprep.mubr.bf16.mxu0 0
  %428 = vmatmul.mubr.bf16.gmra.mrb[0].mxu0 %v234
  %v429 = vpop.f32.mrb[0].mxu0
  %v430 = vadd.f32 0.0, %v429
  %v431 = vpop.f32.mrb[0].mxu0
  %v432 = vpop.f32.mrb[0].mxu0
  %v433 = vadd.f32 0.0, %v432
  %v434 = vpop.f32.mrb[0].mxu0
  %435 = vmatprep.mubr.bf16.mxu0 0
  %436 = vmatmul.mubr.bf16.gmra.mrb[0].mxu0 %v235
  %v437 = vpop.f32.mrb[0].mxu0
  %v438 = vadd.f32 0.0, %v437
  %v439 = vpop.f32.mrb[0].mxu0
  %v440 = vpop.f32.mrb[0].mxu0
  %v441 = vadd.f32 0.0, %v440
  %v442 = vpop.f32.mrb[0].mxu0
  %443 = vmatprep.mubr.bf16.mxu0 0
  %444 = vmatmul.mubr.bf16.gmra.mrb[0].mxu0 %v236
  %v445 = vpop.f32.mrb[0].mxu0
  %v446 = vadd.f32 0.0, %v445
  %v447 = vpop.f32.mrb[0].mxu0
  %v448 = vpop.f32.mrb[0].mxu0
  %v449 = vadd.f32 0.0, %v448
  %v450 = vpop.f32.mrb[0].mxu0
  %451 = vmatprep.mubr.bf16.mxu0 0
  %452 = vmatmul.mubr.bf16.gmra.mrb[0].mxu0 %v237
  %v453 = vpop.f32.mrb[0].mxu0
  %v454 = vadd.f32 0.0, %v453
  %v455 = vpop.f32.mrb[0].mxu0
  %v456 = vpop.f32.mrb[0].mxu0
  %v457 = vadd.f32 0.0, %v456
  %v458 = vpop.f32.mrb[0].mxu0
  %459 = vmatprep.mubr.bf16.mxu0 0
  %460 = vmatmul.mubr.bf16.gmra.mrb[0].mxu0 %v238
  %v461 = vpop.f32.mrb[0].mxu0
  %v462 = vadd.f32 0.0, %v461
  %v463 = vpop.f32.mrb[0].mxu0
  %v464 = vpop.f32.mrb[0].mxu0
  %v465 = vadd.f32 0.0, %v464
  %v466 = vpop.f32.mrb[0].mxu0
  %467 = vmatprep.mubr.bf16.mxu0 0
  %468 = vmatmul.mubr.bf16.gmra.mrb[0].mxu0 %v239
  %v469 = vpop.f32.mrb[0].mxu0
  %v470 = vadd.f32 0.0, %v469
  %v471 = vpop.f32.mrb[0].mxu0
  %v472 = vpop.f32.mrb[0].mxu0
  %v473 = vadd.f32 0.0, %v472
  %v474 = vpop.f32.mrb[0].mxu0
  %475 = vmatprep.mubr.bf16.mxu0 0
  %476 = vmatmul.mubr.bf16.gmra.mrb[0].mxu0 %v240
  %v477 = vpop.f32.mrb[0].mxu0
  %v478 = vadd.f32 0.0, %v477
  %v479 = vpop.f32.mrb[0].mxu0
  %v480 = vpop.f32.mrb[0].mxu0
  %v481 = vadd.f32 0.0, %v480
  %v482 = vpop.f32.mrb[0].mxu0
  %483 = vmatprep.mubr.bf16.mxu0 0
  %484 = vmatmul.mubr.bf16.gmra.mrb[0].mxu0 %v241
  %v485 = vpop.f32.mrb[0].mxu0
  %v486 = vadd.f32 0.0, %v485
  %v487 = vpop.f32.mrb[0].mxu0
  %v488 = vpop.f32.mrb[0].mxu0
  %v489 = vadd.f32 0.0, %v488
  %v490 = vpop.f32.mrb[0].mxu0
  %491 = vmatprep.mubr.bf16.mxu0 0
  %492 = vmatmul.mubr.bf16.gmra.mrb[0].mxu0 %v242
  %v493 = vpop.f32.mrb[0].mxu0
  %v494 = vadd.f32 0.0, %v493
  %v495 = vpop.f32.mrb[0].mxu0
  %v496 = vpop.f32.mrb[0].mxu0
  %v497 = vadd.f32 0.0, %v496
  %v498 = vpop.f32.mrb[0].mxu0
  %499 = vmatprep.mubr.bf16.mxu0 0
  %500 = vmatmul.mubr.bf16.gmra.mrb[0].mxu0 %v243
  %v501 = vpop.f32.mrb[0].mxu0
  %v502 = vadd.f32 0.0, %v501
  %v503 = vpop.f32.mrb[0].mxu0
  %v504 = vpop.f32.mrb[0].mxu0
  %v505 = vadd.f32 0.0, %v504
  %v506 = vpop.f32.mrb[0].mxu0
  %507 = vmatprep.mubr.bf16.mxu0 0
  %508 = vmatmul.mubr.bf16.gmra.mrb[0].mxu0 %v244
  %v509 = vpop.f32.mrb[0].mxu0
  %v510 = vadd.f32 0.0, %v509
  %v511 = vpop.f32.mrb[0].mxu0
  %v512 = vpop.f32.mrb[0].mxu0
  %v513 = vadd.f32 0.0, %v512
  %v514 = vpop.f32.mrb[0].mxu0
  %515 = vmatprep.mubr.bf16.mxu0 0
  %516 = vmatmul.mubr.bf16.gmra.mrb[0].mxu0 %v245
  %v517 = vpop.f32.mrb[0].mxu0
  %v518 = vadd.f32 0.0, %v517
  %v519 = vpop.f32.mrb[0].mxu0
  %v520 = vpop.f32.mrb[0].mxu0
  %v521 = vadd.f32 0.0, %v520
  %v522 = vpop.f32.mrb[0].mxu0
  %523 = vmatprep.mubr.bf16.mxu0 0
  %524 = vmatmul.mubr.bf16.gmra.mrb[0].mxu0 %v246
  %v525 = vpop.f32.mrb[0].mxu0
  %v526 = vadd.f32 0.0, %v525
  %v527 = vpop.f32.mrb[0].mxu0
  %v528 = vpop.f32.mrb[0].mxu0
  %v529 = vadd.f32 0.0, %v528
  %v530 = vpop.f32.mrb[0].mxu0
  %531 = vmatprep.mubr.bf16.mxu0 0
  %532 = vmatmul.mubr.bf16.gmra.mrb[0].mxu0 %v247
  %v533 = vpop.f32.mrb[0].mxu0
  %v534 = vadd.f32 0.0, %v533
  %v535 = vpop.f32.mrb[0].mxu0
  %v536 = vpop.f32.mrb[0].mxu0
  %v537 = vadd.f32 0.0, %v536
  %v538 = vpop.f32.mrb[0].mxu0
  %539 = vmatprep.mubr.bf16.mxu0 0
  %540 = vmatmul.mubr.bf16.gmra.mrb[0].mxu0 %v248
  %v541 = vpop.f32.mrb[0].mxu0
  %v542 = vadd.f32 0.0, %v541
  %v543 = vpop.f32.mrb[0].mxu0
  %v544 = vpop.f32.mrb[0].mxu0
  %v545 = vadd.f32 0.0, %v544
  %v546 = vpop.f32.mrb[0].mxu0
  %547 = vmatprep.mubr.bf16.mxu0 0
  %548 = vmatmul.mubr.bf16.gmra.mrb[0].mxu0 %v249
  %v549 = vpop.f32.mrb[0].mxu0
  %v550 = vadd.f32 0.0, %v549
  %v551 = vpop.f32.mrb[0].mxu0
  %v552 = vpop.f32.mrb[0].mxu0
  %v553 = vadd.f32 0.0, %v552
  %v554 = vpop.f32.mrb[0].mxu0
  %555 = vmatprep.mubr.bf16.mxu0 0
  %556 = vmatmul.mubr.bf16.gmra.mrb[0].mxu0 %v250
  %v557 = vpop.f32.mrb[0].mxu0
  %v558 = vadd.f32 0.0, %v557
  %v559 = vpop.f32.mrb[0].mxu0
  %v560 = vpop.f32.mrb[0].mxu0
  %v561 = vadd.f32 0.0, %v560
  %v562 = vpop.f32.mrb[0].mxu0
  %563 = vmatprep.mubr.bf16.mxu0 0
  %564 = vmatmul.mubr.bf16.gmra.mrb[0].mxu0 %v251
  %v565 = vpop.f32.mrb[0].mxu0
  %v566 = vadd.f32 0.0, %v565
  %v567 = vpop.f32.mrb[0].mxu0
  %v568 = vpop.f32.mrb[0].mxu0
  %v569 = vadd.f32 0.0, %v568
  %v570 = vpop.f32.mrb[0].mxu0
  %571 = vmatprep.mubr.bf16.mxu0 0
  %572 = vmatmul.mubr.bf16.gmra.mrb[0].mxu0 %v252
  %v573 = vpop.f32.mrb[0].mxu0
  %v574 = vadd.f32 0.0, %v573
  %v575 = vpop.f32.mrb[0].mxu0
  %v576 = vpop.f32.mrb[0].mxu0
  %v577 = vadd.f32 0.0, %v576
  %v578 = vpop.f32.mrb[0].mxu0
  %579 = vmatprep.mubr.bf16.mxu0 0
  %580 = vmatmul.mubr.bf16.gmra.mrb[0].mxu0 %v253
  %v581 = vpop.f32.mrb[0].mxu0
  %v582 = vadd.f32 0.0, %v581
  %v583 = vpop.f32.mrb[0].mxu0
  %v584 = vpop.f32.mrb[0].mxu0
  %v585 = vadd.f32 0.0, %v584
  %v586 = vpop.f32.mrb[0].mxu0
  %587 = vmatprep.mubr.bf16.mxu0 0
  %588 = vmatmul.mubr.bf16.gmra.mrb[0].mxu0 %v254
  %v589 = vpop.f32.mrb[0].mxu0
  %v590 = vadd.f32 0.0, %v589
  %v591 = vpop.f32.mrb[0].mxu0
  %v592 = vpop.f32.mrb[0].mxu0
  %v593 = vadd.f32 0.0, %v592
  %v594 = vpop.f32.mrb[0].mxu0
  %595 = vmatprep.mubr.bf16.mxu0 0
  %596 = vmatmul.mubr.bf16.gmra.mrb[0].mxu0 %v255
  %v597 = vpop.f32.mrb[0].mxu0
  %v598 = vadd.f32 0.0, %v597
  %v599 = vpop.f32.mrb[0].mxu0
  %v600 = vpop.f32.mrb[0].mxu0
  %v601 = vadd.f32 0.0, %v600
  %v602 = vpop.f32.mrb[0].mxu0
  %603 = vmatprep.mubr.bf16.mxu0 0
  %604 = vmatmul.mubr.bf16.gmra.mrb[0].mxu0 %v256
  %v605 = vpop.f32.mrb[0].mxu0
  %v606 = vadd.f32 0.0, %v605
  %v607 = vpop.f32.mrb[0].mxu0
  %v608 = vpop.f32.mrb[0].mxu0
  %v609 = vadd.f32 0.0, %v608
  %v610 = vpop.f32.mrb[0].mxu0
  %611 = vmatprep.mubr.bf16.mxu0 0
  %612 = vmatmul.mubr.bf16.gmra.mrb[0].mxu0 %v257
  %v613 = vpop.f32.mrb[0].mxu0
  %v614 = vadd.f32 0.0, %v613
  %v615 = vpop.f32.mrb[0].mxu0
  %v616 = vpop.f32.mrb[0].mxu0
  %v617 = vadd.f32 0.0, %v616
  %v618 = vpop.f32.mrb[0].mxu0
  %619 = vmatprep.mubr.bf16.mxu0 0
  %620 = vmatmul.mubr.bf16.gmra.mrb[0].mxu0 %v258
  %v621 = vpop.f32.mrb[0].mxu0
  %v622 = vadd.f32 0.0, %v621
  %v623 = vpop.f32.mrb[0].mxu0
  %v624 = vpop.f32.mrb[0].mxu0
  %v625 = vadd.f32 0.0, %v624
  %v626 = vpop.f32.mrb[0].mxu0
  %627 = vdwg.mxu0
  %628 = vst [vmem:[%s2] sm:$0xff] %v374
  %629 = vst [vmem:[%s2 + $0x8] sm:$0xff] %v377
  %630 = vst [vmem:[%s2 + $0x10] sm:$0xff] %v382
  %631 = vst [vmem:[%s2 + $0x18] sm:$0xff] %v385
  %632 = vst [vmem:[%s2 + $0x20] sm:$0xff] %v390
  %633 = vst [vmem:[%s2 + $0x28] sm:$0xff] %v393
  %634 = vst [vmem:[%s2 + $0x30] sm:$0xff] %v398
  %635 = vst [vmem:[%s2 + $0x38] sm:$0xff] %v401
  %636 = vst [vmem:[%s2 + $0x40] sm:$0xff] %v406
  %637 = vst [vmem:[%s2 + $0x48] sm:$0xff] %v409
  %638 = vst [vmem:[%s2 + $0x50] sm:$0xff] %v414
  %639 = vst [vmem:[%s2 + $0x58] sm:$0xff] %v417
  %640 = vst [vmem:[%s2 + $0x60] sm:$0xff] %v422
  %641 = vst [vmem:[%s2 + $0x68] sm:$0xff] %v425
  %642 = vst [vmem:[%s2 + $0x70] sm:$0xff] %v430
  %643 = vst [vmem:[%s2 + $0x78] sm:$0xff] %v433
  %644 = vst [vmem:[%s2 + $0x80] sm:$0xff] %v438
  %645 = vst [vmem:[%s2 + $0x88] sm:$0xff] %v441
  %646 = vst [vmem:[%s2 + $0x90] sm:$0xff] %v446
  %647 = vst [vmem:[%s2 + $0x98] sm:$0xff] %v449
  %648 = vst [vmem:[%s2 + $0xa0] sm:$0xff] %v454
  %649 = vst [vmem:[%s2 + $0xa8] sm:$0xff] %v457
  %650 = vst [vmem:[%s2 + $0xb0] sm:$0xff] %v462
  %651 = vst [vmem:[%s2 + $0xb8] sm:$0xff] %v465
  %652 = vst [vmem:[%s2 + $0xc0] sm:$0xff] %v470
  %653 = vst [vmem:[%s2 + $0xc8] sm:$0xff] %v473
  %654 = vst [vmem:[%s2 + $0xd0] sm:$0xff] %v478
  %655 = vst [vmem:[%s2 + $0xd8] sm:$0xff] %v481
  %656 = vst [vmem:[%s2 + $0xe0] sm:$0xff] %v486
  %657 = vst [vmem:[%s2 + $0xe8] sm:$0xff] %v489
  %658 = vst [vmem:[%s2 + $0xf0] sm:$0xff] %v494
  %659 = vst [vmem:[%s2 + $0xf8] sm:$0xff] %v497
  %660 = vst [vmem:[%s2 + $0x100] sm:$0xff] %v502
  %661 = vst [vmem:[%s2 + $0x108] sm:$0xff] %v505
  %662 = vst [vmem:[%s2 + $0x110] sm:$0xff] %v510
  %663 = vst [vmem:[%s2 + $0x118] sm:$0xff] %v513
  %664 = vst [vmem:[%s2 + $0x120] sm:$0xff] %v518
  %665 = vst [vmem:[%s2 + $0x128] sm:$0xff] %v521
  %666 = vst [vmem:[%s2 + $0x130] sm:$0xff] %v526
  %667 = vst [vmem:[%s2 + $0x138] sm:$0xff] %v529
  %668 = vst [vmem:[%s2 + $0x140] sm:$0xff] %v534
  %669 = vst [vmem:[%s2 + $0x148] sm:$0xff] %v537
  %670 = vst [vmem:[%s2 + $0x150] sm:$0xff] %v542
  %671 = vst [vmem:[%s2 + $0x158] sm:$0xff] %v545
  %672 = vst [vmem:[%s2 + $0x160] sm:$0xff] %v550
  %673 = vst [vmem:[%s2 + $0x168] sm:$0xff] %v553
  %674 = vst [vmem:[%s2 + $0x170] sm:$0xff] %v558
  %675 = vst [vmem:[%s2 + $0x178] sm:$0xff] %v561
  %676 = vst [vmem:[%s2 + $0x180] sm:$0xff] %v566
  %677 = vst [vmem:[%s2 + $0x188] sm:$0xff] %v569
  %678 = vst [vmem:[%s2 + $0x190] sm:$0xff] %v574
  %679 = vst [vmem:[%s2 + $0x198] sm:$0xff] %v577
  %680 = vst [vmem:[%s2 + $0x1a0] sm:$0xff] %v582
  %681 = vst [vmem:[%s2 + $0x1a8] sm:$0xff] %v585
  %682 = vst [vmem:[%s2 + $0x1b0] sm:$0xff] %v590
  %683 = vst [vmem:[%s2 + $0x1b8] sm:$0xff] %v593
  %684 = vst [vmem:[%s2 + $0x1c0] sm:$0xff] %v598
  %685 = vst [vmem:[%s2 + $0x1c8] sm:$0xff] %v601
  %686 = vst [vmem:[%s2 + $0x1d0] sm:$0xff] %v606
  %687 = vst [vmem:[%s2 + $0x1d8] sm:$0xff] %v609
  %688 = vst [vmem:[%s2 + $0x1e0] sm:$0xff] %v614
  %689 = vst [vmem:[%s2 + $0x1e8] sm:$0xff] %v617
  %690 = vst [vmem:[%s2 + $0x1f0] sm:$0xff] %v622
  %691 = vst [vmem:[%s2 + $0x1f8] sm:$0xff] %v625
  %v692 = vld [vmem:[%s3] sm:$0x3]
  %v693 = vadd.f32 %v374, %v377
  %v694 = vadd.f32 %v693, %v382
  %v695 = vadd.f32 %v694, %v385
  %v696 = vadd.f32 %v695, %v390
  %v697 = vadd.f32 %v696, %v393
  %v698 = vadd.f32 %v697, %v398
  %v699 = vadd.f32 %v698, %v401
  %v700 = vadd.f32 %v699, %v406
  %v701 = vadd.f32 %v700, %v409
  %v702 = vadd.f32 %v701, %v414
  %v703 = vadd.f32 %v702, %v417
  %v704 = vadd.f32 %v703, %v422
  %v705 = vadd.f32 %v704, %v425
  %v706 = vadd.f32 %v705, %v430
  %v707 = vadd.f32 %v706, %v433
  %v708 = vadd.f32 %v707, %v438
  %v709 = vadd.f32 %v708, %v441
  %v710 = vadd.f32 %v709, %v446
  %v711 = vadd.f32 %v710, %v449
  %v712 = vadd.f32 %v711, %v454
  %v713 = vadd.f32 %v712, %v457
  %v714 = vadd.f32 %v713, %v462
  %v715 = vadd.f32 %v714, %v465
  %v716 = vadd.f32 %v715, %v470
  %v717 = vadd.f32 %v716, %v473
  %v718 = vadd.f32 %v717, %v478
  %v719 = vadd.f32 %v718, %v481
  %v720 = vadd.f32 %v719, %v486
  %v721 = vadd.f32 %v720, %v489
  %v722 = vadd.f32 %v721, %v494
  %v723 = vadd.f32 %v722, %v497
  %v724 = vadd.f32 %v723, %v502
  %v725 = vadd.f32 %v724, %v505
  %v726 = vadd.f32 %v725, %v510
  %v727 = vadd.f32 %v726, %v513
  %v728 = vadd.f32 %v727, %v518
  %v729 = vadd.f32 %v728, %v521
  %v730 = vadd.f32 %v729, %v526
  %v731 = vadd.f32 %v730, %v529
  %v732 = vadd.f32 %v731, %v534
  %v733 = vadd.f32 %v732, %v537
  %v734 = vadd.f32 %v733, %v542
  %v735 = vadd.f32 %v734, %v545
  %v736 = vadd.f32 %v735, %v550
  %v737 = vadd.f32 %v736, %v553
  %v738 = vadd.f32 %v737, %v558
  %v739 = vadd.f32 %v738, %v561
  %v740 = vadd.f32 %v739, %v566
  %v741 = vadd.f32 %v740, %v569
  %v742 = vadd.f32 %v741, %v574
  %v743 = vadd.f32 %v742, %v577
  %v744 = vadd.f32 %v743, %v582
  %v745 = vadd.f32 %v744, %v585
  %v746 = vadd.f32 %v745, %v590
  %v747 = vadd.f32 %v746, %v593
  %v748 = vadd.f32 %v747, %v598
  %v749 = vadd.f32 %v748, %v601
  %v750 = vadd.f32 %v749, %v606
  %v751 = vadd.f32 %v750, %v609
  %v752 = vadd.f32 %v751, %v614
  %v753 = vadd.f32 %v752, %v617
  %v754 = vadd.f32 %v753, %v622
  %v755 = vadd.f32 %v754, %v625
  %v756 = vrot.slane %v755, 4
  %v757 = vadd.f32 %v755, %v756
  %v758 = vrot.slane %v757, 2
  %v759 = vadd.f32 %v757, %v758
  %v760 = vrot.slane %v759, 1
  %v761 = vadd.f32 %v759, %v760
  %v762 = vmul.f32 %v374, %v374
  %v763 = vmul.f32 %v377, %v377
  %v764 = vmul.f32 %v382, %v382
  %v765 = vmul.f32 %v385, %v385
  %v766 = vmul.f32 %v390, %v390
  %v767 = vmul.f32 %v393, %v393
  %v768 = vmul.f32 %v398, %v398
  %v769 = vmul.f32 %v401, %v401
  %v770 = vmul.f32 %v406, %v406
  %v771 = vmul.f32 %v409, %v409
  %v772 = vmul.f32 %v414, %v414
  %v773 = vmul.f32 %v417, %v417
  %v774 = vmul.f32 %v422, %v422
  %v775 = vmul.f32 %v425, %v425
  %v776 = vmul.f32 %v430, %v430
  %v777 = vmul.f32 %v433, %v433
  %v778 = vmul.f32 %v438, %v438
  %v779 = vmul.f32 %v441, %v441
  %v780 = vmul.f32 %v446, %v446
  %v781 = vmul.f32 %v449, %v449
  %v782 = vmul.f32 %v454, %v454
  %v783 = vmul.f32 %v457, %v457
  %v784 = vmul.f32 %v462, %v462
  %v785 = vmul.f32 %v465, %v465
  %v786 = vmul.f32 %v470, %v470
  %v787 = vmul.f32 %v473, %v473
  %v788 = vmul.f32 %v478, %v478
  %v789 = vmul.f32 %v481, %v481
  %v790 = vmul.f32 %v486, %v486
  %v791 = vmul.f32 %v489, %v489
  %v792 = vmul.f32 %v494, %v494
  %v793 = vmul.f32 %v497, %v497
  %v794 = vmul.f32 %v502, %v502
  %v795 = vmul.f32 %v505, %v505
  %v796 = vmul.f32 %v510, %v510
  %v797 = vmul.f32 %v513, %v513
  %v798 = vmul.f32 %v518, %v518
  %v799 = vmul.f32 %v521, %v521
  %v800 = vmul.f32 %v526, %v526
  %v801 = vmul.f32 %v529, %v529
  %v802 = vmul.f32 %v534, %v534
  %v803 = vmul.f32 %v537, %v537
  %v804 = vmul.f32 %v542, %v542
  %v805 = vmul.f32 %v545, %v545
  %v806 = vmul.f32 %v550, %v550
  %v807 = vmul.f32 %v553, %v553
  %v808 = vmul.f32 %v558, %v558
  %v809 = vmul.f32 %v561, %v561
  %v810 = vmul.f32 %v566, %v566
  %v811 = vmul.f32 %v569, %v569
  %v812 = vmul.f32 %v574, %v574
  %v813 = vmul.f32 %v577, %v577
  %v814 = vmul.f32 %v582, %v582
  %v815 = vmul.f32 %v585, %v585
  %v816 = vmul.f32 %v590, %v590
  %v817 = vmul.f32 %v593, %v593
  %v818 = vmul.f32 %v598, %v598
  %v819 = vmul.f32 %v601, %v601
  %v820 = vmul.f32 %v606, %v606
  %v821 = vmul.f32 %v609, %v609
  %v822 = vmul.f32 %v614, %v614
  %v823 = vmul.f32 %v617, %v617
  %v824 = vmul.f32 %v622, %v622
  %v825 = vmul.f32 %v625, %v625
  %v826 = vadd.f32 %v762, %v763
  %v827 = vadd.f32 %v826, %v764
  %v828 = vadd.f32 %v827, %v765
  %v829 = vadd.f32 %v828, %v766
  %v830 = vadd.f32 %v829, %v767
  %v831 = vadd.f32 %v830, %v768
  %v832 = vadd.f32 %v831, %v769
  %v833 = vadd.f32 %v832, %v770
  %v834 = vadd.f32 %v833, %v771
  %v835 = vadd.f32 %v834, %v772
  %v836 = vadd.f32 %v835, %v773
  %v837 = vadd.f32 %v836, %v774
  %v838 = vadd.f32 %v837, %v775
  %v839 = vadd.f32 %v838, %v776
  %v840 = vadd.f32 %v839, %v777
  %v841 = vadd.f32 %v840, %v778
  %v842 = vadd.f32 %v841, %v779
  %v843 = vadd.f32 %v842, %v780
  %v844 = vadd.f32 %v843, %v781
  %v845 = vadd.f32 %v844, %v782
  %v846 = vadd.f32 %v845, %v783
  %v847 = vadd.f32 %v846, %v784
  %v848 = vadd.f32 %v847, %v785
  %v849 = vadd.f32 %v848, %v786
  %v850 = vadd.f32 %v849, %v787
  %v851 = vadd.f32 %v850, %v788
  %v852 = vadd.f32 %v851, %v789
  %v853 = vadd.f32 %v852, %v790
  %v854 = vadd.f32 %v853, %v791
  %v855 = vadd.f32 %v854, %v792
  %v856 = vadd.f32 %v855, %v793
  %v857 = vadd.f32 %v856, %v794
  %v858 = vadd.f32 %v857, %v795
  %v859 = vadd.f32 %v858, %v796
  %v860 = vadd.f32 %v859, %v797
  %v861 = vadd.f32 %v860, %v798
  %v862 = vadd.f32 %v861, %v799
  %v863 = vadd.f32 %v862, %v800
  %v864 = vadd.f32 %v863, %v801
  %v865 = vadd.f32 %v864, %v802
  %v866 = vadd.f32 %v865, %v803
  %v867 = vadd.f32 %v866, %v804
  %v868 = vadd.f32 %v867, %v805
  %v869 = vadd.f32 %v868, %v806
  %v870 = vadd.f32 %v869, %v807
  %v871 = vadd.f32 %v870, %v808
  %v872 = vadd.f32 %v871, %v809
  %v873 = vadd.f32 %v872, %v810
  %v874 = vadd.f32 %v873, %v811
  %v875 = vadd.f32 %v874, %v812
  %v876 = vadd.f32 %v875, %v813
  %v877 = vadd.f32 %v876, %v814
  %v878 = vadd.f32 %v877, %v815
  %v879 = vadd.f32 %v878, %v816
  %v880 = vadd.f32 %v879, %v817
  %v881 = vadd.f32 %v880, %v818
  %v882 = vadd.f32 %v881, %v819
  %v883 = vadd.f32 %v882, %v820
  %v884 = vadd.f32 %v883, %v821
  %v885 = vadd.f32 %v884, %v822
  %v886 = vadd.f32 %v885, %v823
  %v887 = vadd.f32 %v886, %v824
  %v888 = vadd.f32 %v887, %v825
  %v889 = vrot.slane %v888, 4
  %v890 = vadd.f32 %v888, %v889
  %v891 = vrot.slane %v890, 2
  %v892 = vadd.f32 %v890, %v891
  %v893 = vrot.slane %v892, 1
  %v894 = vadd.f32 %v892, %v893
  %vm895 = vcmask 1040384
  %v896 = vsel %vm895, %v761, %v894
  %v897 = vadd.f32 %v692, %v896
  %898 = vst [vmem:[%s3] sm:$0x3] %v897
  // Predicated region
  $region14: #{bottleneck_forward.7} parent=0 // pred_check
    _
  $region15: #{bottleneck_forward.7} parent=0 // pred_check_branch
    %900 = sbr.rel (0) target = $region17
  $region16: #{bottleneck_forward.7} parent=0 // pred_region
    _
  $region17: #{bottleneck_forward.7} parent=0 // pred_fallthru
    _
  // Predicated region
  $region18: #{bottleneck_forward.7} parent=0 // pred_check
    _
  $region19: #{bottleneck_forward.7} parent=0 // pred_check_branch
    %902 = sbr.rel (0) target = $region21
  $region20: #{bottleneck_forward.7} parent=0 // pred_region
    _
  $region21: #{bottleneck_forward.7} parent=0 // pred_fallthru
    _
  // Predicated region
  $region22: #{bottleneck_forward.7} parent=0 // pred_check
    _
  $region23: #{bottleneck_forward.7} parent=0 // pred_check_branch
    %904 = sbr.rel (0) target = $region25
  $region24: #{bottleneck_forward.7} parent=0 // pred_region
    _
  $region25: #{bottleneck_forward.7} parent=0 // pred_fallthru
    _
  // Predicated region
  $region26: #{bottleneck_forward.7} parent=0 // pred_check
    _
  $region27: #{bottleneck_forward.7} parent=0 // pred_check_branch
    %906 = sbr.rel (0) target = $region29
  $region28: #{bottleneck_forward.7} parent=0 // pred_region
    _
  $region29: #{bottleneck_forward.7} parent=0 // pred_fallthru
    _

// kernel: bottleneck_forward.8
$region0: #{bottleneck_forward.8}
  #allocation0 [shape = 'u32[]', space=smem, size = 0x4, offset = 0x4, fixed_abs, tag = 'smem constant byte address 0x4 - core index']
  #allocation1 [shape = 'u32[144,128]{1,0:T(1,128)}', space=vmem, size = 0x12000, scoped, tag = 'internal scratch']
  %s0 = inlined_call_operand.vmem [shape: f32[512,128], index: 0, kind: input, shape index: {}]
  %s1 = inlined_call_operand.vmem [shape: f32[2,128], index: 1, kind: input, shape index: {}]
  %s2 = inlined_call_operand.vmem [shape: f32[1,128], index: 2, kind: input, shape index: {}]
  %s3 = inlined_call_operand.vmem [shape: f32[1,128], index: 3, kind: input, shape index: {}]
  %s4 = inlined_call_operand.vmem [shape: bf16[512,128], index: 4, kind: output, shape index: {}]
  %s5 = sld [smem:[#allocation0]]
  $region26: #{bottleneck_forward.8} parent=0
    _
  %s7 = ssub.s32 1, %s5
  %s8 = scalar_select 0, %s7, %s5
  // Predicated region
  $region2: #{bottleneck_forward.8} parent=0 // pred_check
    _
  $region3: #{bottleneck_forward.8} parent=0 // pred_check_branch
    %10 = sbr.rel (0) target = $region5
  $region4: #{bottleneck_forward.8} parent=0 // pred_region
    _
  $region5: #{bottleneck_forward.8} parent=0 // pred_fallthru
    _
  // Predicated region
  $region6: #{bottleneck_forward.8} parent=0 // pred_check
    _
  $region7: #{bottleneck_forward.8} parent=0 // pred_check_branch
    %12 = sbr.rel (0) target = $region9
  $region8: #{bottleneck_forward.8} parent=0 // pred_region
    _
  $region9: #{bottleneck_forward.8} parent=0 // pred_fallthru
    _
  // Predicated region
  $region10: #{bottleneck_forward.8} parent=0 // pred_check
    _
  $region11: #{bottleneck_forward.8} parent=0 // pred_check_branch
    %14 = sbr.rel (0) target = $region13
  $region12: #{bottleneck_forward.8} parent=0 // pred_region
    _
  $region13: #{bottleneck_forward.8} parent=0 // pred_fallthru
    _
  // Predicated region
  $region14: #{bottleneck_forward.8} parent=0 // pred_check
    _
  $region15: #{bottleneck_forward.8} parent=0 // pred_check_branch
    %16 = sbr.rel (0) target = $region17
  $region16: #{bottleneck_forward.8} parent=0 // pred_region
    _
  $region17: #{bottleneck_forward.8} parent=0 // pred_fallthru
    _
  %v17 = vld [vmem:[%s1] sm:$0x3]
  %v18 = vld [vmem:[%s2] sm:$0x1]
  %v19 = vld [vmem:[%s3] sm:$0x1]
  %v20 = vmul.f32 %v17, 0.001953125
  %v21 = vmul.f32 %v20, %v20
  %v23 = vrot.slane %v21, 7
  %v25 = vsub.f32 %v20, %v23
  %v26 = vmax.f32 %v25, 0.0
  %v27 = vadd.f32 %v26, 1e-05
  %v28 = vrsqrt.pop %v27
  %v30 = vlaneseq
  %v31 = vshrl.u32 %v30, 7
  %v32 = vsub.s32 0, %v31
  %v33 = vrot.slane %v18, %v32
  %v35 = vmul.f32 %v28, %v33
  %v37 = vrot.slane %v35, 1
  %v39 = vmul.f32 %v20, %v37
  %v40 = vsub.f32 %v19, %v39
  %v41 = vld [vmem:[%s0] sm:$0xff]
  %v42 = vld [vmem:[%s0 + $0x8] sm:$0xff]
  %v43 = vld [vmem:[%s0 + $0x10] sm:$0xff]
  %v44 = vld [vmem:[%s0 + $0x18] sm:$0xff]
  %v45 = vld [vmem:[%s0 + $0x20] sm:$0xff]
  %v46 = vld [vmem:[%s0 + $0x28] sm:$0xff]
  %v47 = vld [vmem:[%s0 + $0x30] sm:$0xff]
  %v48 = vld [vmem:[%s0 + $0x38] sm:$0xff]
  %v49 = vld [vmem:[%s0 + $0x40] sm:$0xff]
  %v50 = vld [vmem:[%s0 + $0x48] sm:$0xff]
  %v51 = vld [vmem:[%s0 + $0x50] sm:$0xff]
  %v52 = vld [vmem:[%s0 + $0x58] sm:$0xff]
  %v53 = vld [vmem:[%s0 + $0x60] sm:$0xff]
  %v54 = vld [vmem:[%s0 + $0x68] sm:$0xff]
  %v55 = vld [vmem:[%s0 + $0x70] sm:$0xff]
  %v56 = vld [vmem:[%s0 + $0x78] sm:$0xff]
  %v57 = vld [vmem:[%s0 + $0x80] sm:$0xff]
  %v58 = vld [vmem:[%s0 + $0x88] sm:$0xff]
  %v59 = vld [vmem:[%s0 + $0x90] sm:$0xff]
  %v60 = vld [vmem:[%s0 + $0x98] sm:$0xff]
  %v61 = vld [vmem:[%s0 + $0xa0] sm:$0xff]
  %v62 = vld [vmem:[%s0 + $0xa8] sm:$0xff]
  %v63 = vld [vmem:[%s0 + $0xb0] sm:$0xff]
  %v64 = vld [vmem:[%s0 + $0xb8] sm:$0xff]
  %v65 = vld [vmem:[%s0 + $0xc0] sm:$0xff]
  %v66 = vld [vmem:[%s0 + $0xc8] sm:$0xff]
  %v67 = vld [vmem:[%s0 + $0xd0] sm:$0xff]
  %v68 = vld [vmem:[%s0 + $0xd8] sm:$0xff]
  %v69 = vld [vmem:[%s0 + $0xe0] sm:$0xff]
  %v70 = vld [vmem:[%s0 + $0xe8] sm:$0xff]
  %v71 = vld [vmem:[%s0 + $0xf0] sm:$0xff]
  %v72 = vld [vmem:[%s0 + $0xf8] sm:$0xff]
  %v73 = vld [vmem:[%s0 + $0x100] sm:$0xff]
  %v74 = vld [vmem:[%s0 + $0x108] sm:$0xff]
  %v75 = vld [vmem:[%s0 + $0x110] sm:$0xff]
  %v76 = vld [vmem:[%s0 + $0x118] sm:$0xff]
  %v77 = vld [vmem:[%s0 + $0x120] sm:$0xff]
  %v78 = vld [vmem:[%s0 + $0x128] sm:$0xff]
  %v79 = vld [vmem:[%s0 + $0x130] sm:$0xff]
  %v80 = vld [vmem:[%s0 + $0x138] sm:$0xff]
  %v81 = vld [vmem:[%s0 + $0x140] sm:$0xff]
  %v82 = vld [vmem:[%s0 + $0x148] sm:$0xff]
  %v83 = vld [vmem:[%s0 + $0x150] sm:$0xff]
  %v84 = vld [vmem:[%s0 + $0x158] sm:$0xff]
  %v85 = vld [vmem:[%s0 + $0x160] sm:$0xff]
  %v86 = vld [vmem:[%s0 + $0x168] sm:$0xff]
  %v87 = vld [vmem:[%s0 + $0x170] sm:$0xff]
  %v88 = vld [vmem:[%s0 + $0x178] sm:$0xff]
  %v89 = vld [vmem:[%s0 + $0x180] sm:$0xff]
  %v90 = vld [vmem:[%s0 + $0x188] sm:$0xff]
  %v91 = vld [vmem:[%s0 + $0x190] sm:$0xff]
  %v92 = vld [vmem:[%s0 + $0x198] sm:$0xff]
  %v93 = vld [vmem:[%s0 + $0x1a0] sm:$0xff]
  %v94 = vld [vmem:[%s0 + $0x1a8] sm:$0xff]
  %v95 = vld [vmem:[%s0 + $0x1b0] sm:$0xff]
  %v96 = vld [vmem:[%s0 + $0x1b8] sm:$0xff]
  %v97 = vld [vmem:[%s0 + $0x1c0] sm:$0xff]
  %v98 = vld [vmem:[%s0 + $0x1c8] sm:$0xff]
  %v99 = vld [vmem:[%s0 + $0x1d0] sm:$0xff]
  %v100 = vld [vmem:[%s0 + $0x1d8] sm:$0xff]
  %v101 = vld [vmem:[%s0 + $0x1e0] sm:$0xff]
  %v102 = vld [vmem:[%s0 + $0x1e8] sm:$0xff]
  %v103 = vld [vmem:[%s0 + $0x1f0] sm:$0xff]
  %v104 = vld [vmem:[%s0 + $0x1f8] sm:$0xff]
  %v105 = vlaneseq
  %v106 = vshrl.u32 %v105, 7
  %v107 = vsub.s32 1, %v106
  %v108 = vrot.slane %v35, %v107
  %v109 = vmul.f32 %v41, %v108
  %v110 = vmul.f32 %v42, %v108
  %v111 = vmul.f32 %v43, %v108
  %v112 = vmul.f32 %v44, %v108
  %v113 = vmul.f32 %v45, %v108
  %v114 = vmul.f32 %v46, %v108
  %v115 = vmul.f32 %v47, %v108
  %v116 = vmul.f32 %v48, %v108
  %v117 = vmul.f32 %v49, %v108
  %v118 = vmul.f32 %v50, %v108
  %v119 = vmul.f32 %v51, %v108
  %v120 = vmul.f32 %v52, %v108
  %v121 = vmul.f32 %v53, %v108
  %v122 = vmul.f32 %v54, %v108
  %v123 = vmul.f32 %v55, %v108
  %v124 = vmul.f32 %v56, %v108
  %v125 = vmul.f32 %v57, %v108
  %v126 = vmul.f32 %v58, %v108
  %v127 = vmul.f32 %v59, %v108
  %v128 = vmul.f32 %v60, %v108
  %v129 = vmul.f32 %v61, %v108
  %v130 = vmul.f32 %v62, %v108
  %v131 = vmul.f32 %v63, %v108
  %v132 = vmul.f32 %v64, %v108
  %v133 = vmul.f32 %v65, %v108
  %v134 = vmul.f32 %v66, %v108
  %v135 = vmul.f32 %v67, %v108
  %v136 = vmul.f32 %v68, %v108
  %v137 = vmul.f32 %v69, %v108
  %v138 = vmul.f32 %v70, %v108
  %v139 = vmul.f32 %v71, %v108
  %v140 = vmul.f32 %v72, %v108
  %v141 = vmul.f32 %v73, %v108
  %v142 = vmul.f32 %v74, %v108
  %v143 = vmul.f32 %v75, %v108
  %v144 = vmul.f32 %v76, %v108
  %v145 = vmul.f32 %v77, %v108
  %v146 = vmul.f32 %v78, %v108
  %v147 = vmul.f32 %v79, %v108
  %v148 = vmul.f32 %v80, %v108
  %v149 = vmul.f32 %v81, %v108
  %v150 = vmul.f32 %v82, %v108
  %v151 = vmul.f32 %v83, %v108
  %v152 = vmul.f32 %v84, %v108
  %v153 = vmul.f32 %v85, %v108
  %v154 = vmul.f32 %v86, %v108
  %v155 = vmul.f32 %v87, %v108
  %v156 = vmul.f32 %v88, %v108
  %v157 = vmul.f32 %v89, %v108
  %v158 = vmul.f32 %v90, %v108
  %v159 = vmul.f32 %v91, %v108
  %v160 = vmul.f32 %v92, %v108
  %v161 = vmul.f32 %v93, %v108
  %v162 = vmul.f32 %v94, %v108
  %v163 = vmul.f32 %v95, %v108
  %v164 = vmul.f32 %v96, %v108
  %v165 = vmul.f32 %v97, %v108
  %v166 = vmul.f32 %v98, %v108
  %v167 = vmul.f32 %v99, %v108
  %v168 = vmul.f32 %v100, %v108
  %v169 = vmul.f32 %v101, %v108
  %v170 = vmul.f32 %v102, %v108
  %v171 = vmul.f32 %v103, %v108
  %v172 = vmul.f32 %v104, %v108
  %v174 = vlaneseq
  %v175 = vshrl.u32 %v174, 7
  %v176 = vsub.s32 0, %v175
  %v177 = vrot.slane %v40, %v176
  %v179 = vadd.f32 %v109, %v177
  %v180 = vadd.f32 %v110, %v177
  %v181 = vadd.f32 %v111, %v177
  %v182 = vadd.f32 %v112, %v177
  %v183 = vadd.f32 %v113, %v177
  %v184 = vadd.f32 %v114, %v177
  %v185 = vadd.f32 %v115, %v177
  %v186 = vadd.f32 %v116, %v177
  %v187 = vadd.f32 %v117, %v177
  %v188 = vadd.f32 %v118, %v177
  %v189 = vadd.f32 %v119, %v177
  %v190 = vadd.f32 %v120, %v177
  %v191 = vadd.f32 %v121, %v177
  %v192 = vadd.f32 %v122, %v177
  %v193 = vadd.f32 %v123, %v177
  %v194 = vadd.f32 %v124, %v177
  %v195 = vadd.f32 %v125, %v177
  %v196 = vadd.f32 %v126, %v177
  %v197 = vadd.f32 %v127, %v177
  %v198 = vadd.f32 %v128, %v177
  %v199 = vadd.f32 %v129, %v177
  %v200 = vadd.f32 %v130, %v177
  %v201 = vadd.f32 %v131, %v177
  %v202 = vadd.f32 %v132, %v177
  %v203 = vadd.f32 %v133, %v177
  %v204 = vadd.f32 %v134, %v177
  %v205 = vadd.f32 %v135, %v177
  %v206 = vadd.f32 %v136, %v177
  %v207 = vadd.f32 %v137, %v177
  %v208 = vadd.f32 %v138, %v177
  %v209 = vadd.f32 %v139, %v177
  %v210 = vadd.f32 %v140, %v177
  %v211 = vadd.f32 %v141, %v177
  %v212 = vadd.f32 %v142, %v177
  %v213 = vadd.f32 %v143, %v177
  %v214 = vadd.f32 %v144, %v177
  %v215 = vadd.f32 %v145, %v177
  %v216 = vadd.f32 %v146, %v177
  %v217 = vadd.f32 %v147, %v177
  %v218 = vadd.f32 %v148, %v177
  %v219 = vadd.f32 %v149, %v177
  %v220 = vadd.f32 %v150, %v177
  %v221 = vadd.f32 %v151, %v177
  %v222 = vadd.f32 %v152, %v177
  %v223 = vadd.f32 %v153, %v177
  %v224 = vadd.f32 %v154, %v177
  %v225 = vadd.f32 %v155, %v177
  %v226 = vadd.f32 %v156, %v177
  %v227 = vadd.f32 %v157, %v177
  %v228 = vadd.f32 %v158, %v177
  %v229 = vadd.f32 %v159, %v177
  %v230 = vadd.f32 %v160, %v177
  %v231 = vadd.f32 %v161, %v177
  %v232 = vadd.f32 %v162, %v177
  %v233 = vadd.f32 %v163, %v177
  %v234 = vadd.f32 %v164, %v177
  %v235 = vadd.f32 %v165, %v177
  %v236 = vadd.f32 %v166, %v177
  %v237 = vadd.f32 %v167, %v177
  %v238 = vadd.f32 %v168, %v177
  %v239 = vadd.f32 %v169, %v177
  %v240 = vadd.f32 %v170, %v177
  %v241 = vadd.f32 %v171, %v177
  %v242 = vadd.f32 %v172, %v177
  %v243 = vmax.f32 %v179, 0.0
  %v244 = vmax.f32 %v180, 0.0
  %v245 = vmax.f32 %v181, 0.0
  %v246 = vmax.f32 %v182, 0.0
  %v247 = vmax.f32 %v183, 0.0
  %v248 = vmax.f32 %v184, 0.0
  %v249 = vmax.f32 %v185, 0.0
  %v250 = vmax.f32 %v186, 0.0
  %v251 = vmax.f32 %v187, 0.0
  %v252 = vmax.f32 %v188, 0.0
  %v253 = vmax.f32 %v189, 0.0
  %v254 = vmax.f32 %v190, 0.0
  %v255 = vmax.f32 %v191, 0.0
  %v256 = vmax.f32 %v192, 0.0
  %v257 = vmax.f32 %v193, 0.0
  %v258 = vmax.f32 %v194, 0.0
  %v259 = vmax.f32 %v195, 0.0
  %v260 = vmax.f32 %v196, 0.0
  %v261 = vmax.f32 %v197, 0.0
  %v262 = vmax.f32 %v198, 0.0
  %v263 = vmax.f32 %v199, 0.0
  %v264 = vmax.f32 %v200, 0.0
  %v265 = vmax.f32 %v201, 0.0
  %v266 = vmax.f32 %v202, 0.0
  %v267 = vmax.f32 %v203, 0.0
  %v268 = vmax.f32 %v204, 0.0
  %v269 = vmax.f32 %v205, 0.0
  %v270 = vmax.f32 %v206, 0.0
  %v271 = vmax.f32 %v207, 0.0
  %v272 = vmax.f32 %v208, 0.0
  %v273 = vmax.f32 %v209, 0.0
  %v274 = vmax.f32 %v210, 0.0
  %v275 = vmax.f32 %v211, 0.0
  %v276 = vmax.f32 %v212, 0.0
  %v277 = vmax.f32 %v213, 0.0
  %v278 = vmax.f32 %v214, 0.0
  %v279 = vmax.f32 %v215, 0.0
  %v280 = vmax.f32 %v216, 0.0
  %v281 = vmax.f32 %v217, 0.0
  %v282 = vmax.f32 %v218, 0.0
  %v283 = vmax.f32 %v219, 0.0
  %v284 = vmax.f32 %v220, 0.0
  %v285 = vmax.f32 %v221, 0.0
  %v286 = vmax.f32 %v222, 0.0
  %v287 = vmax.f32 %v223, 0.0
  %v288 = vmax.f32 %v224, 0.0
  %v289 = vmax.f32 %v225, 0.0
  %v290 = vmax.f32 %v226, 0.0
  %v291 = vmax.f32 %v227, 0.0
  %v292 = vmax.f32 %v228, 0.0
  %v293 = vmax.f32 %v229, 0.0
  %v294 = vmax.f32 %v230, 0.0
  %v295 = vmax.f32 %v231, 0.0
  %v296 = vmax.f32 %v232, 0.0
  %v297 = vmax.f32 %v233, 0.0
  %v298 = vmax.f32 %v234, 0.0
  %v299 = vmax.f32 %v235, 0.0
  %v300 = vmax.f32 %v236, 0.0
  %v301 = vmax.f32 %v237, 0.0
  %v302 = vmax.f32 %v238, 0.0
  %v303 = vmax.f32 %v239, 0.0
  %v304 = vmax.f32 %v240, 0.0
  %v305 = vmax.f32 %v241, 0.0
  %v306 = vmax.f32 %v242, 0.0
  %v307 = vpack.c.bf16 %v244, %v243
  %v308 = vpack.c.bf16 %v246, %v245
  %v309 = vpack.c.bf16 %v248, %v247
  %v310 = vpack.c.bf16 %v250, %v249
  %v311 = vpack.c.bf16 %v252, %v251
  %v312 = vpack.c.bf16 %v254, %v253
  %v313 = vpack.c.bf16 %v256, %v255
  %v314 = vpack.c.bf16 %v258, %v257
  %v315 = vpack.c.bf16 %v260, %v259
  %v316 = vpack.c.bf16 %v262, %v261
  %v317 = vpack.c.bf16 %v264, %v263
  %v318 = vpack.c.bf16 %v266, %v265
  %v319 = vpack.c.bf16 %v268, %v267
  %v320 = vpack.c.bf16 %v270, %v269
  %v321 = vpack.c.bf16 %v272, %v271
  %v322 = vpack.c.bf16 %v274, %v273
  %v323 = vpack.c.bf16 %v276, %v275
  %v324 = vpack.c.bf16 %v278, %v277
  %v325 = vpack.c.bf16 %v280, %v279
  %v326 = vpack.c.bf16 %v282, %v281
  %v327 = vpack.c.bf16 %v284, %v283
  %v328 = vpack.c.bf16 %v286, %v285
  %v329 = vpack.c.bf16 %v288, %v287
  %v330 = vpack.c.bf16 %v290, %v289
  %v331 = vpack.c.bf16 %v292, %v291
  %v332 = vpack.c.bf16 %v294, %v293
  %v333 = vpack.c.bf16 %v296, %v295
  %v334 = vpack.c.bf16 %v298, %v297
  %v335 = vpack.c.bf16 %v300, %v299
  %v336 = vpack.c.bf16 %v302, %v301
  %v337 = vpack.c.bf16 %v304, %v303
  %v338 = vpack.c.bf16 %v306, %v305
  %v371 = vunpack.c.l.b16 %v307
  %v372 = vunpack.c.h.b16 %v307
  %v373 = vunpack.c.l.b16 %v308
  %v374 = vunpack.c.h.b16 %v308
  %v375 = vunpack.c.l.b16 %v309
  %v376 = vunpack.c.h.b16 %v309
  %v377 = vunpack.c.l.b16 %v310
  %v378 = vunpack.c.h.b16 %v310
  %v379 = vunpack.c.l.b16 %v311
  %v380 = vunpack.c.h.b16 %v311
  %v381 = vunpack.c.l.b16 %v312
  %v382 = vunpack.c.h.b16 %v312
  %v383 = vunpack.c.l.b16 %v313
  %v384 = vunpack.c.h.b16 %v313
  %v385 = vunpack.c.l.b16 %v314
  %v386 = vunpack.c.h.b16 %v314
  %v387 = vunpack.c.l.b16 %v315
  %v388 = vunpack.c.h.b16 %v315
  %v389 = vunpack.c.l.b16 %v316
  %v390 = vunpack.c.h.b16 %v316
  %v391 = vunpack.c.l.b16 %v317
  %v392 = vunpack.c.h.b16 %v317
  %v393 = vunpack.c.l.b16 %v318
  %v394 = vunpack.c.h.b16 %v318
  %v395 = vunpack.c.l.b16 %v319
  %v396 = vunpack.c.h.b16 %v319
  %v397 = vunpack.c.l.b16 %v320
  %v398 = vunpack.c.h.b16 %v320
  %v399 = vunpack.c.l.b16 %v321
  %v400 = vunpack.c.h.b16 %v321
  %v401 = vunpack.c.l.b16 %v322
  %v402 = vunpack.c.h.b16 %v322
  %v403 = vunpack.c.l.b16 %v323
  %v404 = vunpack.c.h.b16 %v323
  %v405 = vunpack.c.l.b16 %v324
  %v406 = vunpack.c.h.b16 %v324
  %v407 = vunpack.c.l.b16 %v325
  %v408 = vunpack.c.h.b16 %v325
  %v409 = vunpack.c.l.b16 %v326
  %v410 = vunpack.c.h.b16 %v326
  %v411 = vunpack.c.l.b16 %v327
  %v412 = vunpack.c.h.b16 %v327
  %v413 = vunpack.c.l.b16 %v328
  %v414 = vunpack.c.h.b16 %v328
  %v415 = vunpack.c.l.b16 %v329
  %v416 = vunpack.c.h.b16 %v329
  %v417 = vunpack.c.l.b16 %v330
  %v418 = vunpack.c.h.b16 %v330
  %v419 = vunpack.c.l.b16 %v331
  %v420 = vunpack.c.h.b16 %v331
  %v421 = vunpack.c.l.b16 %v332
  %v422 = vunpack.c.h.b16 %v332
  %v423 = vunpack.c.l.b16 %v333
  %v424 = vunpack.c.h.b16 %v333
  %v425 = vunpack.c.l.b16 %v334
  %v426 = vunpack.c.h.b16 %v334
  %v427 = vunpack.c.l.b16 %v335
  %v428 = vunpack.c.h.b16 %v335
  %v429 = vunpack.c.l.b16 %v336
  %v430 = vunpack.c.h.b16 %v336
  %v431 = vunpack.c.l.b16 %v337
  %v432 = vunpack.c.h.b16 %v337
  %v433 = vunpack.c.l.b16 %v338
  %v434 = vunpack.c.h.b16 %v338
  %v435 = vpack.c.b16 %v371, %v371
  %v436 = vpack.c.b16 %v372, %v372
  %v437 = vpack.c.b16 %v373, %v373
  %v438 = vpack.c.b16 %v374, %v374
  %v439 = vpack.c.b16 %v375, %v375
  %v440 = vpack.c.b16 %v376, %v376
  %v441 = vpack.c.b16 %v377, %v377
  %v442 = vpack.c.b16 %v378, %v378
  %v443 = vpack.c.b16 %v379, %v379
  %v444 = vpack.c.b16 %v380, %v380
  %v445 = vpack.c.b16 %v381, %v381
  %v446 = vpack.c.b16 %v382, %v382
  %v447 = vpack.c.b16 %v383, %v383
  %v448 = vpack.c.b16 %v384, %v384
  %v449 = vpack.c.b16 %v385, %v385
  %v450 = vpack.c.b16 %v386, %v386
  %v451 = vpack.c.b16 %v387, %v387
  %v452 = vpack.c.b16 %v388, %v388
  %v453 = vpack.c.b16 %v389, %v389
  %v454 = vpack.c.b16 %v390, %v390
  %v455 = vpack.c.b16 %v391, %v391
  %v456 = vpack.c.b16 %v392, %v392
  %v457 = vpack.c.b16 %v393, %v393
  %v458 = vpack.c.b16 %v394, %v394
  %v459 = vpack.c.b16 %v395, %v395
  %v460 = vpack.c.b16 %v396, %v396
  %v461 = vpack.c.b16 %v397, %v397
  %v462 = vpack.c.b16 %v398, %v398
  %v463 = vpack.c.b16 %v399, %v399
  %v464 = vpack.c.b16 %v400, %v400
  %v465 = vpack.c.b16 %v401, %v401
  %v466 = vpack.c.b16 %v402, %v402
  %v467 = vpack.c.b16 %v403, %v403
  %v468 = vpack.c.b16 %v404, %v404
  %v469 = vpack.c.b16 %v405, %v405
  %v470 = vpack.c.b16 %v406, %v406
  %v471 = vpack.c.b16 %v407, %v407
  %v472 = vpack.c.b16 %v408, %v408
  %v473 = vpack.c.b16 %v409, %v409
  %v474 = vpack.c.b16 %v410, %v410
  %v475 = vpack.c.b16 %v411, %v411
  %v476 = vpack.c.b16 %v412, %v412
  %v477 = vpack.c.b16 %v413, %v413
  %v478 = vpack.c.b16 %v414, %v414
  %v479 = vpack.c.b16 %v415, %v415
  %v480 = vpack.c.b16 %v416, %v416
  %v481 = vpack.c.b16 %v417, %v417
  %v482 = vpack.c.b16 %v418, %v418
  %v483 = vpack.c.b16 %v419, %v419
  %v484 = vpack.c.b16 %v420, %v420
  %v485 = vpack.c.b16 %v421, %v421
  %v486 = vpack.c.b16 %v422, %v422
  %v487 = vpack.c.b16 %v423, %v423
  %v488 = vpack.c.b16 %v424, %v424
  %v489 = vpack.c.b16 %v425, %v425
  %v490 = vpack.c.b16 %v426, %v426
  %v491 = vpack.c.b16 %v427, %v427
  %v492 = vpack.c.b16 %v428, %v428
  %v493 = vpack.c.b16 %v429, %v429
  %v494 = vpack.c.b16 %v430, %v430
  %v495 = vpack.c.b16 %v431, %v431
  %v496 = vpack.c.b16 %v432, %v432
  %v497 = vpack.c.b16 %v433, %v433
  %v498 = vpack.c.b16 %v434, %v434
  %563 = vst [vmem:[%s4] sm:$0xf] %v435
  %564 = vst [vmem:[%s4 + $0x4] sm:$0xf] %v436
  %565 = vst [vmem:[%s4 + $0x8] sm:$0xf] %v437
  %566 = vst [vmem:[%s4 + $0xc] sm:$0xf] %v438
  %567 = vst [vmem:[%s4 + $0x10] sm:$0xf] %v439
  %568 = vst [vmem:[%s4 + $0x14] sm:$0xf] %v440
  %569 = vst [vmem:[%s4 + $0x18] sm:$0xf] %v441
  %570 = vst [vmem:[%s4 + $0x1c] sm:$0xf] %v442
  %571 = vst [vmem:[%s4 + $0x20] sm:$0xf] %v443
  %572 = vst [vmem:[%s4 + $0x24] sm:$0xf] %v444
  %573 = vst [vmem:[%s4 + $0x28] sm:$0xf] %v445
  %574 = vst [vmem:[%s4 + $0x2c] sm:$0xf] %v446
  %575 = vst [vmem:[%s4 + $0x30] sm:$0xf] %v447
  %576 = vst [vmem:[%s4 + $0x34] sm:$0xf] %v448
  %577 = vst [vmem:[%s4 + $0x38] sm:$0xf] %v449
  %578 = vst [vmem:[%s4 + $0x3c] sm:$0xf] %v450
  %579 = vst [vmem:[%s4 + $0x40] sm:$0xf] %v451
  %580 = vst [vmem:[%s4 + $0x44] sm:$0xf] %v452
  %581 = vst [vmem:[%s4 + $0x48] sm:$0xf] %v453
  %582 = vst [vmem:[%s4 + $0x4c] sm:$0xf] %v454
  %583 = vst [vmem:[%s4 + $0x50] sm:$0xf] %v455
  %584 = vst [vmem:[%s4 + $0x54] sm:$0xf] %v456
  %585 = vst [vmem:[%s4 + $0x58] sm:$0xf] %v457
  %586 = vst [vmem:[%s4 + $0x5c] sm:$0xf] %v458
  %587 = vst [vmem:[%s4 + $0x60] sm:$0xf] %v459
  %588 = vst [vmem:[%s4 + $0x64] sm:$0xf] %v460
  %589 = vst [vmem:[%s4 + $0x68] sm:$0xf] %v461
  %590 = vst [vmem:[%s4 + $0x6c] sm:$0xf] %v462
  %591 = vst [vmem:[%s4 + $0x70] sm:$0xf] %v463
  %592 = vst [vmem:[%s4 + $0x74] sm:$0xf] %v464
  %593 = vst [vmem:[%s4 + $0x78] sm:$0xf] %v465
  %594 = vst [vmem:[%s4 + $0x7c] sm:$0xf] %v466
  %595 = vst [vmem:[%s4 + $0x80] sm:$0xf] %v467
  %596 = vst [vmem:[%s4 + $0x84] sm:$0xf] %v468
  %597 = vst [vmem:[%s4 + $0x88] sm:$0xf] %v469
  %598 = vst [vmem:[%s4 + $0x8c] sm:$0xf] %v470
  %599 = vst [vmem:[%s4 + $0x90] sm:$0xf] %v471
  %600 = vst [vmem:[%s4 + $0x94] sm:$0xf] %v472
  %601 = vst [vmem:[%s4 + $0x98] sm:$0xf] %v473
  %602 = vst [vmem:[%s4 + $0x9c] sm:$0xf] %v474
  %603 = vst [vmem:[%s4 + $0xa0] sm:$0xf] %v475
  %604 = vst [vmem:[%s4 + $0xa4] sm:$0xf] %v476
  %605 = vst [vmem:[%s4 + $0xa8] sm:$0xf] %v477
  %606 = vst [vmem:[%s4 + $0xac] sm:$0xf] %v478
  %607 = vst [vmem:[%s4 + $0xb0] sm:$0xf] %v479
  %608 = vst [vmem:[%s4 + $0xb4] sm:$0xf] %v480
  %609 = vst [vmem:[%s4 + $0xb8] sm:$0xf] %v481
  %610 = vst [vmem:[%s4 + $0xbc] sm:$0xf] %v482
  %611 = vst [vmem:[%s4 + $0xc0] sm:$0xf] %v483
  %612 = vst [vmem:[%s4 + $0xc4] sm:$0xf] %v484
  %613 = vst [vmem:[%s4 + $0xc8] sm:$0xf] %v485
  %614 = vst [vmem:[%s4 + $0xcc] sm:$0xf] %v486
  %615 = vst [vmem:[%s4 + $0xd0] sm:$0xf] %v487
  %616 = vst [vmem:[%s4 + $0xd4] sm:$0xf] %v488
  %617 = vst [vmem:[%s4 + $0xd8] sm:$0xf] %v489
  %618 = vst [vmem:[%s4 + $0xdc] sm:$0xf] %v490
  %619 = vst [vmem:[%s4 + $0xe0] sm:$0xf] %v491
  %620 = vst [vmem:[%s4 + $0xe4] sm:$0xf] %v492
  %621 = vst [vmem:[%s4 + $0xe8] sm:$0xf] %v493
  %622 = vst [vmem:[%s4 + $0xec] sm:$0xf] %v494
  %623 = vst [vmem:[%s4 + $0xf0] sm:$0xf] %v495
  %624 = vst [vmem:[%s4 + $0xf4] sm:$0xf] %v496
  %625 = vst [vmem:[%s4 + $0xf8] sm:$0xf] %v497
  %626 = vst [vmem:[%s4 + $0xfc] sm:$0xf] %v498
  // Predicated region
  $region18: #{bottleneck_forward.8} parent=0 // pred_check
    _
  $region19: #{bottleneck_forward.8} parent=0 // pred_check_branch
    %628 = sbr.rel (0) target = $region21
  $region20: #{bottleneck_forward.8} parent=0 // pred_region
    _
  $region21: #{bottleneck_forward.8} parent=0 // pred_fallthru
    _
  // Predicated region
  $region22: #{bottleneck_forward.8} parent=0 // pred_check
    _
  $region23: #{bottleneck_forward.8} parent=0 // pred_check_branch
    %630 = sbr.rel (0) target = $region25
  $region24: #{bottleneck_forward.8} parent=0 // pred_region
    _
  $region25: #{bottleneck_forward.8} parent=0 // pred_fallthru
    _

// kernel: bottleneck_forward.13
$region0: #{bottleneck_forward.13}
  #allocation0 [shape = 'u32[]', space=smem, size = 0x4, offset = 0x4, fixed_abs, tag = 'smem constant byte address 0x4 - core index']
  #allocation1 [shape = 'u32[144,128]{1,0:T(1,128)}', space=vmem, size = 0x12000, scoped, tag = 'internal scratch']
  %s0 = inlined_call_operand.vmem [shape: f32[512,128], index: 0, kind: input, shape index: {}]
  %s1 = inlined_call_operand.vmem [shape: f32[2,128], index: 1, kind: input, shape index: {}]
  %s2 = inlined_call_operand.vmem [shape: f32[1,128], index: 2, kind: input, shape index: {}]
  %s3 = inlined_call_operand.vmem [shape: f32[1,128], index: 3, kind: input, shape index: {}]
  %s4 = inlined_call_operand.vmem [shape: f32[512,128], index: 4, kind: input, shape index: {}]
  %s5 = inlined_call_operand.vmem [shape: f32[2,128], index: 5, kind: input, shape index: {}]
  %s6 = inlined_call_operand.vmem [shape: f32[1,128], index: 6, kind: input, shape index: {}]
  %s7 = inlined_call_operand.vmem [shape: f32[1,128], index: 7, kind: input, shape index: {}]
  %s8 = inlined_call_operand.vmem [shape: f32[512,128], index: 8, kind: output, shape index: {}]
  %s9 = sld [smem:[#allocation0]]
  $region42: #{bottleneck_forward.13} parent=0
    _
  %s11 = ssub.s32 1, %s9
  %s12 = scalar_select 0, %s11, %s9
  // Predicated region
  $region2: #{bottleneck_forward.13} parent=0 // pred_check
    _
  $region3: #{bottleneck_forward.13} parent=0 // pred_check_branch
    %14 = sbr.rel (0) target = $region5
  $region4: #{bottleneck_forward.13} parent=0 // pred_region
    _
  $region5: #{bottleneck_forward.13} parent=0 // pred_fallthru
    _
  // Predicated region
  $region6: #{bottleneck_forward.13} parent=0 // pred_check
    _
  $region7: #{bottleneck_forward.13} parent=0 // pred_check_branch
    %16 = sbr.rel (0) target = $region9
  $region8: #{bottleneck_forward.13} parent=0 // pred_region
    _
  $region9: #{bottleneck_forward.13} parent=0 // pred_fallthru
    _
  // Predicated region
  $region10: #{bottleneck_forward.13} parent=0 // pred_check
    _
  $region11: #{bottleneck_forward.13} parent=0 // pred_check_branch
    %18 = sbr.rel (0) target = $region13
  $region12: #{bottleneck_forward.13} parent=0 // pred_region
    _
  $region13: #{bottleneck_forward.13} parent=0 // pred_fallthru
    _
  // Predicated region
  $region14: #{bottleneck_forward.13} parent=0 // pred_check
    _
  $region15: #{bottleneck_forward.13} parent=0 // pred_check_branch
    %20 = sbr.rel (0) target = $region17
  $region16: #{bottleneck_forward.13} parent=0 // pred_region
    _
  $region17: #{bottleneck_forward.13} parent=0 // pred_fallthru
    _
  // Predicated region
  $region18: #{bottleneck_forward.13} parent=0 // pred_check
    _
  $region19: #{bottleneck_forward.13} parent=0 // pred_check_branch
    %22 = sbr.rel (0) target = $region21
  $region20: #{bottleneck_forward.13} parent=0 // pred_region
    _
  $region21: #{bottleneck_forward.13} parent=0 // pred_fallthru
    _
  // Predicated region
  $region22: #{bottleneck_forward.13} parent=0 // pred_check
    _
  $region23: #{bottleneck_forward.13} parent=0 // pred_check_branch
    %24 = sbr.rel (0) target = $region25
  $region24: #{bottleneck_forward.13} parent=0 // pred_region
    _
  $region25: #{bottleneck_forward.13} parent=0 // pred_fallthru
    _
  // Predicated region
  $region26: #{bottleneck_forward.13} parent=0 // pred_check
    _
  $region27: #{bottleneck_forward.13} parent=0 // pred_check_branch
    %26 = sbr.rel (0) target = $region29
  $region28: #{bottleneck_forward.13} parent=0 // pred_region
    _
  $region29: #{bottleneck_forward.13} parent=0 // pred_fallthru
    _
  // Predicated region
  $region30: #{bottleneck_forward.13} parent=0 // pred_check
    _
  $region31: #{bottleneck_forward.13} parent=0 // pred_check_branch
    %28 = sbr.rel (0) target = $region33
  $region32: #{bottleneck_forward.13} parent=0 // pred_region
    _
  $region33: #{bottleneck_forward.13} parent=0 // pred_fallthru
    _
  %v29 = vld [vmem:[%s1] sm:$0x3]
  %v30 = vld [vmem:[%s2] sm:$0x1]
  %v31 = vld [vmem:[%s3] sm:$0x1]
  %v32 = vmul.f32 %v29, 0.001953125
  %v33 = vmul.f32 %v32, %v32
  %v35 = vrot.slane %v33, 7
  %v37 = vsub.f32 %v32, %v35
  %v38 = vmax.f32 %v37, 0.0
  %v39 = vadd.f32 %v38, 1e-05
  %v40 = vrsqrt.pop %v39
  %v42 = vlaneseq
  %v43 = vshrl.u32 %v42, 7
  %v44 = vsub.s32 0, %v43
  %v45 = vrot.slane %v30, %v44
  %v47 = vmul.f32 %v40, %v45
  %v49 = vrot.slane %v47, 1
  %v51 = vmul.f32 %v32, %v49
  %v52 = vsub.f32 %v31, %v51
  %v53 = vld [vmem:[%s5] sm:$0x3]
  %v54 = vld [vmem:[%s6] sm:$0x1]
  %v55 = vld [vmem:[%s7] sm:$0x1]
  %v56 = vmul.f32 %v53, 0.001953125
  %v57 = vmul.f32 %v56, %v56
  %v59 = vrot.slane %v57, 7
  %v61 = vsub.f32 %v56, %v59
  %v62 = vmax.f32 %v61, 0.0
  %v63 = vadd.f32 %v62, 1e-05
  %v64 = vrsqrt.pop %v63
  %v66 = vlaneseq
  %v67 = vshrl.u32 %v66, 7
  %v68 = vsub.s32 0, %v67
  %v69 = vrot.slane %v54, %v68
  %v71 = vmul.f32 %v64, %v69
  %v73 = vrot.slane %v71, 1
  %v75 = vmul.f32 %v56, %v73
  %v76 = vsub.f32 %v55, %v75
  %v77 = vld [vmem:[%s0] sm:$0xff]
  %v78 = vld [vmem:[%s0 + $0x8] sm:$0xff]
  %v79 = vld [vmem:[%s0 + $0x10] sm:$0xff]
  %v80 = vld [vmem:[%s0 + $0x18] sm:$0xff]
  %v81 = vld [vmem:[%s0 + $0x20] sm:$0xff]
  %v82 = vld [vmem:[%s0 + $0x28] sm:$0xff]
  %v83 = vld [vmem:[%s0 + $0x30] sm:$0xff]
  %v84 = vld [vmem:[%s0 + $0x38] sm:$0xff]
  %v85 = vld [vmem:[%s0 + $0x40] sm:$0xff]
  %v86 = vld [vmem:[%s0 + $0x48] sm:$0xff]
  %v87 = vld [vmem:[%s0 + $0x50] sm:$0xff]
  %v88 = vld [vmem:[%s0 + $0x58] sm:$0xff]
  %v89 = vld [vmem:[%s0 + $0x60] sm:$0xff]
  %v90 = vld [vmem:[%s0 + $0x68] sm:$0xff]
  %v91 = vld [vmem:[%s0 + $0x70] sm:$0xff]
  %v92 = vld [vmem:[%s0 + $0x78] sm:$0xff]
  %v93 = vld [vmem:[%s0 + $0x80] sm:$0xff]
  %v94 = vld [vmem:[%s0 + $0x88] sm:$0xff]
  %v95 = vld [vmem:[%s0 + $0x90] sm:$0xff]
  %v96 = vld [vmem:[%s0 + $0x98] sm:$0xff]
  %v97 = vld [vmem:[%s0 + $0xa0] sm:$0xff]
  %v98 = vld [vmem:[%s0 + $0xa8] sm:$0xff]
  %v99 = vld [vmem:[%s0 + $0xb0] sm:$0xff]
  %v100 = vld [vmem:[%s0 + $0xb8] sm:$0xff]
  %v101 = vld [vmem:[%s0 + $0xc0] sm:$0xff]
  %v102 = vld [vmem:[%s0 + $0xc8] sm:$0xff]
  %v103 = vld [vmem:[%s0 + $0xd0] sm:$0xff]
  %v104 = vld [vmem:[%s0 + $0xd8] sm:$0xff]
  %v105 = vld [vmem:[%s0 + $0xe0] sm:$0xff]
  %v106 = vld [vmem:[%s0 + $0xe8] sm:$0xff]
  %v107 = vld [vmem:[%s0 + $0xf0] sm:$0xff]
  %v108 = vld [vmem:[%s0 + $0xf8] sm:$0xff]
  %v109 = vld [vmem:[%s0 + $0x100] sm:$0xff]
  %v110 = vld [vmem:[%s0 + $0x108] sm:$0xff]
  %v111 = vld [vmem:[%s0 + $0x110] sm:$0xff]
  %v112 = vld [vmem:[%s0 + $0x118] sm:$0xff]
  %v113 = vld [vmem:[%s0 + $0x120] sm:$0xff]
  %v114 = vld [vmem:[%s0 + $0x128] sm:$0xff]
  %v115 = vld [vmem:[%s0 + $0x130] sm:$0xff]
  %v116 = vld [vmem:[%s0 + $0x138] sm:$0xff]
  %v117 = vld [vmem:[%s0 + $0x140] sm:$0xff]
  %v118 = vld [vmem:[%s0 + $0x148] sm:$0xff]
  %v119 = vld [vmem:[%s0 + $0x150] sm:$0xff]
  %v120 = vld [vmem:[%s0 + $0x158] sm:$0xff]
  %v121 = vld [vmem:[%s0 + $0x160] sm:$0xff]
  %v122 = vld [vmem:[%s0 + $0x168] sm:$0xff]
  %v123 = vld [vmem:[%s0 + $0x170] sm:$0xff]
  %v124 = vld [vmem:[%s0 + $0x178] sm:$0xff]
  %v125 = vld [vmem:[%s0 + $0x180] sm:$0xff]
  %v126 = vld [vmem:[%s0 + $0x188] sm:$0xff]
  %v127 = vld [vmem:[%s0 + $0x190] sm:$0xff]
  %v128 = vld [vmem:[%s0 + $0x198] sm:$0xff]
  %v129 = vld [vmem:[%s0 + $0x1a0] sm:$0xff]
  %v130 = vld [vmem:[%s0 + $0x1a8] sm:$0xff]
  %v131 = vld [vmem:[%s0 + $0x1b0] sm:$0xff]
  %v132 = vld [vmem:[%s0 + $0x1b8] sm:$0xff]
  %v133 = vld [vmem:[%s0 + $0x1c0] sm:$0xff]
  %v134 = vld [vmem:[%s0 + $0x1c8] sm:$0xff]
  %v135 = vld [vmem:[%s0 + $0x1d0] sm:$0xff]
  %v136 = vld [vmem:[%s0 + $0x1d8] sm:$0xff]
  %v137 = vld [vmem:[%s0 + $0x1e0] sm:$0xff]
  %v138 = vld [vmem:[%s0 + $0x1e8] sm:$0xff]
  %v139 = vld [vmem:[%s0 + $0x1f0] sm:$0xff]
  %v140 = vld [vmem:[%s0 + $0x1f8] sm:$0xff]
  %v141 = vlaneseq
  %v142 = vshrl.u32 %v141, 7
  %v143 = vsub.s32 1, %v142
  %v144 = vrot.slane %v47, %v143
  %v145 = vmul.f32 %v77, %v144
  %v146 = vmul.f32 %v78, %v144
  %v147 = vmul.f32 %v79, %v144
  %v148 = vmul.f32 %v80, %v144
  %v149 = vmul.f32 %v81, %v144
  %v150 = vmul.f32 %v82, %v144
  %v151 = vmul.f32 %v83, %v144
  %v152 = vmul.f32 %v84, %v144
  %v153 = vmul.f32 %v85, %v144
  %v154 = vmul.f32 %v86, %v144
  %v155 = vmul.f32 %v87, %v144
  %v156 = vmul.f32 %v88, %v144
  %v157 = vmul.f32 %v89, %v144
  %v158 = vmul.f32 %v90, %v144
  %v159 = vmul.f32 %v91, %v144
  %v160 = vmul.f32 %v92, %v144
  %v161 = vmul.f32 %v93, %v144
  %v162 = vmul.f32 %v94, %v144
  %v163 = vmul.f32 %v95, %v144
  %v164 = vmul.f32 %v96, %v144
  %v165 = vmul.f32 %v97, %v144
  %v166 = vmul.f32 %v98, %v144
  %v167 = vmul.f32 %v99, %v144
  %v168 = vmul.f32 %v100, %v144
  %v169 = vmul.f32 %v101, %v144
  %v170 = vmul.f32 %v102, %v144
  %v171 = vmul.f32 %v103, %v144
  %v172 = vmul.f32 %v104, %v144
  %v173 = vmul.f32 %v105, %v144
  %v174 = vmul.f32 %v106, %v144
  %v175 = vmul.f32 %v107, %v144
  %v176 = vmul.f32 %v108, %v144
  %v177 = vmul.f32 %v109, %v144
  %v178 = vmul.f32 %v110, %v144
  %v179 = vmul.f32 %v111, %v144
  %v180 = vmul.f32 %v112, %v144
  %v181 = vmul.f32 %v113, %v144
  %v182 = vmul.f32 %v114, %v144
  %v183 = vmul.f32 %v115, %v144
  %v184 = vmul.f32 %v116, %v144
  %v185 = vmul.f32 %v117, %v144
  %v186 = vmul.f32 %v118, %v144
  %v187 = vmul.f32 %v119, %v144
  %v188 = vmul.f32 %v120, %v144
  %v189 = vmul.f32 %v121, %v144
  %v190 = vmul.f32 %v122, %v144
  %v191 = vmul.f32 %v123, %v144
  %v192 = vmul.f32 %v124, %v144
  %v193 = vmul.f32 %v125, %v144
  %v194 = vmul.f32 %v126, %v144
  %v195 = vmul.f32 %v127, %v144
  %v196 = vmul.f32 %v128, %v144
  %v197 = vmul.f32 %v129, %v144
  %v198 = vmul.f32 %v130, %v144
  %v199 = vmul.f32 %v131, %v144
  %v200 = vmul.f32 %v132, %v144
  %v201 = vmul.f32 %v133, %v144
  %v202 = vmul.f32 %v134, %v144
  %v203 = vmul.f32 %v135, %v144
  %v204 = vmul.f32 %v136, %v144
  %v205 = vmul.f32 %v137, %v144
  %v206 = vmul.f32 %v138, %v144
  %v207 = vmul.f32 %v139, %v144
  %v208 = vmul.f32 %v140, %v144
  %v210 = vlaneseq
  %v211 = vshrl.u32 %v210, 7
  %v212 = vsub.s32 0, %v211
  %v213 = vrot.slane %v52, %v212
  %v215 = vadd.f32 %v145, %v213
  %v216 = vadd.f32 %v146, %v213
  %v217 = vadd.f32 %v147, %v213
  %v218 = vadd.f32 %v148, %v213
  %v219 = vadd.f32 %v149, %v213
  %v220 = vadd.f32 %v150, %v213
  %v221 = vadd.f32 %v151, %v213
  %v222 = vadd.f32 %v152, %v213
  %v223 = vadd.f32 %v153, %v213
  %v224 = vadd.f32 %v154, %v213
  %v225 = vadd.f32 %v155, %v213
  %v226 = vadd.f32 %v156, %v213
  %v227 = vadd.f32 %v157, %v213
  %v228 = vadd.f32 %v158, %v213
  %v229 = vadd.f32 %v159, %v213
  %v230 = vadd.f32 %v160, %v213
  %v231 = vadd.f32 %v161, %v213
  %v232 = vadd.f32 %v162, %v213
  %v233 = vadd.f32 %v163, %v213
  %v234 = vadd.f32 %v164, %v213
  %v235 = vadd.f32 %v165, %v213
  %v236 = vadd.f32 %v166, %v213
  %v237 = vadd.f32 %v167, %v213
  %v238 = vadd.f32 %v168, %v213
  %v239 = vadd.f32 %v169, %v213
  %v240 = vadd.f32 %v170, %v213
  %v241 = vadd.f32 %v171, %v213
  %v242 = vadd.f32 %v172, %v213
  %v243 = vadd.f32 %v173, %v213
  %v244 = vadd.f32 %v174, %v213
  %v245 = vadd.f32 %v175, %v213
  %v246 = vadd.f32 %v176, %v213
  %v247 = vadd.f32 %v177, %v213
  %v248 = vadd.f32 %v178, %v213
  %v249 = vadd.f32 %v179, %v213
  %v250 = vadd.f32 %v180, %v213
  %v251 = vadd.f32 %v181, %v213
  %v252 = vadd.f32 %v182, %v213
  %v253 = vadd.f32 %v183, %v213
  %v254 = vadd.f32 %v184, %v213
  %v255 = vadd.f32 %v185, %v213
  %v256 = vadd.f32 %v186, %v213
  %v257 = vadd.f32 %v187, %v213
  %v258 = vadd.f32 %v188, %v213
  %v259 = vadd.f32 %v189, %v213
  %v260 = vadd.f32 %v190, %v213
  %v261 = vadd.f32 %v191, %v213
  %v262 = vadd.f32 %v192, %v213
  %v263 = vadd.f32 %v193, %v213
  %v264 = vadd.f32 %v194, %v213
  %v265 = vadd.f32 %v195, %v213
  %v266 = vadd.f32 %v196, %v213
  %v267 = vadd.f32 %v197, %v213
  %v268 = vadd.f32 %v198, %v213
  %v269 = vadd.f32 %v199, %v213
  %v270 = vadd.f32 %v200, %v213
  %v271 = vadd.f32 %v201, %v213
  %v272 = vadd.f32 %v202, %v213
  %v273 = vadd.f32 %v203, %v213
  %v274 = vadd.f32 %v204, %v213
  %v275 = vadd.f32 %v205, %v213
  %v276 = vadd.f32 %v206, %v213
  %v277 = vadd.f32 %v207, %v213
  %v278 = vadd.f32 %v208, %v213
  %v279 = vld [vmem:[%s4] sm:$0xff]
  %v280 = vld [vmem:[%s4 + $0x8] sm:$0xff]
  %v281 = vld [vmem:[%s4 + $0x10] sm:$0xff]
  %v282 = vld [vmem:[%s4 + $0x18] sm:$0xff]
  %v283 = vld [vmem:[%s4 + $0x20] sm:$0xff]
  %v284 = vld [vmem:[%s4 + $0x28] sm:$0xff]
  %v285 = vld [vmem:[%s4 + $0x30] sm:$0xff]
  %v286 = vld [vmem:[%s4 + $0x38] sm:$0xff]
  %v287 = vld [vmem:[%s4 + $0x40] sm:$0xff]
  %v288 = vld [vmem:[%s4 + $0x48] sm:$0xff]
  %v289 = vld [vmem:[%s4 + $0x50] sm:$0xff]
  %v290 = vld [vmem:[%s4 + $0x58] sm:$0xff]
  %v291 = vld [vmem:[%s4 + $0x60] sm:$0xff]
  %v292 = vld [vmem:[%s4 + $0x68] sm:$0xff]
  %v293 = vld [vmem:[%s4 + $0x70] sm:$0xff]
  %v294 = vld [vmem:[%s4 + $0x78] sm:$0xff]
  %v295 = vld [vmem:[%s4 + $0x80] sm:$0xff]
  %v296 = vld [vmem:[%s4 + $0x88] sm:$0xff]
  %v297 = vld [vmem:[%s4 + $0x90] sm:$0xff]
  %v298 = vld [vmem:[%s4 + $0x98] sm:$0xff]
  %v299 = vld [vmem:[%s4 + $0xa0] sm:$0xff]
  %v300 = vld [vmem:[%s4 + $0xa8] sm:$0xff]
  %v301 = vld [vmem:[%s4 + $0xb0] sm:$0xff]
  %v302 = vld [vmem:[%s4 + $0xb8] sm:$0xff]
  %v303 = vld [vmem:[%s4 + $0xc0] sm:$0xff]
  %v304 = vld [vmem:[%s4 + $0xc8] sm:$0xff]
  %v305 = vld [vmem:[%s4 + $0xd0] sm:$0xff]
  %v306 = vld [vmem:[%s4 + $0xd8] sm:$0xff]
  %v307 = vld [vmem:[%s4 + $0xe0] sm:$0xff]
  %v308 = vld [vmem:[%s4 + $0xe8] sm:$0xff]
  %v309 = vld [vmem:[%s4 + $0xf0] sm:$0xff]
  %v310 = vld [vmem:[%s4 + $0xf8] sm:$0xff]
  %v311 = vld [vmem:[%s4 + $0x100] sm:$0xff]
  %v312 = vld [vmem:[%s4 + $0x108] sm:$0xff]
  %v313 = vld [vmem:[%s4 + $0x110] sm:$0xff]
  %v314 = vld [vmem:[%s4 + $0x118] sm:$0xff]
  %v315 = vld [vmem:[%s4 + $0x120] sm:$0xff]
  %v316 = vld [vmem:[%s4 + $0x128] sm:$0xff]
  %v317 = vld [vmem:[%s4 + $0x130] sm:$0xff]
  %v318 = vld [vmem:[%s4 + $0x138] sm:$0xff]
  %v319 = vld [vmem:[%s4 + $0x140] sm:$0xff]
  %v320 = vld [vmem:[%s4 + $0x148] sm:$0xff]
  %v321 = vld [vmem:[%s4 + $0x150] sm:$0xff]
  %v322 = vld [vmem:[%s4 + $0x158] sm:$0xff]
  %v323 = vld [vmem:[%s4 + $0x160] sm:$0xff]
  %v324 = vld [vmem:[%s4 + $0x168] sm:$0xff]
  %v325 = vld [vmem:[%s4 + $0x170] sm:$0xff]
  %v326 = vld [vmem:[%s4 + $0x178] sm:$0xff]
  %v327 = vld [vmem:[%s4 + $0x180] sm:$0xff]
  %v328 = vld [vmem:[%s4 + $0x188] sm:$0xff]
  %v329 = vld [vmem:[%s4 + $0x190] sm:$0xff]
  %v330 = vld [vmem:[%s4 + $0x198] sm:$0xff]
  %v331 = vld [vmem:[%s4 + $0x1a0] sm:$0xff]
  %v332 = vld [vmem:[%s4 + $0x1a8] sm:$0xff]
  %v333 = vld [vmem:[%s4 + $0x1b0] sm:$0xff]
  %v334 = vld [vmem:[%s4 + $0x1b8] sm:$0xff]
  %v335 = vld [vmem:[%s4 + $0x1c0] sm:$0xff]
  %v336 = vld [vmem:[%s4 + $0x1c8] sm:$0xff]
  %v337 = vld [vmem:[%s4 + $0x1d0] sm:$0xff]
  %v338 = vld [vmem:[%s4 + $0x1d8] sm:$0xff]
  %v339 = vld [vmem:[%s4 + $0x1e0] sm:$0xff]
  %v340 = vld [vmem:[%s4 + $0x1e8] sm:$0xff]
  %v341 = vld [vmem:[%s4 + $0x1f0] sm:$0xff]
  %v342 = vld [vmem:[%s4 + $0x1f8] sm:$0xff]
  %v343 = vlaneseq
  %v344 = vshrl.u32 %v343, 7
  %v345 = vsub.s32 1, %v344
  %v346 = vrot.slane %v71, %v345
  %v347 = vmul.f32 %v279, %v346
  %v348 = vmul.f32 %v280, %v346
  %v349 = vmul.f32 %v281, %v346
  %v350 = vmul.f32 %v282, %v346
  %v351 = vmul.f32 %v283, %v346
  %v352 = vmul.f32 %v284, %v346
  %v353 = vmul.f32 %v285, %v346
  %v354 = vmul.f32 %v286, %v346
  %v355 = vmul.f32 %v287, %v346
  %v356 = vmul.f32 %v288, %v346
  %v357 = vmul.f32 %v289, %v346
  %v358 = vmul.f32 %v290, %v346
  %v359 = vmul.f32 %v291, %v346
  %v360 = vmul.f32 %v292, %v346
  %v361 = vmul.f32 %v293, %v346
  %v362 = vmul.f32 %v294, %v346
  %v363 = vmul.f32 %v295, %v346
  %v364 = vmul.f32 %v296, %v346
  %v365 = vmul.f32 %v297, %v346
  %v366 = vmul.f32 %v298, %v346
  %v367 = vmul.f32 %v299, %v346
  %v368 = vmul.f32 %v300, %v346
  %v369 = vmul.f32 %v301, %v346
  %v370 = vmul.f32 %v302, %v346
  %v371 = vmul.f32 %v303, %v346
  %v372 = vmul.f32 %v304, %v346
  %v373 = vmul.f32 %v305, %v346
  %v374 = vmul.f32 %v306, %v346
  %v375 = vmul.f32 %v307, %v346
  %v376 = vmul.f32 %v308, %v346
  %v377 = vmul.f32 %v309, %v346
  %v378 = vmul.f32 %v310, %v346
  %v379 = vmul.f32 %v311, %v346
  %v380 = vmul.f32 %v312, %v346
  %v381 = vmul.f32 %v313, %v346
  %v382 = vmul.f32 %v314, %v346
  %v383 = vmul.f32 %v315, %v346
  %v384 = vmul.f32 %v316, %v346
  %v385 = vmul.f32 %v317, %v346
  %v386 = vmul.f32 %v318, %v346
  %v387 = vmul.f32 %v319, %v346
  %v388 = vmul.f32 %v320, %v346
  %v389 = vmul.f32 %v321, %v346
  %v390 = vmul.f32 %v322, %v346
  %v391 = vmul.f32 %v323, %v346
  %v392 = vmul.f32 %v324, %v346
  %v393 = vmul.f32 %v325, %v346
  %v394 = vmul.f32 %v326, %v346
  %v395 = vmul.f32 %v327, %v346
  %v396 = vmul.f32 %v328, %v346
  %v397 = vmul.f32 %v329, %v346
  %v398 = vmul.f32 %v330, %v346
  %v399 = vmul.f32 %v331, %v346
  %v400 = vmul.f32 %v332, %v346
  %v401 = vmul.f32 %v333, %v346
  %v402 = vmul.f32 %v334, %v346
  %v403 = vmul.f32 %v335, %v346
  %v404 = vmul.f32 %v336, %v346
  %v405 = vmul.f32 %v337, %v346
  %v406 = vmul.f32 %v338, %v346
  %v407 = vmul.f32 %v339, %v346
  %v408 = vmul.f32 %v340, %v346
  %v409 = vmul.f32 %v341, %v346
  %v410 = vmul.f32 %v342, %v346
  %v412 = vlaneseq
  %v413 = vshrl.u32 %v412, 7
  %v414 = vsub.s32 0, %v413
  %v415 = vrot.slane %v76, %v414
  %v417 = vadd.f32 %v347, %v415
  %v418 = vadd.f32 %v348, %v415
  %v419 = vadd.f32 %v349, %v415
  %v420 = vadd.f32 %v350, %v415
  %v421 = vadd.f32 %v351, %v415
  %v422 = vadd.f32 %v352, %v415
  %v423 = vadd.f32 %v353, %v415
  %v424 = vadd.f32 %v354, %v415
  %v425 = vadd.f32 %v355, %v415
  %v426 = vadd.f32 %v356, %v415
  %v427 = vadd.f32 %v357, %v415
  %v428 = vadd.f32 %v358, %v415
  %v429 = vadd.f32 %v359, %v415
  %v430 = vadd.f32 %v360, %v415
  %v431 = vadd.f32 %v361, %v415
  %v432 = vadd.f32 %v362, %v415
  %v433 = vadd.f32 %v363, %v415
  %v434 = vadd.f32 %v364, %v415
  %v435 = vadd.f32 %v365, %v415
  %v436 = vadd.f32 %v366, %v415
  %v437 = vadd.f32 %v367, %v415
  %v438 = vadd.f32 %v368, %v415
  %v439 = vadd.f32 %v369, %v415
  %v440 = vadd.f32 %v370, %v415
  %v441 = vadd.f32 %v371, %v415
  %v442 = vadd.f32 %v372, %v415
  %v443 = vadd.f32 %v373, %v415
  %v444 = vadd.f32 %v374, %v415
  %v445 = vadd.f32 %v375, %v415
  %v446 = vadd.f32 %v376, %v415
  %v447 = vadd.f32 %v377, %v415
  %v448 = vadd.f32 %v378, %v415
  %v449 = vadd.f32 %v379, %v415
  %v450 = vadd.f32 %v380, %v415
  %v451 = vadd.f32 %v381, %v415
  %v452 = vadd.f32 %v382, %v415
  %v453 = vadd.f32 %v383, %v415
  %v454 = vadd.f32 %v384, %v415
  %v455 = vadd.f32 %v385, %v415
  %v456 = vadd.f32 %v386, %v415
  %v457 = vadd.f32 %v387, %v415
  %v458 = vadd.f32 %v388, %v415
  %v459 = vadd.f32 %v389, %v415
  %v460 = vadd.f32 %v390, %v415
  %v461 = vadd.f32 %v391, %v415
  %v462 = vadd.f32 %v392, %v415
  %v463 = vadd.f32 %v393, %v415
  %v464 = vadd.f32 %v394, %v415
  %v465 = vadd.f32 %v395, %v415
  %v466 = vadd.f32 %v396, %v415
  %v467 = vadd.f32 %v397, %v415
  %v468 = vadd.f32 %v398, %v415
  %v469 = vadd.f32 %v399, %v415
  %v470 = vadd.f32 %v400, %v415
  %v471 = vadd.f32 %v401, %v415
  %v472 = vadd.f32 %v402, %v415
  %v473 = vadd.f32 %v403, %v415
  %v474 = vadd.f32 %v404, %v415
  %v475 = vadd.f32 %v405, %v415
  %v476 = vadd.f32 %v406, %v415
  %v477 = vadd.f32 %v407, %v415
  %v478 = vadd.f32 %v408, %v415
  %v479 = vadd.f32 %v409, %v415
  %v480 = vadd.f32 %v410, %v415
  %v481 = vadd.f32 %v215, %v417
  %v482 = vadd.f32 %v216, %v418
  %v483 = vadd.f32 %v217, %v419
  %v484 = vadd.f32 %v218, %v420
  %v485 = vadd.f32 %v219, %v421
  %v486 = vadd.f32 %v220, %v422
  %v487 = vadd.f32 %v221, %v423
  %v488 = vadd.f32 %v222, %v424
  %v489 = vadd.f32 %v223, %v425
  %v490 = vadd.f32 %v224, %v426
  %v491 = vadd.f32 %v225, %v427
  %v492 = vadd.f32 %v226, %v428
  %v493 = vadd.f32 %v227, %v429
  %v494 = vadd.f32 %v228, %v430
  %v495 = vadd.f32 %v229, %v431
  %v496 = vadd.f32 %v230, %v432
  %v497 = vadd.f32 %v231, %v433
  %v498 = vadd.f32 %v232, %v434
  %v499 = vadd.f32 %v233, %v435
  %v500 = vadd.f32 %v234, %v436
  %v501 = vadd.f32 %v235, %v437
  %v502 = vadd.f32 %v236, %v438
  %v503 = vadd.f32 %v237, %v439
  %v504 = vadd.f32 %v238, %v440
  %v505 = vadd.f32 %v239, %v441
  %v506 = vadd.f32 %v240, %v442
  %v507 = vadd.f32 %v241, %v443
  %v508 = vadd.f32 %v242, %v444
  %v509 = vadd.f32 %v243, %v445
  %v510 = vadd.f32 %v244, %v446
  %v511 = vadd.f32 %v245, %v447
  %v512 = vadd.f32 %v246, %v448
  %v513 = vadd.f32 %v247, %v449
  %v514 = vadd.f32 %v248, %v450
  %v515 = vadd.f32 %v249, %v451
  %v516 = vadd.f32 %v250, %v452
  %v517 = vadd.f32 %v251, %v453
  %v518 = vadd.f32 %v252, %v454
  %v519 = vadd.f32 %v253, %v455
  %v520 = vadd.f32 %v254, %v456
  %v521 = vadd.f32 %v255, %v457
  %v522 = vadd.f32 %v256, %v458
  %v523 = vadd.f32 %v257, %v459
  %v524 = vadd.f32 %v258, %v460
  %v525 = vadd.f32 %v259, %v461
  %v526 = vadd.f32 %v260, %v462
  %v527 = vadd.f32 %v261, %v463
  %v528 = vadd.f32 %v262, %v464
  %v529 = vadd.f32 %v263, %v465
  %v530 = vadd.f32 %v264, %v466
  %v531 = vadd.f32 %v265, %v467
  %v532 = vadd.f32 %v266, %v468
  %v533 = vadd.f32 %v267, %v469
  %v534 = vadd.f32 %v268, %v470
  %v535 = vadd.f32 %v269, %v471
  %v536 = vadd.f32 %v270, %v472
  %v537 = vadd.f32 %v271, %v473
  %v538 = vadd.f32 %v272, %v474
  %v539 = vadd.f32 %v273, %v475
  %v540 = vadd.f32 %v274, %v476
  %v541 = vadd.f32 %v275, %v477
  %v542 = vadd.f32 %v276, %v478
  %v543 = vadd.f32 %v277, %v479
  %v544 = vadd.f32 %v278, %v480
  %v545 = vmax.f32 %v481, 0.0
  %v546 = vmax.f32 %v482, 0.0
  %v547 = vmax.f32 %v483, 0.0
  %v548 = vmax.f32 %v484, 0.0
  %v549 = vmax.f32 %v485, 0.0
  %v550 = vmax.f32 %v486, 0.0
  %v551 = vmax.f32 %v487, 0.0
  %v552 = vmax.f32 %v488, 0.0
  %v553 = vmax.f32 %v489, 0.0
  %v554 = vmax.f32 %v490, 0.0
  %v555 = vmax.f32 %v491, 0.0
  %v556 = vmax.f32 %v492, 0.0
  %v557 = vmax.f32 %v493, 0.0
  %v558 = vmax.f32 %v494, 0.0
  %v559 = vmax.f32 %v495, 0.0
  %v560 = vmax.f32 %v496, 0.0
  %v561 = vmax.f32 %v497, 0.0
  %v562 = vmax.f32 %v498, 0.0
  %v563 = vmax.f32 %v499, 0.0
  %v564 = vmax.f32 %v500, 0.0
  %v565 = vmax.f32 %v501, 0.0
  %v566 = vmax.f32 %v502, 0.0
  %v567 = vmax.f32 %v503, 0.0
  %v568 = vmax.f32 %v504, 0.0
  %v569 = vmax.f32 %v505, 0.0
  %v570 = vmax.f32 %v506, 0.0
  %v571 = vmax.f32 %v507, 0.0
  %v572 = vmax.f32 %v508, 0.0
  %v573 = vmax.f32 %v509, 0.0
  %v574 = vmax.f32 %v510, 0.0
  %v575 = vmax.f32 %v511, 0.0
  %v576 = vmax.f32 %v512, 0.0
  %v577 = vmax.f32 %v513, 0.0
  %v578 = vmax.f32 %v514, 0.0
  %v579 = vmax.f32 %v515, 0.0
  %v580 = vmax.f32 %v516, 0.0
  %v581 = vmax.f32 %v517, 0.0
  %v582 = vmax.f32 %v518, 0.0
  %v583 = vmax.f32 %v519, 0.0
  %v584 = vmax.f32 %v520, 0.0
  %v585 = vmax.f32 %v521, 0.0
  %v586 = vmax.f32 %v522, 0.0
  %v587 = vmax.f32 %v523, 0.0
  %v588 = vmax.f32 %v524, 0.0
  %v589 = vmax.f32 %v525, 0.0
  %v590 = vmax.f32 %v526, 0.0
  %v591 = vmax.f32 %v527, 0.0
  %v592 = vmax.f32 %v528, 0.0
  %v593 = vmax.f32 %v529, 0.0
  %v594 = vmax.f32 %v530, 0.0
  %v595 = vmax.f32 %v531, 0.0
  %v596 = vmax.f32 %v532, 0.0
  %v597 = vmax.f32 %v533, 0.0
  %v598 = vmax.f32 %v534, 0.0
  %v599 = vmax.f32 %v535, 0.0
  %v600 = vmax.f32 %v536, 0.0
  %v601 = vmax.f32 %v537, 0.0
  %v602 = vmax.f32 %v538, 0.0
  %v603 = vmax.f32 %v539, 0.0
  %v604 = vmax.f32 %v540, 0.0
  %v605 = vmax.f32 %v541, 0.0
  %v606 = vmax.f32 %v542, 0.0
  %v607 = vmax.f32 %v543, 0.0
  %v608 = vmax.f32 %v544, 0.0
  %609 = vst [vmem:[%s8] sm:$0xff] %v545
  %610 = vst [vmem:[%s8 + $0x8] sm:$0xff] %v546
  %611 = vst [vmem:[%s8 + $0x10] sm:$0xff] %v547
  %612 = vst [vmem:[%s8 + $0x18] sm:$0xff] %v548
  %613 = vst [vmem:[%s8 + $0x20] sm:$0xff] %v549
  %614 = vst [vmem:[%s8 + $0x28] sm:$0xff] %v550
  %615 = vst [vmem:[%s8 + $0x30] sm:$0xff] %v551
  %616 = vst [vmem:[%s8 + $0x38] sm:$0xff] %v552
  %617 = vst [vmem:[%s8 + $0x40] sm:$0xff] %v553
  %618 = vst [vmem:[%s8 + $0x48] sm:$0xff] %v554
  %619 = vst [vmem:[%s8 + $0x50] sm:$0xff] %v555
  %620 = vst [vmem:[%s8 + $0x58] sm:$0xff] %v556
  %621 = vst [vmem:[%s8 + $0x60] sm:$0xff] %v557
  %622 = vst [vmem:[%s8 + $0x68] sm:$0xff] %v558
  %623 = vst [vmem:[%s8 + $0x70] sm:$0xff] %v559
  %624 = vst [vmem:[%s8 + $0x78] sm:$0xff] %v560
  %625 = vst [vmem:[%s8 + $0x80] sm:$0xff] %v561
  %626 = vst [vmem:[%s8 + $0x88] sm:$0xff] %v562
  %627 = vst [vmem:[%s8 + $0x90] sm:$0xff] %v563
  %628 = vst [vmem:[%s8 + $0x98] sm:$0xff] %v564
  %629 = vst [vmem:[%s8 + $0xa0] sm:$0xff] %v565
  %630 = vst [vmem:[%s8 + $0xa8] sm:$0xff] %v566
  %631 = vst [vmem:[%s8 + $0xb0] sm:$0xff] %v567
  %632 = vst [vmem:[%s8 + $0xb8] sm:$0xff] %v568
  %633 = vst [vmem:[%s8 + $0xc0] sm:$0xff] %v569
  %634 = vst [vmem:[%s8 + $0xc8] sm:$0xff] %v570
  %635 = vst [vmem:[%s8 + $0xd0] sm:$0xff] %v571
  %636 = vst [vmem:[%s8 + $0xd8] sm:$0xff] %v572
  %637 = vst [vmem:[%s8 + $0xe0] sm:$0xff] %v573
  %638 = vst [vmem:[%s8 + $0xe8] sm:$0xff] %v574
  %639 = vst [vmem:[%s8 + $0xf0] sm:$0xff] %v575
  %640 = vst [vmem:[%s8 + $0xf8] sm:$0xff] %v576
  %641 = vst [vmem:[%s8 + $0x100] sm:$0xff] %v577
  %642 = vst [vmem:[%s8 + $0x108] sm:$0xff] %v578
  %643 = vst [vmem:[%s8 + $0x110] sm:$0xff] %v579
  %644 = vst [vmem:[%s8 + $0x118] sm:$0xff] %v580
  %645 = vst [vmem:[%s8 + $0x120] sm:$0xff] %v581
  %646 = vst [vmem:[%s8 + $0x128] sm:$0xff] %v582
  %647 = vst [vmem:[%s8 + $0x130] sm:$0xff] %v583
  %648 = vst [vmem:[%s8 + $0x138] sm:$0xff] %v584
  %649 = vst [vmem:[%s8 + $0x140] sm:$0xff] %v585
  %650 = vst [vmem:[%s8 + $0x148] sm:$0xff] %v586
  %651 = vst [vmem:[%s8 + $0x150] sm:$0xff] %v587
  %652 = vst [vmem:[%s8 + $0x158] sm:$0xff] %v588
  %653 = vst [vmem:[%s8 + $0x160] sm:$0xff] %v589
  %654 = vst [vmem:[%s8 + $0x168] sm:$0xff] %v590
  %655 = vst [vmem:[%s8 + $0x170] sm:$0xff] %v591
  %656 = vst [vmem:[%s8 + $0x178] sm:$0xff] %v592
  %657 = vst [vmem:[%s8 + $0x180] sm:$0xff] %v593
  %658 = vst [vmem:[%s8 + $0x188] sm:$0xff] %v594
  %659 = vst [vmem:[%s8 + $0x190] sm:$0xff] %v595
  %660 = vst [vmem:[%s8 + $0x198] sm:$0xff] %v596
  %661 = vst [vmem:[%s8 + $0x1a0] sm:$0xff] %v597
  %662 = vst [vmem:[%s8 + $0x1a8] sm:$0xff] %v598
  %663 = vst [vmem:[%s8 + $0x1b0] sm:$0xff] %v599
  %664 = vst [vmem:[%s8 + $0x1b8] sm:$0xff] %v600
  %665 = vst [vmem:[%s8 + $0x1c0] sm:$0xff] %v601
  %666 = vst [vmem:[%s8 + $0x1c8] sm:$0xff] %v602
  %667 = vst [vmem:[%s8 + $0x1d0] sm:$0xff] %v603
  %668 = vst [vmem:[%s8 + $0x1d8] sm:$0xff] %v604
  %669 = vst [vmem:[%s8 + $0x1e0] sm:$0xff] %v605
  %670 = vst [vmem:[%s8 + $0x1e8] sm:$0xff] %v606
  %671 = vst [vmem:[%s8 + $0x1f0] sm:$0xff] %v607
  %672 = vst [vmem:[%s8 + $0x1f8] sm:$0xff] %v608
  // Predicated region
  $region34: #{bottleneck_forward.13} parent=0 // pred_check
    _
  $region35: #{bottleneck_forward.13} parent=0 // pred_check_branch
    %674 = sbr.rel (0) target = $region37
  $region36: #{bottleneck_forward.13} parent=0 // pred_region
    _
  $region37: #{bottleneck_forward.13} parent=0 // pred_fallthru
    _
  // Predicated region
  $region38: #{bottleneck_forward.13} parent=0 // pred_check
    _
  $region39: #{bottleneck_forward.13} parent=0 // pred_check_branch
    %676 = sbr.rel (0) target = $region41
  $region40: #{bottleneck_forward.13} parent=0 // pred_region
    _
  $region41: #{bottleneck_forward.13} parent=0 // pred_fallthru
    _

// kernel: bottleneck_forward.9
$region0: #{bottleneck_forward.9}
  #allocation0 [shape = 'u32[]', space=smem, size = 0x4, offset = 0x4, fixed_abs, tag = 'smem constant byte address 0x4 - core index']
  #allocation1 [shape = 'u32[144,128]{1,0:T(1,128)}', space=vmem, size = 0x12000, scoped, tag = 'internal scratch']
  %s0 = inlined_call_operand.vmem [shape: bf16[2,18,18,128], index: 0, kind: input, shape index: {}]
  %s1 = inlined_call_operand.vmem [shape: bf16[9,128,128], index: 1, kind: input, shape index: {}]
  %s2 = inlined_call_operand.vmem [shape: f32[2,16,16,128], index: 2, kind: output, shape index: {0}]
  %s3 = inlined_call_operand.vmem [shape: f32[2,2,128], index: 3, kind: output, shape index: {1}]
  %4 = xla_tuple %s2, %s3
  %s5 = sld [smem:[#allocation0]]
  $region53: #{bottleneck_forward.9} parent=0
    _
  %s7 = ssub.s32 1, %s5
  %s8 = scalar_select 0, %s7, %s5
  loop: start=0, step=1, limit=6
  $region2: #{bottleneck_forward.9} parent=0 // loop_pre_header
    _
  $region3: #{bottleneck_forward.9} parent=0 // loop_header
    %s10 = sphi 0, %s14
    %p11 = scmp.ge.s32.totalorder %s10, 6
    %s17 = sphi 0, %s29
    %s18 = sphi 0, %s25
    %s19 = sphi 0, %s17
    %s20 = sphi 0, %s18
    %s21 = sphi 0, %s19
    %s22 = sphi 0, %s20
    %s32 = sphi 0, %s34
    %s35 = sphi 0, %s32
    %s36 = sphi 0, %s35
    %s52 = sphi 0, %s36
    %s56 = sphi 0, %s56
    %s58 = sphi 0, %s56
    %s59 = sphi 0, %s58
    %s73 = sphi 0, %s59
    %s81 = sphi 0, %s83
    %s84 = sphi 0, %s81
    %s85 = sphi 0, %s84
    %s101 = sphi 0, %s85
    %s107 = sphi 0, %s109
    %s110 = sphi 0, %s107
    %s111 = sphi 0, %s110
    %s127 = sphi 0, %s111
  $region4: #{bottleneck_forward.9} parent=0 // loop_header_branch
    %13 = sbr.rel (%p11) target = $region8
  $region5: #{bottleneck_forward.9} parent=0 // loop_body
    %s15 = ssub.s32 %s10, 1
    %s16 = ssub.s32 %s10, 2
    %s23 = sadd.s32 1, %s18
    %p24 = scmp.ge.s32.totalorder %s23, 2
    %s25 = scalar_select %p24, 0, %s23
    %s26 = sadd.s32 1, %s17
    %s27 = scalar_select %p24, %s26, %s17
    %p28 = scmp.ge.s32.totalorder %s27, 2
    %s29 = scalar_select %p28, 0, %s27
    %s30 = ssub.s32 %s17, %s29
    %p31 = scmp.eq.s32.totalorder %s30, 0
    %s33 = sadd.s32 %s32, 1
    %s34 = scalar_select %p31, %s32, %s33
    %p37 = pneg %p31
    %p38 = scmp.eq.s32.totalorder %s10, 3
    %p39 = por %p37, %p38
    %p40 = scmp.ne.s32.totalorder %s32, %s35
    %p41 = scmp.eq.s32.totalorder %s10, 0
    %p42 = por %p40, %p41
    %p43 = scmp.ne.s32.totalorder %s32, %s35
    %p44 = scmp.eq.s32.totalorder %s15, 3
    %p45 = por %p43, %p44
    %p46 = scmp.ne.s32.totalorder %s35, %s36
    %p47 = scmp.eq.s32.totalorder %s15, 0
    %p48 = por %p46, %p47
    %p49 = scmp.ne.s32.totalorder %s35, %s36
    %p50 = scmp.eq.s32.totalorder %s16, 3
    %p51 = por %p49, %p50
    %p53 = scmp.ne.s32.totalorder %s36, %s52
    %p54 = scmp.eq.s32.totalorder %s16, 0
    %p55 = por %p53, %p54
    %s57 = sadd.s32 %s56, 1
    %p60 = scmp.eq.s32.totalorder %s10, 3
    %p61 = scmp.ne.s32.totalorder %s56, %s58
    %p62 = scmp.eq.s32.totalorder %s10, 0
    %p63 = por %p61, %p62
    %p64 = scmp.ne.s32.totalorder %s56, %s58
    %p65 = scmp.eq.s32.totalorder %s15, 3
    %p66 = por %p64, %p65
    %p67 = scmp.ne.s32.totalorder %s58, %s59
    %p68 = scmp.eq.s32.totalorder %s15, 0
    %p69 = por %p67, %p68
    %p70 = scmp.ne.s32.totalorder %s58, %s59
    %p71 = scmp.eq.s32.totalorder %s16, 3
    %p72 = por %p70, %p71
    %p74 = scmp.ne.s32.totalorder %s59, %s73
    %p75 = scmp.eq.s32.totalorder %s16, 0
    %p76 = por %p74, %p75
    %s77 = ssub.s32 %s17, %s29
    %s78 = ssub.s32 %s18, %s25
    %s79 = sor.u32 %s77, %s78
    %p80 = scmp.eq.s32.totalorder %s79, 0
    %s82 = sadd.s32 %s81, 1
    %s83 = scalar_select %p80, %s81, %s82
    %p86 = pneg %p80
    %p87 = scmp.eq.s32.totalorder %s10, 3
    %p88 = por %p86, %p87
    %p89 = scmp.ne.s32.totalorder %s81, %s84
    %p90 = scmp.eq.s32.totalorder %s10, 0
    %p91 = por %p89, %p90
    %p92 = scmp.ne.s32.totalorder %s81, %s84
    %p93 = scmp.eq.s32.totalorder %s15, 3
    %p94 = por %p92, %p93
    %p95 = scmp.ne.s32.totalorder %s84, %s85
    %p96 = scmp.eq.s32.totalorder %s15, 0
    %p97 = por %p95, %p96
    %p98 = scmp.ne.s32.totalorder %s84, %s85
    %p99 = scmp.eq.s32.totalorder %s16, 3
    %p100 = por %p98, %p99
    %p102 = scmp.ne.s32.totalorder %s85, %s101
    %p103 = scmp.eq.s32.totalorder %s16, 0
    %p104 = por %p102, %p103
    %s105 = ssub.s32 %s17, %s29
    %p106 = scmp.eq.s32.totalorder %s105, 0
    %s108 = sadd.s32 %s107, 1
    %s109 = scalar_select %p106, %s107, %s108
    %p112 = pneg %p106
    %p113 = scmp.eq.s32.totalorder %s10, 3
    %p114 = por %p112, %p113
    %p115 = scmp.ne.s32.totalorder %s107, %s110
    %p116 = scmp.eq.s32.totalorder %s10, 0
    %p117 = por %p115, %p116
    %p118 = scmp.ne.s32.totalorder %s107, %s110
    %p119 = scmp.eq.s32.totalorder %s15, 3
    %p120 = por %p118, %p119
    %p121 = scmp.ne.s32.totalorder %s110, %s111
    %p122 = scmp.eq.s32.totalorder %s15, 0
    %p123 = por %p121, %p122
    %p124 = scmp.ne.s32.totalorder %s110, %s111
    %p125 = scmp.eq.s32.totalorder %s16, 3
    %p126 = por %p124, %p125
    %p128 = scmp.ne.s32.totalorder %s111, %s127
    %p129 = scmp.eq.s32.totalorder %s16, 0
    %p130 = por %p128, %p129
    %p131 = scmp.le.s32.totalorder 1, %s10
    %p132 = scmp.lt.s32.totalorder %s10, 5
    %p133 = pnand %p131, %p132
    %p134 = pneg %p133
    // Predicated region
    $region9: #{bottleneck_forward.9} parent=5 // pred_check
      _
    $region10: #{bottleneck_forward.9} parent=5 // pred_check_branch
      %136 = sbr.rel (%p133) target = $region12
    $region11: #{bottleneck_forward.9} parent=5 // pred_region
      %s137 = ssub.s32 %s10, 1
      // Predicated region
      $region13: #{bottleneck_forward.9} parent=11 // pred_check
        %p138 = pneg %p69
      $region14: #{bottleneck_forward.9} parent=11 // pred_check_branch
        %140 = sbr.rel (%p138) target = $region16
      $region15: #{bottleneck_forward.9} parent=11 // pred_region
        _
      $region16: #{bottleneck_forward.9} parent=11 // pred_fallthru
        _
    $region12: #{bottleneck_forward.9} parent=5 // pred_fallthru
      _
    %p141 = scmp.lt.s32.totalorder %s10, 4
    // Predicated region
    $region17: #{bottleneck_forward.9} parent=5 // pred_check
      %p142 = pneg %p141
    $region18: #{bottleneck_forward.9} parent=5 // pred_check_branch
      %144 = sbr.rel (%p142) target = $region20
    $region19: #{bottleneck_forward.9} parent=5 // pred_region
      // Predicated region
      $region21: #{bottleneck_forward.9} parent=19 // pred_check
        %p145 = pneg %p42
      $region22: #{bottleneck_forward.9} parent=19 // pred_check_branch
        %147 = sbr.rel (%p145) target = $region24
      $region23: #{bottleneck_forward.9} parent=19 // pred_region
        %p148 = scmp.lt.s32.totalorder %s17, 1
        %s149 = scalar_select %p148, %s17, 1
        %s150 = smul.addr %s149, 54
        %s151 = smul.addr %s150, 4
        %s152 = scalar_lea.vmem %s0, %s151
      $region24: #{bottleneck_forward.9} parent=19 // pred_fallthru
        _
    $region20: #{bottleneck_forward.9} parent=5 // pred_fallthru
      _
    %p153 = scmp.le.s32.totalorder 1, %s10
    %p154 = scmp.lt.s32.totalorder %s10, 5
    %p155 = pnand %p153, %p154
    %p156 = pneg %p155
    // Predicated region
    $region25: #{bottleneck_forward.9} parent=5 // pred_check
      _
    $region26: #{bottleneck_forward.9} parent=5 // pred_check_branch
      %158 = sbr.rel (%p155) target = $region28
    $region27: #{bottleneck_forward.9} parent=5 // pred_region
      %s159 = ssub.s32 %s10, 1
      %p160 = scmp.lt.s32.totalorder %s19, 1
      %s161 = scalar_select %p160, %s19, 1
      %s162 = smul.addr %s161, 54
      %s163 = smul.addr %s162, 4
      %s164 = scalar_lea.vmem %s0, %s163
      %p165 = pneg %p48
      %p166 = pneg %p45
      %p167 = pneg %p69
      %p168 = pneg %p66
      %p169 = pneg %p97
      %p170 = pneg %p94
      %s171 = smul.u32 8, %s20
      %p172 = scmp.lt.s32.totalorder %s19, 1
      %s173 = scalar_select %p172, %s19, 1
      %p174 = scmp.lt.s32.totalorder %s171, 15
      %s175 = scalar_select %p174, %s171, 15
      %s176 = smul.addr %s175, 2
      %s177 = smul.addr %s173, 32
      %s178 = sadd.s32 %s176, %s177
      %s179 = smul.addr %s178, 8
      %s180 = scalar_lea.vmem %s2, %s179
      %p181 = pneg %p123
      %p182 = pneg %p120
      %p183 = scmp.lt.s32.totalorder %s19, 1
      %s184 = scalar_select %p183, %s19, 1
      %s185 = smul.addr %s184, 2
      %s186 = scalar_lea.vmem %s3, %s185
      %p187 = scmp.lt.s32.totalorder %s19, 1
      %s188 = scalar_select %p187, %s19, 1
      %s189 = smul.addr %s188, 54
      %s190 = smul.addr %s189, 4
      %s191 = scalar_lea.vmem %s0, %s190
      %s192 = smul.u32 8, %s20
      %p193 = scmp.lt.s32.totalorder %s19, 1
      %s194 = scalar_select %p193, %s19, 1
      %p195 = scmp.lt.s32.totalorder %s192, 15
      %s196 = scalar_select %p195, %s192, 15
      %s197 = smul.addr %s196, 2
      %s198 = smul.addr %s194, 32
      %s199 = sadd.s32 %s197, %s198
      %s200 = smul.addr %s199, 8
      %s201 = scalar_lea.vmem %s2, %s200
      %s202 = smul.u32 8, %s20
      %p203 = scmp.lt.s32.totalorder %s19, 1
      %s204 = scalar_select %p203, %s19, 1
      %s205 = smul.addr %s204, 2
      %s206 = scalar_lea.vmem %s3, %s205
      %p208 = scmp.eq.s32.totalorder %s20, 0
      // Predicated region
      $region29: #{bottleneck_forward.9} parent=27 // pred_check
        %p209 = pneg %p208
      $region30: #{bottleneck_forward.9} parent=27 // pred_check_branch
        %211 = sbr.rel (%p209) target = $region32
      $region31: #{bottleneck_forward.9} parent=27 // pred_region
        %212 = vst [vmem:[%s206] sm:$0x3] 0.0
      $region32: #{bottleneck_forward.9} parent=27 // pred_fallthru
        _
      %s213 = smul.u32 %s20, 8
      %s214 = smul.u32 %s213, 3
      %s215 = smul.addr %s214, 4
      %s216 = scalar_lea.vmem %s191, %s215
      %v217 = vld [vmem:[%s216] sm:$0xf]
      %v218 = vld [vmem:[%s216 + $0x4] sm:$0xf]
      %v219 = vld [vmem:[%s216 + $0xc] sm:$0xf]
      %v220 = vld [vmem:[%s216 + $0x10] sm:$0xf]
      %v221 = vld [vmem:[%s216 + $0x18] sm:$0xf]
      %v222 = vld [vmem:[%s216 + $0x1c] sm:$0xf]
      %v223 = vld [vmem:[%s216 + $0x24] sm:$0xf]
      %v224 = vld [vmem:[%s216 + $0x28] sm:$0xf]
      %v225 = vld [vmem:[%s216 + $0x30] sm:$0xf]
      %v226 = vld [vmem:[%s216 + $0x34] sm:$0xf]
      %v227 = vld [vmem:[%s216 + $0x3c] sm:$0xf]
      %v228 = vld [vmem:[%s216 + $0x40] sm:$0xf]
      %v229 = vld [vmem:[%s216 + $0x48] sm:$0xf]
      %v230 = vld [vmem:[%s216 + $0x4c] sm:$0xf]
      %v231 = vld [vmem:[%s216 + $0x54] sm:$0xf]
      %v232 = vld [vmem:[%s216 + $0x58] sm:$0xf]
      %v233 = vld [vmem:[%s1] sm:$0xf]
      %v234 = vld [vmem:[%s1 + $0x4] sm:$0xf]
      %v235 = vld [vmem:[%s1 + $0x8] sm:$0xf]
      %v236 = vld [vmem:[%s1 + $0xc] sm:$0xf]
      %v237 = vld [vmem:[%s1 + $0x10] sm:$0xf]
      %v238 = vld [vmem:[%s1 + $0x14] sm:$0xf]
      %v239 = vld [vmem:[%s1 + $0x18] sm:$0xf]
      %v240 = vld [vmem:[%s1 + $0x1c] sm:$0xf]
      %v241 = vld [vmem:[%s1 + $0x20] sm:$0xf]
      %v242 = vld [vmem:[%s1 + $0x24] sm:$0xf]
      %v243 = vld [vmem:[%s1 + $0x28] sm:$0xf]
      %v244 = vld [vmem:[%s1 + $0x2c] sm:$0xf]
      %v245 = vld [vmem:[%s1 + $0x30] sm:$0xf]
      %v246 = vld [vmem:[%s1 + $0x34] sm:$0xf]
      %v247 = vld [vmem:[%s1 + $0x38] sm:$0xf]
      %v248 = vld [vmem:[%s1 + $0x3c] sm:$0xf]
      %v249 = vld [vmem:[%s216 + $0x8] sm:$0x1]
      %v250 = vld [vmem:[%s216 + $0x14] sm:$0x1]
      %v251 = vld [vmem:[%s216 + $0x20] sm:$0x1]
      %v252 = vld [vmem:[%s216 + $0x2c] sm:$0x1]
      %v253 = vld [vmem:[%s216 + $0x38] sm:$0x1]
      %v254 = vld [vmem:[%s216 + $0x44] sm:$0x1]
      %v255 = vld [vmem:[%s216 + $0x50] sm:$0x1]
      %v256 = vld [vmem:[%s216 + $0x5c] sm:$0x1]
      %vm257 = vsmask.f32 3328
      %vm258 = vsmask.f32 7440
      %vm259 = vmor %vm257, %vm258
      %v261 = vshrl.u32 %v217, 16
      %v263 = vrot.slane %v261, 4
      %v264 = vshll.u32 %v217, 16
      %v266 = vrot.slane %v264, 5
      %v267 = vor.u32 %v263, %v266
      %v268 = vrot.slane %v267, 4
      %v270 = vshll.u32 %v218, 16
      %v272 = vrot.slane %v270, 5
      %v273 = vsel %vm259, %v268, %v272
      %v274 = vshrl.u32 %v218, 16
      %v276 = vrot.slane %v274, 4
      %v277 = vor.u32 %v276, %v272
      %v278 = vrot.slane %v277, 4
      %v280 = vshll.u32 %v249, 16
      %v282 = vrot.slane %v280, 5
      %v283 = vsel %vm259, %v278, %v282
      %v285 = vshrl.u32 %v219, 16
      %v287 = vrot.slane %v285, 4
      %v288 = vshll.u32 %v219, 16
      %v290 = vrot.slane %v288, 5
      %v291 = vor.u32 %v287, %v290
      %v292 = vrot.slane %v291, 4
      %v294 = vshll.u32 %v220, 16
      %v296 = vrot.slane %v294, 5
      %v297 = vsel %vm259, %v292, %v296
      %v298 = vshrl.u32 %v220, 16
      %v300 = vrot.slane %v298, 4
      %v301 = vor.u32 %v300, %v296
      %v302 = vrot.slane %v301, 4
      %v304 = vshll.u32 %v250, 16
      %v306 = vrot.slane %v304, 5
      %v307 = vsel %vm259, %v302, %v306
      %v309 = vshrl.u32 %v221, 16
      %v311 = vrot.slane %v309, 4
      %v312 = vshll.u32 %v221, 16
      %v314 = vrot.slane %v312, 5
      %v315 = vor.u32 %v311, %v314
      %v316 = vrot.slane %v315, 4
      %v318 = vshll.u32 %v222, 16
      %v320 = vrot.slane %v318, 5
      %v321 = vsel %vm259, %v316, %v320
      %v322 = vshrl.u32 %v222, 16
      %v324 = vrot.slane %v322, 4
      %v325 = vor.u32 %v324, %v320
      %v326 = vrot.slane %v325, 4
      %v328 = vshll.u32 %v251, 16
      %v330 = vrot.slane %v328, 5
      %v331 = vsel %vm259, %v326, %v330
      %v333 = vshrl.u32 %v223, 16
      %v335 = vrot.slane %v333, 4
      %v336 = vshll.u32 %v223, 16
      %v338 = vrot.slane %v336, 5
      %v339 = vor.u32 %v335, %v338
      %v340 = vrot.slane %v339, 4
      %v342 = vshll.u32 %v224, 16
      %v344 = vrot.slane %v342, 5
      %v345 = vsel %vm259, %v340, %v344
      %v346 = vshrl.u32 %v224, 16
      %v348 = vrot.slane %v346, 4
      %v349 = vor.u32 %v348, %v344
      %v350 = vrot.slane %v349, 4
      %v352 = vshll.u32 %v252, 16
      %v354 = vrot.slane %v352, 5
      %v355 = vsel %vm259, %v350, %v354
      %v357 = vshrl.u32 %v225, 16
      %v359 = vrot.slane %v357, 4
      %v360 = vshll.u32 %v225, 16
      %v362 = vrot.slane %v360, 5
      %v363 = vor.u32 %v359, %v362
      %v364 = vrot.slane %v363, 4
      %v366 = vshll.u32 %v226, 16
      %v368 = vrot.slane %v366, 5
      %v369 = vsel %vm259, %v364, %v368
      %v370 = vshrl.u32 %v226, 16
      %v372 = vrot.slane %v370, 4
      %v373 = vor.u32 %v372, %v368
      %v374 = vrot.slane %v373, 4
      %v376 = vshll.u32 %v253, 16
      %v378 = vrot.slane %v376, 5
      %v379 = vsel %vm259, %v374, %v378
      %v381 = vshrl.u32 %v227, 16
      %v383 = vrot.slane %v381, 4
      %v384 = vshll.u32 %v227, 16
      %v386 = vrot.slane %v384, 5
      %v387 = vor.u32 %v383, %v386
      %v388 = vrot.slane %v387, 4
      %v390 = vshll.u32 %v228, 16
      %v392 = vrot.slane %v390, 5
      %v393 = vsel %vm259, %v388, %v392
      %v394 = vshrl.u32 %v228, 16
      %v396 = vrot.slane %v394, 4
      %v397 = vor.u32 %v396, %v392
      %v398 = vrot.slane %v397, 4
      %v400 = vshll.u32 %v254, 16
      %v402 = vrot.slane %v400, 5
      %v403 = vsel %vm259, %v398, %v402
      %v405 = vshrl.u32 %v229, 16
      %v407 = vrot.slane %v405, 4
      %v408 = vshll.u32 %v229, 16
      %v410 = vrot.slane %v408, 5
      %v411 = vor.u32 %v407, %v410
      %v412 = vrot.slane %v411, 4
      %v414 = vshll.u32 %v230, 16
      %v416 = vrot.slane %v414, 5
      %v417 = vsel %vm259, %v412, %v416
      %v418 = vshrl.u32 %v230, 16
      %v420 = vrot.slane %v418, 4
      %v421 = vor.u32 %v420, %v416
      %v422 = vrot.slane %v421, 4
      %v424 = vshll.u32 %v255, 16
      %v426 = vrot.slane %v424, 5
      %v427 = vsel %vm259, %v422, %v426
      %v429 = vshrl.u32 %v231, 16
      %v431 = vrot.slane %v429, 4
      %v432 = vshll.u32 %v231, 16
      %v434 = vrot.slane %v432, 5
      %v435 = vor.u32 %v431, %v434
      %v436 = vrot.slane %v435, 4
      %v438 = vshll.u32 %v232, 16
      %v440 = vrot.slane %v438, 5
      %v441 = vsel %vm259, %v436, %v440
      %v442 = vshrl.u32 %v232, 16
      %v444 = vrot.slane %v442, 4
      %v445 = vor.u32 %v444, %v440
      %v446 = vrot.slane %v445, 4
      %v448 = vshll.u32 %v256, 16
      %v450 = vrot.slane %v448, 5
      %v451 = vsel %vm259, %v446, %v450
      %s452 = scalar_lea.vmem %s1, 64
      %v453 = vld [vmem:[%s452] sm:$0xf]
      %v454 = vld [vmem:[%s452 + $0x4] sm:$0xf]
      %v455 = vld [vmem:[%s452 + $0x8] sm:$0xf]
      %v456 = vld [vmem:[%s452 + $0xc] sm:$0xf]
      %v457 = vld [vmem:[%s452 + $0x10] sm:$0xf]
      %v458 = vld [vmem:[%s452 + $0x14] sm:$0xf]
      %v459 = vld [vmem:[%s452 + $0x18] sm:$0xf]
      %v460 = vld [vmem:[%s452 + $0x1c] sm:$0xf]
      %v461 = vld [vmem:[%s452 + $0x20] sm:$0xf]
      %v462 = vld [vmem:[%s452 + $0x24] sm:$0xf]
      %v463 = vld [vmem:[%s452 + $0x28] sm:$0xf]
      %v464 = vld [vmem:[%s452 + $0x2c] sm:$0xf]
      %v465 = vld [vmem:[%s452 + $0x30] sm:$0xf]
      %v466 = vld [vmem:[%s452 + $0x34] sm:$0xf]
      %v467 = vld [vmem:[%s452 + $0x38] sm:$0xf]
      %v468 = vld [vmem:[%s452 + $0x3c] sm:$0xf]
      %v469 = vunpack.c.l.b16 %v273
      %v470 = vunpack.c.l.b16 %v283
      %v471 = vunpack.c.l.b16 %v297
      %v472 = vunpack.c.l.b16 %v307
      %v473 = vunpack.c.l.b16 %v321
      %v474 = vunpack.c.l.b16 %v331
      %v475 = vunpack.c.l.b16 %v345
      %v476 = vunpack.c.l.b16 %v355
      %v477 = vunpack.c.l.b16 %v369
      %v478 = vunpack.c.l.b16 %v379
      %v479 = vunpack.c.l.b16 %v393
      %v480 = vunpack.c.l.b16 %v403
      %v481 = vunpack.c.l.b16 %v417
      %v482 = vunpack.c.l.b16 %v427
      %v483 = vunpack.c.l.b16 %v441
      %v484 = vunpack.c.l.b16 %v451
      %v485 = vpack.c.b16 %v470, %v469
      %v486 = vpack.c.b16 %v472, %v471
      %v487 = vpack.c.b16 %v474, %v473
      %v488 = vpack.c.b16 %v476, %v475
      %v489 = vpack.c.b16 %v478, %v477
      %v490 = vpack.c.b16 %v480, %v479
      %v491 = vpack.c.b16 %v482, %v481
      %v492 = vpack.c.b16 %v484, %v483
      %v517 = vunpack.c.l.b16 %v453
      %v518 = vunpack.c.l.b16 %v454
      %v519 = vunpack.c.l.b16 %v455
      %v520 = vunpack.c.l.b16 %v456
      %v521 = vunpack.c.l.b16 %v457
      %v522 = vunpack.c.l.b16 %v458
      %v523 = vunpack.c.l.b16 %v459
      %v524 = vunpack.c.l.b16 %v460
      %v525 = vunpack.c.l.b16 %v461
      %v526 = vunpack.c.l.b16 %v462
      %v527 = vunpack.c.l.b16 %v463
      %v528 = vunpack.c.l.b16 %v464
      %v529 = vunpack.c.l.b16 %v465
      %v530 = vunpack.c.l.b16 %v466
      %v531 = vunpack.c.l.b16 %v467
      %v532 = vunpack.c.l.b16 %v468
      %v533 = vpack.c.b16 %v518, %v517
      %v534 = vpack.c.b16 %v520, %v519
      %v535 = vpack.c.b16 %v522, %v521
      %v536 = vpack.c.b16 %v524, %v523
      %v537 = vpack.c.b16 %v526, %v525
      %v538 = vpack.c.b16 %v528, %v527
      %v539 = vpack.c.b16 %v530, %v529
      %v540 = vpack.c.b16 %v532, %v531
      %549 = vmatprep.subr.bf16.mxu0 0
      %550 = vmatpush1.bf16.msra.mxu0 %v533
      %551 = vmatprep.subr.bf16.mxu0 0
      %552 = vmatpush1.bf16.msra.mxu0 %v534
      %553 = vmatprep.subr.bf16.mxu0 0
      %554 = vmatpush1.bf16.msra.mxu0 %v535
      %555 = vmatprep.subr.bf16.mxu0 0
      %556 = vmatpush1.bf16.msra.mxu0 %v536
      %557 = vmatprep.subr.bf16.mxu0 0
      %558 = vmatpush1.bf16.msra.mxu0 %v537
      %559 = vmatprep.subr.bf16.mxu0 0
      %560 = vmatpush1.bf16.msra.mxu0 %v538
      %561 = vmatprep.subr.bf16.mxu0 0
      %562 = vmatpush1.bf16.msra.mxu0 %v539
      %563 = vmatprep.subr.bf16.mxu0 0
      %564 = vmatpush1.bf16.msra.mxu0 %v540
      %565 = vmatprep.subr.bf16.mxu0 0
      %566 = vmatpush1.bf16.msra.mxu0 0
      %567 = vmatprep.subr.bf16.mxu0 0
      %568 = vmatpush1.bf16.msra.mxu0 0
      %569 = vmatprep.subr.bf16.mxu0 0
      %570 = vmatpush1.bf16.msra.mxu0 0
      %571 = vmatprep.subr.bf16.mxu0 0
      %572 = vmatpush1.bf16.msra.mxu0 0
      %573 = vmatprep.subr.bf16.mxu0 0
      %574 = vmatpush1.bf16.msra.mxu0 0
      %575 = vmatprep.subr.bf16.mxu0 0
      %576 = vmatpush1.bf16.msra.mxu0 0
      %577 = vmatprep.subr.bf16.mxu0 0
      %578 = vmatpush1.bf16.msra.mxu0 0
      %579 = vmatprep.subr.bf16.mxu0 0
      %580 = vmatpush1.bf16.msra.mxu0 0
      %581 = vmatprep.mubr.bf16.mxu0 0
      %582 = vmatmul.mubr.bf16.gmra.mrb[0].mxu0 %v485
      %v583 = vpop.f32.mrb[0].mxu0
      %v584 = vadd.f32 0.0, %v583
      %v585 = vpop.f32.mrb[0].mxu0
      %v586 = vpop.f32.mrb[0].mxu0
      %v587 = vadd.f32 0.0, %v586
      %v588 = vpop.f32.mrb[0].mxu0
      %589 = vmatprep.mubr.bf16.mxu0 0
      %590 = vmatmul.mubr.bf16.gmra.mrb[0].mxu0 %v486
      %v591 = vpop.f32.mrb[0].mxu0
      %v592 = vadd.f32 0.0, %v591
      %v593 = vpop.f32.mrb[0].mxu0
      %v594 = vpop.f32.mrb[0].mxu0
      %v595 = vadd.f32 0.0, %v594
      %v596 = vpop.f32.mrb[0].mxu0
      %597 = vmatprep.mubr.bf16.mxu0 0
      %598 = vmatmul.mubr.bf16.gmra.mrb[0].mxu0 %v487
      %v599 = vpop.f32.mrb[0].mxu0
      %v600 = vadd.f32 0.0, %v599
      %v601 = vpop.f32.mrb[0].mxu0
      %v602 = vpop.f32.mrb[0].mxu0
      %v603 = vadd.f32 0.0, %v602
      %v604 = vpop.f32.mrb[0].mxu0
      %605 = vmatprep.mubr.bf16.mxu0 0
      %606 = vmatmul.mubr.bf16.gmra.mrb[0].mxu0 %v488
      %v607 = vpop.f32.mrb[0].mxu0
      %v608 = vadd.f32 0.0, %v607
      %v609 = vpop.f32.mrb[0].mxu0
      %v610 = vpop.f32.mrb[0].mxu0
      %v611 = vadd.f32 0.0, %v610
      %v612 = vpop.f32.mrb[0].mxu0
      %613 = vmatprep.mubr.bf16.mxu0 0
      %614 = vmatmul.mubr.bf16.gmra.mrb[0].mxu0 %v489
      %v615 = vpop.f32.mrb[0].mxu0
      %v616 = vadd.f32 0.0, %v615
      %v617 = vpop.f32.mrb[0].mxu0
      %v618 = vpop.f32.mrb[0].mxu0
      %v619 = vadd.f32 0.0, %v618
      %v620 = vpop.f32.mrb[0].mxu0
      %621 = vmatprep.mubr.bf16.mxu0 0
      %622 = vmatmul.mubr.bf16.gmra.mrb[0].mxu0 %v490
      %v623 = vpop.f32.mrb[0].mxu0
      %v624 = vadd.f32 0.0, %v623
      %v625 = vpop.f32.mrb[0].mxu0
      %v626 = vpop.f32.mrb[0].mxu0
      %v627 = vadd.f32 0.0, %v626
      %v628 = vpop.f32.mrb[0].mxu0
      %629 = vmatprep.mubr.bf16.mxu0 0
      %630 = vmatmul.mubr.bf16.gmra.mrb[0].mxu0 %v491
      %v631 = vpop.f32.mrb[0].mxu0
      %v632 = vadd.f32 0.0, %v631
      %v633 = vpop.f32.mrb[0].mxu0
      %v634 = vpop.f32.mrb[0].mxu0
      %v635 = vadd.f32 0.0, %v634
      %v636 = vpop.f32.mrb[0].mxu0
      %637 = vmatprep.mubr.bf16.mxu0 0
      %638 = vmatmul.mubr.bf16.gmra.mrb[0].mxu0 %v492
      %v639 = vpop.f32.mrb[0].mxu0
      %v640 = vadd.f32 0.0, %v639
      %v641 = vpop.f32.mrb[0].mxu0
      %v642 = vpop.f32.mrb[0].mxu0
      %v643 = vadd.f32 0.0, %v642
      %v644 = vpop.f32.mrb[0].mxu0
      %645 = vdwg.mxu0
      %v662 = vunpack.c.l.b16 %v217
      %v663 = vunpack.c.l.b16 %v218
      %v664 = vunpack.c.l.b16 %v219
      %v665 = vunpack.c.l.b16 %v220
      %v666 = vunpack.c.l.b16 %v221
      %v667 = vunpack.c.l.b16 %v222
      %v668 = vunpack.c.l.b16 %v223
      %v669 = vunpack.c.l.b16 %v224
      %v670 = vunpack.c.l.b16 %v225
      %v671 = vunpack.c.l.b16 %v226
      %v672 = vunpack.c.l.b16 %v227
      %v673 = vunpack.c.l.b16 %v228
      %v674 = vunpack.c.l.b16 %v229
      %v675 = vunpack.c.l.b16 %v230
      %v676 = vunpack.c.l.b16 %v231
      %v677 = vunpack.c.l.b16 %v232
      %v678 = vpack.c.b16 %v663, %v662
      %v679 = vpack.c.b16 %v665, %v664
      %v680 = vpack.c.b16 %v667, %v666
      %v681 = vpack.c.b16 %v669, %v668
      %v682 = vpack.c.b16 %v671, %v670
      %v683 = vpack.c.b16 %v673, %v672
      %v684 = vpack.c.b16 %v675, %v674
      %v685 = vpack.c.b16 %v677, %v676
      %v710 = vunpack.c.l.b16 %v233
      %v711 = vunpack.c.l.b16 %v234
      %v712 = vunpack.c.l.b16 %v235
      %v713 = vunpack.c.l.b16 %v236
      %v714 = vunpack.c.l.b16 %v237
      %v715 = vunpack.c.l.b16 %v238
      %v716 = vunpack.c.l.b16 %v239
      %v717 = vunpack.c.l.b16 %v240
      %v718 = vunpack.c.l.b16 %v241
      %v719 = vunpack.c.l.b16 %v242
      %v720 = vunpack.c.l.b16 %v243
      %v721 = vunpack.c.l.b16 %v244
      %v722 = vunpack.c.l.b16 %v245
      %v723 = vunpack.c.l.b16 %v246
      %v724 = vunpack.c.l.b16 %v247
      %v725 = vunpack.c.l.b16 %v248
      %v726 = vpack.c.b16 %v711, %v710
      %v727 = vpack.c.b16 %v713, %v712
      %v728 = vpack.c.b16 %v715, %v714
      %v729 = vpack.c.b16 %v717, %v716
      %v730 = vpack.c.b16 %v719, %v718
      %v731 = vpack.c.b16 %v721, %v720
      %v732 = vpack.c.b16 %v723, %v722
      %v733 = vpack.c.b16 %v725, %v724
      %742 = vmatprep.subr.bf16.mxu0 0
      %743 = vmatpush1.bf16.msra.mxu0 %v726
      %744 = vmatprep.subr.bf16.mxu0 0
      %745 = vmatpush1.bf16.msra.mxu0 %v727
      %746 = vmatprep.subr.bf16.mxu0 0
      %747 = vmatpush1.bf16.msra.mxu0 %v728
      %748 = vmatprep.subr.bf16.mxu0 0
      %749 = vmatpush1.bf16.msra.mxu0 %v729
      %750 = vmatprep.subr.bf16.mxu0 0
      %751 = vmatpush1.bf16.msra.mxu0 %v730
      %752 = vmatprep.subr.bf16.mxu0 0
      %753 = vmatpush1.bf16.msra.mxu0 %v731
      %754 = vmatprep.subr.bf16.mxu0 0
      %755 = vmatpush1.bf16.msra.mxu0 %v732
      %756 = vmatprep.subr.bf16.mxu0 0
      %757 = vmatpush1.bf16.msra.mxu0 %v733
      %758 = vmatprep.subr.bf16.mxu0 0
      %759 = vmatpush1.bf16.msra.mxu0 0
      %760 = vmatprep.subr.bf16.mxu0 0
      %761 = vmatpush1.bf16.msra.mxu0 0
      %762 = vmatprep.subr.bf16.mxu0 0
      %763 = vmatpush1.bf16.msra.mxu0 0
      %764 = vmatprep.subr.bf16.mxu0 0
      %765 = vmatpush1.bf16.msra.mxu0 0
      %766 = vmatprep.subr.bf16.mxu0 0
      %767 = vmatpush1.bf16.msra.mxu0 0
      %768 = vmatprep.subr.bf16.mxu0 0
      %769 = vmatpush1.bf16.msra.mxu0 0
      %770 = vmatprep.subr.bf16.mxu0 0
      %771 = vmatpush1.bf16.msra.mxu0 0
      %772 = vmatprep.subr.bf16.mxu0 0
      %773 = vmatpush1.bf16.msra.mxu0 0
      %774 = vmatprep.mubr.bf16.mxu0 0
      %775 = vmatmul.mubr.bf16.gmra.mrb[0].mxu0 %v678
      %v776 = vpop.f32.mrb[0].mxu0
      %v777 = vadd.f32 %v584, %v776
      %v778 = vpop.f32.mrb[0].mxu0
      %v779 = vpop.f32.mrb[0].mxu0
      %v780 = vadd.f32 %v587, %v779
      %v781 = vpop.f32.mrb[0].mxu0
      %782 = vmatprep.mubr.bf16.mxu0 0
      %783 = vmatmul.mubr.bf16.gmra.mrb[0].mxu0 %v679
      %v784 = vpop.f32.mrb[0].mxu0
      %v785 = vadd.f32 %v592, %v784
      %v786 = vpop.f32.mrb[0].mxu0
      %v787 = vpop.f32.mrb[0].mxu0
      %v788 = vadd.f32 %v595, %v787
      %v789 = vpop.f32.mrb[0].mxu0
      %790 = vmatprep.mubr.bf16.mxu0 0
      %791 = vmatmul.mubr.bf16.gmra.mrb[0].mxu0 %v680
      %v792 = vpop.f32.mrb[0].mxu0
      %v793 = vadd.f32 %v600, %v792
      %v794 = vpop.f32.mrb[0].mxu0
      %v795 = vpop.f32.mrb[0].mxu0
      %v796 = vadd.f32 %v603, %v795
      %v797 = vpop.f32.mrb[0].mxu0
      %798 = vmatprep.mubr.bf16.mxu0 0
      %799 = vmatmul.mubr.bf16.gmra.mrb[0].mxu0 %v681
      %v800 = vpop.f32.mrb[0].mxu0
      %v801 = vadd.f32 %v608, %v800
      %v802 = vpop.f32.mrb[0].mxu0
      %v803 = vpop.f32.mrb[0].mxu0
      %v804 = vadd.f32 %v611, %v803
      %v805 = vpop.f32.mrb[0].mxu0
      %806 = vmatprep.mubr.bf16.mxu0 0
      %807 = vmatmul.mubr.bf16.gmra.mrb[0].mxu0 %v682
      %v808 = vpop.f32.mrb[0].mxu0
      %v809 = vadd.f32 %v616, %v808
      %v810 = vpop.f32.mrb[0].mxu0
      %v811 = vpop.f32.mrb[0].mxu0
      %v812 = vadd.f32 %v619, %v811
      %v813 = vpop.f32.mrb[0].mxu0
      %814 = vmatprep.mubr.bf16.mxu0 0
      %815 = vmatmul.mubr.bf16.gmra.mrb[0].mxu0 %v683
      %v816 = vpop.f32.mrb[0].mxu0
      %v817 = vadd.f32 %v624, %v816
      %v818 = vpop.f32.mrb[0].mxu0
      %v819 = vpop.f32.mrb[0].mxu0
      %v820 = vadd.f32 %v627, %v819
      %v821 = vpop.f32.mrb[0].mxu0
      %822 = vmatprep.mubr.bf16.mxu0 0
      %823 = vmatmul.mubr.bf16.gmra.mrb[0].mxu0 %v684
      %v824 = vpop.f32.mrb[0].mxu0
      %v825 = vadd.f32 %v632, %v824
      %v826 = vpop.f32.mrb[0].mxu0
      %v827 = vpop.f32.mrb[0].mxu0
      %v828 = vadd.f32 %v635, %v827
      %v829 = vpop.f32.mrb[0].mxu0
      %830 = vmatprep.mubr.bf16.mxu0 0
      %831 = vmatmul.mubr.bf16.gmra.mrb[0].mxu0 %v685
      %v832 = vpop.f32.mrb[0].mxu0
      %v833 = vadd.f32 %v640, %v832
      %v834 = vpop.f32.mrb[0].mxu0
      %v835 = vpop.f32.mrb[0].mxu0
      %v836 = vadd.f32 %v643, %v835
      %v837 = vpop.f32.mrb[0].mxu0
      %838 = vdwg.mxu0
      %v839 = vld [vmem:[%s216] sm:$0xe]
      %v840 = vld [vmem:[%s216 + $0xc] sm:$0xe]
      %v841 = vld [vmem:[%s216 + $0x18] sm:$0xe]
      %v842 = vld [vmem:[%s216 + $0x24] sm:$0xe]
      %v843 = vld [vmem:[%s216 + $0x30] sm:$0xe]
      %v844 = vld [vmem:[%s216 + $0x3c] sm:$0xe]
      %v845 = vld [vmem:[%s216 + $0x48] sm:$0xe]
      %v846 = vld [vmem:[%s216 + $0x54] sm:$0xe]
      %vm863 = vcmask 1042432
      %vm864 = vcmask 1046532
      %vm865 = vmor %vm863, %vm864
      %v866 = vrot.slane %v839, 5
      %v867 = vrot.slane %v866, 4
      %v868 = vrot.slane %v218, 5
      %v869 = vsel %vm865, %v867, %v868
      %v870 = vrot.slane %v868, 4
      %v871 = vrot.slane %v249, 5
      %v872 = vsel %vm865, %v870, %v871
      %v873 = vrot.slane %v840, 5
      %v874 = vrot.slane %v873, 4
      %v875 = vrot.slane %v220, 5
      %v876 = vsel %vm865, %v874, %v875
      %v877 = vrot.slane %v875, 4
      %v878 = vrot.slane %v250, 5
      %v879 = vsel %vm865, %v877, %v878
      %v880 = vrot.slane %v841, 5
      %v881 = vrot.slane %v880, 4
      %v882 = vrot.slane %v222, 5
      %v883 = vsel %vm865, %v881, %v882
      %v884 = vrot.slane %v882, 4
      %v885 = vrot.slane %v251, 5
      %v886 = vsel %vm865, %v884, %v885
      %v887 = vrot.slane %v842, 5
      %v888 = vrot.slane %v887, 4
      %v889 = vrot.slane %v224, 5
      %v890 = vsel %vm865, %v888, %v889
      %v891 = vrot.slane %v889, 4
      %v892 = vrot.slane %v252, 5
      %v893 = vsel %vm865, %v891, %v892
      %v894 = vrot.slane %v843, 5
      %v895 = vrot.slane %v894, 4
      %v896 = vrot.slane %v226, 5
      %v897 = vsel %vm865, %v895, %v896
      %v898 = vrot.slane %v896, 4
      %v899 = vrot.slane %v253, 5
      %v900 = vsel %vm865, %v898, %v899
      %v901 = vrot.slane %v844, 5
      %v902 = vrot.slane %v901, 4
      %v903 = vrot.slane %v228, 5
      %v904 = vsel %vm865, %v902, %v903
      %v905 = vrot.slane %v903, 4
      %v906 = vrot.slane %v254, 5
      %v907 = vsel %vm865, %v905, %v906
      %v908 = vrot.slane %v845, 5
      %v909 = vrot.slane %v908, 4
      %v910 = vrot.slane %v230, 5
      %v911 = vsel %vm865, %v909, %v910
      %v912 = vrot.slane %v910, 4
      %v913 = vrot.slane %v255, 5
      %v914 = vsel %vm865, %v912, %v913
      %v915 = vrot.slane %v846, 5
      %v916 = vrot.slane %v915, 4
      %v917 = vrot.slane %v232, 5
      %v918 = vsel %vm865, %v916, %v917
      %v919 = vrot.slane %v917, 4
      %v920 = vrot.slane %v256, 5
      %v921 = vsel %vm865, %v919, %v920
      %s922 = scalar_lea.vmem %s1, 128
      %v923 = vld [vmem:[%s922] sm:$0xf]
      %v924 = vld [vmem:[%s922 + $0x4] sm:$0xf]
      %v925 = vld [vmem:[%s922 + $0x8] sm:$0xf]
      %v926 = vld [vmem:[%s922 + $0xc] sm:$0xf]
      %v927 = vld [vmem:[%s922 + $0x10] sm:$0xf]
      %v928 = vld [vmem:[%s922 + $0x14] sm:$0xf]
      %v929 = vld [vmem:[%s922 + $0x18] sm:$0xf]
      %v930 = vld [vmem:[%s922 + $0x1c] sm:$0xf]
      %v931 = vld [vmem:[%s922 + $0x20] sm:$0xf]
      %v932 = vld [vmem:[%s922 + $0x24] sm:$0xf]
      %v933 = vld [vmem:[%s922 + $0x28] sm:$0xf]
      %v934 = vld [vmem:[%s922 + $0x2c] sm:$0xf]
      %v935 = vld [vmem:[%s922 + $0x30] sm:$0xf]
      %v936 = vld [vmem:[%s922 + $0x34] sm:$0xf]
      %v937 = vld [vmem:[%s922 + $0x38] sm:$0xf]
      %v938 = vld [vmem:[%s922 + $0x3c] sm:$0xf]
      %v939 = vunpack.c.l.b16 %v869
      %v940 = vunpack.c.l.b16 %v872
      %v941 = vunpack.c.l.b16 %v876
      %v942 = vunpack.c.l.b16 %v879
      %v943 = vunpack.c.l.b16 %v883
      %v944 = vunpack.c.l.b16 %v886
      %v945 = vunpack.c.l.b16 %v890
      %v946 = vunpack.c.l.b16 %v893
      %v947 = vunpack.c.l.b16 %v897
      %v948 = vunpack.c.l.b16 %v900
      %v949 = vunpack.c.l.b16 %v904
      %v950 = vunpack.c.l.b16 %v907
      %v951 = vunpack.c.l.b16 %v911
      %v952 = vunpack.c.l.b16 %v914
      %v953 = vunpack.c.l.b16 %v918
      %v954 = vunpack.c.l.b16 %v921
      %v955 = vpack.c.b16 %v940, %v939
      %v956 = vpack.c.b16 %v942, %v941
      %v957 = vpack.c.b16 %v944, %v943
      %v958 = vpack.c.b16 %v946, %v945
      %v959 = vpack.c.b16 %v948, %v947
      %v960 = vpack.c.b16 %v950, %v949
      %v961 = vpack.c.b16 %v952, %v951
      %v962 = vpack.c.b16 %v954, %v953
      %v987 = vunpack.c.l.b16 %v923
      %v988 = vunpack.c.l.b16 %v924
      %v989 = vunpack.c.l.b16 %v925
      %v990 = vunpack.c.l.b16 %v926
      %v991 = vunpack.c.l.b16 %v927
      %v992 = vunpack.c.l.b16 %v928
      %v993 = vunpack.c.l.b16 %v929
      %v994 = vunpack.c.l.b16 %v930
      %v995 = vunpack.c.l.b16 %v931
      %v996 = vunpack.c.l.b16 %v932
      %v997 = vunpack.c.l.b16 %v933
      %v998 = vunpack.c.l.b16 %v934
      %v999 = vunpack.c.l.b16 %v935
      %v1000 = vunpack.c.l.b16 %v936
      %v1001 = vunpack.c.l.b16 %v937
      %v1002 = vunpack.c.l.b16 %v938
      %v1003 = vpack.c.b16 %v988, %v987
      %v1004 = vpack.c.b16 %v990, %v989
      %v1005 = vpack.c.b16 %v992, %v991
      %v1006 = vpack.c.b16 %v994, %v993
      %v1007 = vpack.c.b16 %v996, %v995
      %v1008 = vpack.c.b16 %v998, %v997
      %v1009 = vpack.c.b16 %v1000, %v999
      %v1010 = vpack.c.b16 %v1002, %v1001
      %1019 = vmatprep.subr.bf16.mxu0 0
      %1020 = vmatpush1.bf16.msra.mxu0 %v1003
      %1021 = vmatprep.subr.bf16.mxu0 0
      %1022 = vmatpush1.bf16.msra.mxu0 %v1004
      %1023 = vmatprep.subr.bf16.mxu0 0
      %1024 = vmatpush1.bf16.msra.mxu0 %v1005
      %1025 = vmatprep.subr.bf16.mxu0 0
      %1026 = vmatpush1.bf16.msra.mxu0 %v1006
      %1027 = vmatprep.subr.bf16.mxu0 0
      %1028 = vmatpush1.bf16.msra.mxu0 %v1007
      %1029 = vmatprep.subr.bf16.mxu0 0
      %1030 = vmatpush1.bf16.msra.mxu0 %v1008
      %1031 = vmatprep.subr.bf16.mxu0 0
      %1032 = vmatpush1.bf16.msra.mxu0 %v1009
      %1033 = vmatprep.subr.bf16.mxu0 0
      %1034 = vmatpush1.bf16.msra.mxu0 %v1010
      %1035 = vmatprep.subr.bf16.mxu0 0
      %1036 = vmatpush1.bf16.msra.mxu0 0
      %1037 = vmatprep.subr.bf16.mxu0 0
      %1038 = vmatpush1.bf16.msra.mxu0 0
      %1039 = vmatprep.subr.bf16.mxu0 0
      %1040 = vmatpush1.bf16.msra.mxu0 0
      %1041 = vmatprep.subr.bf16.mxu0 0
      %1042 = vmatpush1.bf16.msra.mxu0 0
      %1043 = vmatprep.subr.bf16.mxu0 0
      %1044 = vmatpush1.bf16.msra.mxu0 0
      %1045 = vmatprep.subr.bf16.mxu0 0
      %1046 = vmatpush1.bf16.msra.mxu0 0
      %1047 = vmatprep.subr.bf16.mxu0 0
      %1048 = vmatpush1.bf16.msra.mxu0 0
      %1049 = vmatprep.subr.bf16.mxu0 0
      %1050 = vmatpush1.bf16.msra.mxu0 0
      %1051 = vmatprep.mubr.bf16.mxu0 0
      %1052 = vmatmul.mubr.bf16.gmra.mrb[0].mxu0 %v955
      %v1053 = vpop.f32.mrb[0].mxu0
      %v1054 = vadd.f32 0.0, %v1053
      %v1055 = vpop.f32.mrb[0].mxu0
      %v1056 = vpop.f32.mrb[0].mxu0
      %v1057 = vadd.f32 0.0, %v1056
      %v1058 = vpop.f32.mrb[0].mxu0
      %1059 = vmatprep.mubr.bf16.mxu0 0
      %1060 = vmatmul.mubr.bf16.gmra.mrb[0].mxu0 %v956
      %v1061 = vpop.f32.mrb[0].mxu0
      %v1062 = vadd.f32 0.0, %v1061
      %v1063 = vpop.f32.mrb[0].mxu0
      %v1064 = vpop.f32.mrb[0].mxu0
      %v1065 = vadd.f32 0.0, %v1064
      %v1066 = vpop.f32.mrb[0].mxu0
      %1067 = vmatprep.mubr.bf16.mxu0 0
      %1068 = vmatmul.mubr.bf16.gmra.mrb[0].mxu0 %v957
      %v1069 = vpop.f32.mrb[0].mxu0
      %v1070 = vadd.f32 0.0, %v1069
      %v1071 = vpop.f32.mrb[0].mxu0
      %v1072 = vpop.f32.mrb[0].mxu0
      %v1073 = vadd.f32 0.0, %v1072
      %v1074 = vpop.f32.mrb[0].mxu0
      %1075 = vmatprep.mubr.bf16.mxu0 0
      %1076 = vmatmul.mubr.bf16.gmra.mrb[0].mxu0 %v958
      %v1077 = vpop.f32.mrb[0].mxu0
      %v1078 = vadd.f32 0.0, %v1077
      %v1079 = vpop.f32.mrb[0].mxu0
      %v1080 = vpop.f32.mrb[0].mxu0
      %v1081 = vadd.f32 0.0, %v1080
      %v1082 = vpop.f32.mrb[0].mxu0
      %1083 = vmatprep.mubr.bf16.mxu0 0
      %1084 = vmatmul.mubr.bf16.gmra.mrb[0].mxu0 %v959
      %v1085 = vpop.f32.mrb[0].mxu0
      %v1086 = vadd.f32 0.0, %v1085
      %v1087 = vpop.f32.mrb[0].mxu0
      %v1088 = vpop.f32.mrb[0].mxu0
      %v1089 = vadd.f32 0.0, %v1088
      %v1090 = vpop.f32.mrb[0].mxu0
      %1091 = vmatprep.mubr.bf16.mxu0 0
      %1092 = vmatmul.mubr.bf16.gmra.mrb[0].mxu0 %v960
      %v1093 = vpop.f32.mrb[0].mxu0
      %v1094 = vadd.f32 0.0, %v1093
      %v1095 = vpop.f32.mrb[0].mxu0
      %v1096 = vpop.f32.mrb[0].mxu0
      %v1097 = vadd.f32 0.0, %v1096
      %v1098 = vpop.f32.mrb[0].mxu0
      %1099 = vmatprep.mubr.bf16.mxu0 0
      %1100 = vmatmul.mubr.bf16.gmra.mrb[0].mxu0 %v961
      %v1101 = vpop.f32.mrb[0].mxu0
      %v1102 = vadd.f32 0.0, %v1101
      %v1103 = vpop.f32.mrb[0].mxu0
      %v1104 = vpop.f32.mrb[0].mxu0
      %v1105 = vadd.f32 0.0, %v1104
      %v1106 = vpop.f32.mrb[0].mxu0
      %1107 = vmatprep.mubr.bf16.mxu0 0
      %1108 = vmatmul.mubr.bf16.gmra.mrb[0].mxu0 %v962
      %v1109 = vpop.f32.mrb[0].mxu0
      %v1110 = vadd.f32 0.0, %v1109
      %v1111 = vpop.f32.mrb[0].mxu0
      %v1112 = vpop.f32.mrb[0].mxu0
      %v1113 = vadd.f32 0.0, %v1112
      %v1114 = vpop.f32.mrb[0].mxu0
      %1115 = vdwg.mxu0
      %v1116 = vadd.f32 %v777, %v1054
      %v1117 = vadd.f32 %v780, %v1057
      %v1118 = vadd.f32 %v785, %v1062
      %v1119 = vadd.f32 %v788, %v1065
      %v1120 = vadd.f32 %v793, %v1070
      %v1121 = vadd.f32 %v796, %v1073
      %v1122 = vadd.f32 %v801, %v1078
      %v1123 = vadd.f32 %v804, %v1081
      %v1124 = vadd.f32 %v809, %v1086
      %v1125 = vadd.f32 %v812, %v1089
      %v1126 = vadd.f32 %v817, %v1094
      %v1127 = vadd.f32 %v820, %v1097
      %v1128 = vadd.f32 %v825, %v1102
      %v1129 = vadd.f32 %v828, %v1105
      %v1130 = vadd.f32 %v833, %v1110
      %v1131 = vadd.f32 %v836, %v1113
      %s1132 = sadd.s32 %s213, 1
      %s1133 = smul.u32 %s1132, 3
      %s1134 = smul.addr %s1133, 4
      %s1135 = scalar_lea.vmem %s191, %s1134
      %v1136 = vld [vmem:[%s1135] sm:$0xf]
      %v1137 = vld [vmem:[%s1135 + $0x4] sm:$0xf]
      %v1138 = vld [vmem:[%s1135 + $0xc] sm:$0xf]
      %v1139 = vld [vmem:[%s1135 + $0x10] sm:$0xf]
      %v1140 = vld [vmem:[%s1135 + $0x18] sm:$0xf]
      %v1141 = vld [vmem:[%s1135 + $0x1c] sm:$0xf]
      %v1142 = vld [vmem:[%s1135 + $0x24] sm:$0xf]
      %v1143 = vld [vmem:[%s1135 + $0x28] sm:$0xf]
      %v1144 = vld [vmem:[%s1135 + $0x30] sm:$0xf]
      %v1145 = vld [vmem:[%s1135 + $0x34] sm:$0xf]
      %v1146 = vld [vmem:[%s1135 + $0x3c] sm:$0xf]
      %v1147 = vld [vmem:[%s1135 + $0x40] sm:$0xf]
      %v1148 = vld [vmem:[%s1135 + $0x48] sm:$0xf]
      %v1149 = vld [vmem:[%s1135 + $0x4c] sm:$0xf]
      %v1150 = vld [vmem:[%s1135 + $0x54] sm:$0xf]
      %v1151 = vld [vmem:[%s1135 + $0x58] sm:$0xf]
      %s1152 = scalar_lea.vmem %s1, 192
      %v1153 = vld [vmem:[%s1152] sm:$0xf]
      %v1154 = vld [vmem:[%s1152 + $0x4] sm:$0xf]
      %v1155 = vld [vmem:[%s1152 + $0x8] sm:$0xf]
      %v1156 = vld [vmem:[%s1152 + $0xc] sm:$0xf]
      %v1157 = vld [vmem:[%s1152 + $0x10] sm:$0xf]
      %v1158 = vld [vmem:[%s1152 + $0x14] sm:$0xf]
      %v1159 = vld [vmem:[%s1152 + $0x18] sm:$0xf]
      %v1160 = vld [vmem:[%s1152 + $0x1c] sm:$0xf]
      %v1161 = vld [vmem:[%s1152 + $0x20] sm:$0xf]
      %v1162 = vld [vmem:[%s1152 + $0x24] sm:$0xf]
      %v1163 = vld [vmem:[%s1152 + $0x28] sm:$0xf]
      %v1164 = vld [vmem:[%s1152 + $0x2c] sm:$0xf]
      %v1165 = vld [vmem:[%s1152 + $0x30] sm:$0xf]
      %v1166 = vld [vmem:[%s1152 + $0x34] sm:$0xf]
      %v1167 = vld [vmem:[%s1152 + $0x38] sm:$0xf]
      %v1168 = vld [vmem:[%s1152 + $0x3c] sm:$0xf]
      %v1185 = vunpack.c.l.b16 %v1136
      %v1186 = vunpack.c.l.b16 %v1137
      %v1187 = vunpack.c.l.b16 %v1138
      %v1188 = vunpack.c.l.b16 %v1139
      %v1189 = vunpack.c.l.b16 %v1140
      %v1190 = vunpack.c.l.b16 %v1141
      %v1191 = vunpack.c.l.b16 %v1142
      %v1192 = vunpack.c.l.b16 %v1143
      %v1193 = vunpack.c.l.b16 %v1144
      %v1194 = vunpack.c.l.b16 %v1145
      %v1195 = vunpack.c.l.b16 %v1146
      %v1196 = vunpack.c.l.b16 %v1147
      %v1197 = vunpack.c.l.b16 %v1148
      %v1198 = vunpack.c.l.b16 %v1149
      %v1199 = vunpack.c.l.b16 %v1150
      %v1200 = vunpack.c.l.b16 %v1151
      %v1201 = vpack.c.b16 %v1186, %v1185
      %v1202 = vpack.c.b16 %v1188, %v1187
      %v1203 = vpack.c.b16 %v1190, %v1189
      %v1204 = vpack.c.b16 %v1192, %v1191
      %v1205 = vpack.c.b16 %v1194, %v1193
      %v1206 = vpack.c.b16 %v1196, %v1195
      %v1207 = vpack.c.b16 %v1198, %v1197
      %v1208 = vpack.c.b16 %v1200, %v1199
      %v1233 = vunpack.c.l.b16 %v1153
      %v1234 = vunpack.c.l.b16 %v1154
      %v1235 = vunpack.c.l.b16 %v1155
      %v1236 = vunpack.c.l.b16 %v1156
      %v1237 = vunpack.c.l.b16 %v1157
      %v1238 = vunpack.c.l.b16 %v1158
      %v1239 = vunpack.c.l.b16 %v1159
      %v1240 = vunpack.c.l.b16 %v1160
      %v1241 = vunpack.c.l.b16 %v1161
      %v1242 = vunpack.c.l.b16 %v1162
      %v1243 = vunpack.c.l.b16 %v1163
      %v1244 = vunpack.c.l.b16 %v1164
      %v1245 = vunpack.c.l.b16 %v1165
      %v1246 = vunpack.c.l.b16 %v1166
      %v1247 = vunpack.c.l.b16 %v1167
      %v1248 = vunpack.c.l.b16 %v1168
      %v1249 = vpack.c.b16 %v1234, %v1233
      %v1250 = vpack.c.b16 %v1236, %v1235
      %v1251 = vpack.c.b16 %v1238, %v1237
      %v1252 = vpack.c.b16 %v1240, %v1239
      %v1253 = vpack.c.b16 %v1242, %v1241
      %v1254 = vpack.c.b16 %v1244, %v1243
      %v1255 = vpack.c.b16 %v1246, %v1245
      %v1256 = vpack.c.b16 %v1248, %v1247
      %1265 = vmatprep.subr.bf16.mxu0 0
      %1266 = vmatpush1.bf16.msra.mxu0 %v1249
      %1267 = vmatprep.subr.bf16.mxu0 0
      %1268 = vmatpush1.bf16.msra.mxu0 %v1250
      %1269 = vmatprep.subr.bf16.mxu0 0
      %1270 = vmatpush1.bf16.msra.mxu0 %v1251
      %1271 = vmatprep.subr.bf16.mxu0 0
      %1272 = vmatpush1.bf16.msra.mxu0 %v1252
      %1273 = vmatprep.subr.bf16.mxu0 0
      %1274 = vmatpush1.bf16.msra.mxu0 %v1253
      %1275 = vmatprep.subr.bf16.mxu0 0
      %1276 = vmatpush1.bf16.msra.mxu0 %v1254
      %1277 = vmatprep.subr.bf16.mxu0 0
      %1278 = vmatpush1.bf16.msra.mxu0 %v1255
      %1279 = vmatprep.subr.bf16.mxu0 0
      %1280 = vmatpush1.bf16.msra.mxu0 %v1256
      %1281 = vmatprep.subr.bf16.mxu0 0
      %1282 = vmatpush1.bf16.msra.mxu0 0
      %1283 = vmatprep.subr.bf16.mxu0 0
      %1284 = vmatpush1.bf16.msra.mxu0 0
      %1285 = vmatprep.subr.bf16.mxu0 0
      %1286 = vmatpush1.bf16.msra.mxu0 0
      %1287 = vmatprep.subr.bf16.mxu0 0
      %1288 = vmatpush1.bf16.msra.mxu0 0
      %1289 = vmatprep.subr.bf16.mxu0 0
      %1290 = vmatpush1.bf16.msra.mxu0 0
      %1291 = vmatprep.subr.bf16.mxu0 0
      %1292 = vmatpush1.bf16.msra.mxu0 0
      %1293 = vmatprep.subr.bf16.mxu0 0
      %1294 = vmatpush1.bf16.msra.mxu0 0
      %1295 = vmatprep.subr.bf16.mxu0 0
      %1296 = vmatpush1.bf16.msra.mxu0 0
      %1297 = vmatprep.mubr.bf16.mxu0 0
      %1298 = vmatmul.mubr.bf16.gmra.mrb[0].mxu0 %v1201
      %v1299 = vpop.f32.mrb[0].mxu0
      %v1300 = vadd.f32 0.0, %v1299
      %v1301 = vpop.f32.mrb[0].mxu0
      %v1302 = vpop.f32.mrb[0].mxu0
      %v1303 = vadd.f32 0.0, %v1302
      %v1304 = vpop.f32.mrb[0].mxu0
      %1305 = vmatprep.mubr.bf16.mxu0 0
      %1306 = vmatmul.mubr.bf16.gmra.mrb[0].mxu0 %v1202
      %v1307 = vpop.f32.mrb[0].mxu0
      %v1308 = vadd.f32 0.0, %v1307
      %v1309 = vpop.f32.mrb[0].mxu0
      %v1310 = vpop.f32.mrb[0].mxu0
      %v1311 = vadd.f32 0.0, %v1310
      %v1312 = vpop.f32.mrb[0].mxu0
      %1313 = vmatprep.mubr.bf16.mxu0 0
      %1314 = vmatmul.mubr.bf16.gmra.mrb[0].mxu0 %v1203
      %v1315 = vpop.f32.mrb[0].mxu0
      %v1316 = vadd.f32 0.0, %v1315
      %v1317 = vpop.f32.mrb[0].mxu0
      %v1318 = vpop.f32.mrb[0].mxu0
      %v1319 = vadd.f32 0.0, %v1318
      %v1320 = vpop.f32.mrb[0].mxu0
      %1321 = vmatprep.mubr.bf16.mxu0 0
      %1322 = vmatmul.mubr.bf16.gmra.mrb[0].mxu0 %v1204
      %v1323 = vpop.f32.mrb[0].mxu0
      %v1324 = vadd.f32 0.0, %v1323
      %v1325 = vpop.f32.mrb[0].mxu0
      %v1326 = vpop.f32.mrb[0].mxu0
      %v1327 = vadd.f32 0.0, %v1326
      %v1328 = vpop.f32.mrb[0].mxu0
      %1329 = vmatprep.mubr.bf16.mxu0 0
      %1330 = vmatmul.mubr.bf16.gmra.mrb[0].mxu0 %v1205
      %v1331 = vpop.f32.mrb[0].mxu0
      %v1332 = vadd.f32 0.0, %v1331
      %v1333 = vpop.f32.mrb[0].mxu0
      %v1334 = vpop.f32.mrb[0].mxu0
      %v1335 = vadd.f32 0.0, %v1334
      %v1336 = vpop.f32.mrb[0].mxu0
      %1337 = vmatprep.mubr.bf16.mxu0 0
      %1338 = vmatmul.mubr.bf16.gmra.mrb[0].mxu0 %v1206
      %v1339 = vpop.f32.mrb[0].mxu0
      %v1340 = vadd.f32 0.0, %v1339
      %v1341 = vpop.f32.mrb[0].mxu0
      %v1342 = vpop.f32.mrb[0].mxu0
      %v1343 = vadd.f32 0.0, %v1342
      %v1344 = vpop.f32.mrb[0].mxu0
      %1345 = vmatprep.mubr.bf16.mxu0 0
      %1346 = vmatmul.mubr.bf16.gmra.mrb[0].mxu0 %v1207
      %v1347 = vpop.f32.mrb[0].mxu0
      %v1348 = vadd.f32 0.0, %v1347
      %v1349 = vpop.f32.mrb[0].mxu0
      %v1350 = vpop.f32.mrb[0].mxu0
      %v1351 = vadd.f32 0.0, %v1350
      %v1352 = vpop.f32.mrb[0].mxu0
      %1353 = vmatprep.mubr.bf16.mxu0 0
      %1354 = vmatmul.mubr.bf16.gmra.mrb[0].mxu0 %v1208
      %v1355 = vpop.f32.mrb[0].mxu0
      %v1356 = vadd.f32 0.0, %v1355
      %v1357 = vpop.f32.mrb[0].mxu0
      %v1358 = vpop.f32.mrb[0].mxu0
      %v1359 = vadd.f32 0.0, %v1358
      %v1360 = vpop.f32.mrb[0].mxu0
      %1361 = vdwg.mxu0
      %v1362 = vadd.f32 %v1116, %v1300
      %v1363 = vadd.f32 %v1117, %v1303
      %v1364 = vadd.f32 %v1118, %v1308
      %v1365 = vadd.f32 %v1119, %v1311
      %v1366 = vadd.f32 %v1120, %v1316
      %v1367 = vadd.f32 %v1121, %v1319
      %v1368 = vadd.f32 %v1122, %v1324
      %v1369 = vadd.f32 %v1123, %v1327
      %v1370 = vadd.f32 %v1124, %v1332
      %v1371 = vadd.f32 %v1125, %v1335
      %v1372 = vadd.f32 %v1126, %v1340
      %v1373 = vadd.f32 %v1127, %v1343
      %v1374 = vadd.f32 %v1128, %v1348
      %v1375 = vadd.f32 %v1129, %v1351
      %v1376 = vadd.f32 %v1130, %v1356
      %v1377 = vadd.f32 %v1131, %v1359
      %v1378 = vld [vmem:[%s1135] sm:$0xf]
      %v1379 = vld [vmem:[%s1135 + $0x4] sm:$0xf]
      %v1380 = vld [vmem:[%s1135 + $0x8] sm:$0x1]
      %v1381 = vld [vmem:[%s1135 + $0xc] sm:$0xf]
      %v1382 = vld [vmem:[%s1135 + $0x10] sm:$0xf]
      %v1383 = vld [vmem:[%s1135 + $0x14] sm:$0x1]
      %v1384 = vld [vmem:[%s1135 + $0x18] sm:$0xf]
      %v1385 = vld [vmem:[%s1135 + $0x1c] sm:$0xf]
      %v1386 = vld [vmem:[%s1135 + $0x20] sm:$0x1]
      %v1387 = vld [vmem:[%s1135 + $0x24] sm:$0xf]
      %v1388 = vld [vmem:[%s1135 + $0x28] sm:$0xf]
      %v1389 = vld [vmem:[%s1135 + $0x2c] sm:$0x1]
      %v1390 = vld [vmem:[%s1135 + $0x30] sm:$0xf]
      %v1391 = vld [vmem:[%s1135 + $0x34] sm:$0xf]
      %v1392 = vld [vmem:[%s1135 + $0x38] sm:$0x1]
      %v1393 = vld [vmem:[%s1135 + $0x3c] sm:$0xf]
      %v1394 = vld [vmem:[%s1135 + $0x40] sm:$0xf]
      %v1395 = vld [vmem:[%s1135 + $0x44] sm:$0x1]
      %v1396 = vld [vmem:[%s1135 + $0x48] sm:$0xf]
      %v1397 = vld [vmem:[%s1135 + $0x4c] sm:$0xf]
      %v1398 = vld [vmem:[%s1135 + $0x50] sm:$0x1]
      %v1399 = vld [vmem:[%s1135 + $0x54] sm:$0xf]
      %v1400 = vld [vmem:[%s1135 + $0x58] sm:$0xf]
      %v1401 = vld [vmem:[%s1135 + $0x5c] sm:$0x1]
      %v1403 = vshrl.u32 %v1378, 16
      %v1405 = vrot.slane %v1403, 4
      %v1406 = vshll.u32 %v1378, 16
      %v1408 = vrot.slane %v1406, 5
      %v1409 = vor.u32 %v1405, %v1408
      %v1410 = vrot.slane %v1409, 4
      %v1412 = vshll.u32 %v1379, 16
      %v1414 = vrot.slane %v1412, 5
      %v1415 = vsel %vm259, %v1410, %v1414
      %v1416 = vshrl.u32 %v1379, 16
      %v1418 = vrot.slane %v1416, 4
      %v1419 = vor.u32 %v1418, %v1414
      %v1420 = vrot.slane %v1419, 4
      %v1422 = vshll.u32 %v1380, 16
      %v1424 = vrot.slane %v1422, 5
      %v1425 = vsel %vm259, %v1420, %v1424
      %v1427 = vshrl.u32 %v1381, 16
      %v1429 = vrot.slane %v1427, 4
      %v1430 = vshll.u32 %v1381, 16
      %v1432 = vrot.slane %v1430, 5
      %v1433 = vor.u32 %v1429, %v1432
      %v1434 = vrot.slane %v1433, 4
      %v1436 = vshll.u32 %v1382, 16
      %v1438 = vrot.slane %v1436, 5
      %v1439 = vsel %vm259, %v1434, %v1438
      %v1440 = vshrl.u32 %v1382, 16
      %v1442 = vrot.slane %v1440, 4
      %v1443 = vor.u32 %v1442, %v1438
      %v1444 = vrot.slane %v1443, 4
      %v1446 = vshll.u32 %v1383, 16
      %v1448 = vrot.slane %v1446, 5
      %v1449 = vsel %vm259, %v1444, %v1448
      %v1451 = vshrl.u32 %v1384, 16
      %v1453 = vrot.slane %v1451, 4
      %v1454 = vshll.u32 %v1384, 16
      %v1456 = vrot.slane %v1454, 5
      %v1457 = vor.u32 %v1453, %v1456
      %v1458 = vrot.slane %v1457, 4
      %v1460 = vshll.u32 %v1385, 16
      %v1462 = vrot.slane %v1460, 5
      %v1463 = vsel %vm259, %v1458, %v1462
      %v1464 = vshrl.u32 %v1385, 16
      %v1466 = vrot.slane %v1464, 4
      %v1467 = vor.u32 %v1466, %v1462
      %v1468 = vrot.slane %v1467, 4
      %v1470 = vshll.u32 %v1386, 16
      %v1472 = vrot.slane %v1470, 5
      %v1473 = vsel %vm259, %v1468, %v1472
      %v1475 = vshrl.u32 %v1387, 16
      %v1477 = vrot.slane %v1475, 4
      %v1478 = vshll.u32 %v1387, 16
      %v1480 = vrot.slane %v1478, 5
      %v1481 = vor.u32 %v1477, %v1480
      %v1482 = vrot.slane %v1481, 4
      %v1484 = vshll.u32 %v1388, 16
      %v1486 = vrot.slane %v1484, 5
      %v1487 = vsel %vm259, %v1482, %v1486
      %v1488 = vshrl.u32 %v1388, 16
      %v1490 = vrot.slane %v1488, 4
      %v1491 = vor.u32 %v1490, %v1486
      %v1492 = vrot.slane %v1491, 4
      %v1494 = vshll.u32 %v1389, 16
      %v1496 = vrot.slane %v1494, 5
      %v1497 = vsel %vm259, %v1492, %v1496
      %v1499 = vshrl.u32 %v1390, 16
      %v1501 = vrot.slane %v1499, 4
      %v1502 = vshll.u32 %v1390, 16
      %v1504 = vrot.slane %v1502, 5
      %v1505 = vor.u32 %v1501, %v1504
      %v1506 = vrot.slane %v1505, 4
      %v1508 = vshll.u32 %v1391, 16
      %v1510 = vrot.slane %v1508, 5
      %v1511 = vsel %vm259, %v1506, %v1510
      %v1512 = vshrl.u32 %v1391, 16
      %v1514 = vrot.slane %v1512, 4
      %v1515 = vor.u32 %v1514, %v1510
      %v1516 = vrot.slane %v1515, 4
      %v1518 = vshll.u32 %v1392, 16
      %v1520 = vrot.slane %v1518, 5
      %v1521 = vsel %vm259, %v1516, %v1520
      %v1523 = vshrl.u32 %v1393, 16
      %v1525 = vrot.slane %v1523, 4
      %v1526 = vshll.u32 %v1393, 16
      %v1528 = vrot.slane %v1526, 5
      %v1529 = vor.u32 %v1525, %v1528
      %v1530 = vrot.slane %v1529, 4
      %v1532 = vshll.u32 %v1394, 16
      %v1534 = vrot.slane %v1532, 5
      %v1535 = vsel %vm259, %v1530, %v1534
      %v1536 = vshrl.u32 %v1394, 16
      %v1538 = vrot.slane %v1536, 4
      %v1539 = vor.u32 %v1538, %v1534
      %v1540 = vrot.slane %v1539, 4
      %v1542 = vshll.u32 %v1395, 16
      %v1544 = vrot.slane %v1542, 5
      %v1545 = vsel %vm259, %v1540, %v1544
      %v1547 = vshrl.u32 %v1396, 16
      %v1549 = vrot.slane %v1547, 4
      %v1550 = vshll.u32 %v1396, 16
      %v1552 = vrot.slane %v1550, 5
      %v1553 = vor.u32 %v1549, %v1552
      %v1554 = vrot.slane %v1553, 4
      %v1556 = vshll.u32 %v1397, 16
      %v1558 = vrot.slane %v1556, 5
      %v1559 = vsel %vm259, %v1554, %v1558
      %v1560 = vshrl.u32 %v1397, 16
      %v1562 = vrot.slane %v1560, 4
      %v1563 = vor.u32 %v1562, %v1558
      %v1564 = vrot.slane %v1563, 4
      %v1566 = vshll.u32 %v1398, 16
      %v1568 = vrot.slane %v1566, 5
      %v1569 = vsel %vm259, %v1564, %v1568
      %v1571 = vshrl.u32 %v1399, 16
      %v1573 = vrot.slane %v1571, 4
      %v1574 = vshll.u32 %v1399, 16
      %v1576 = vrot.slane %v1574, 5
      %v1577 = vor.u32 %v1573, %v1576
      %v1578 = vrot.slane %v1577, 4
      %v1580 = vshll.u32 %v1400, 16
      %v1582 = vrot.slane %v1580, 5
      %v1583 = vsel %vm259, %v1578, %v1582
      %v1584 = vshrl.u32 %v1400, 16
      %v1586 = vrot.slane %v1584, 4
      %v1587 = vor.u32 %v1586, %v1582
      %v1588 = vrot.slane %v1587, 4
      %v1590 = vshll.u32 %v1401, 16
      %v1592 = vrot.slane %v1590, 5
      %v1593 = vsel %vm259, %v1588, %v1592
      %s1594 = scalar_lea.vmem %s1, 256
      %v1595 = vld [vmem:[%s1594] sm:$0xf]
      %v1596 = vld [vmem:[%s1594 + $0x4] sm:$0xf]
      %v1597 = vld [vmem:[%s1594 + $0x8] sm:$0xf]
      %v1598 = vld [vmem:[%s1594 + $0xc] sm:$0xf]
      %v1599 = vld [vmem:[%s1594 + $0x10] sm:$0xf]
      %v1600 = vld [vmem:[%s1594 + $0x14] sm:$0xf]
      %v1601 = vld [vmem:[%s1594 + $0x18] sm:$0xf]
      %v1602 = vld [vmem:[%s1594 + $0x1c] sm:$0xf]
      %v1603 = vld [vmem:[%s1594 + $0x20] sm:$0xf]
      %v1604 = vld [vmem:[%s1594 + $0x24] sm:$0xf]
      %v1605 = vld [vmem:[%s1594 + $0x28] sm:$0xf]
      %v1606 = vld [vmem:[%s1594 + $0x2c] sm:$0xf]
      %v1607 = vld [vmem:[%s1594 + $0x30] sm:$0xf]
      %v1608 = vld [vmem:[%s1594 + $0x34] sm:$0xf]
      %v1609 = vld [vmem:[%s1594 + $0x38] sm:$0xf]
      %v1610 = vld [vmem:[%s1594 + $0x3c] sm:$0xf]
      %v1611 = vunpack.c.l.b16 %v1415
      %v1612 = vunpack.c.l.b16 %v1425
      %v1613 = vunpack.c.l.b16 %v1439
      %v1614 = vunpack.c.l.b16 %v1449
      %v1615 = vunpack.c.l.b16 %v1463
      %v1616 = vunpack.c.l.b16 %v1473
      %v1617 = vunpack.c.l.b16 %v1487
      %v1618 = vunpack.c.l.b16 %v1497
      %v1619 = vunpack.c.l.b16 %v1511
      %v1620 = vunpack.c.l.b16 %v1521
      %v1621 = vunpack.c.l.b16 %v1535
      %v1622 = vunpack.c.l.b16 %v1545
      %v1623 = vunpack.c.l.b16 %v1559
      %v1624 = vunpack.c.l.b16 %v1569
      %v1625 = vunpack.c.l.b16 %v1583
      %v1626 = vunpack.c.l.b16 %v1593
      %v1627 = vpack.c.b16 %v1612, %v1611
      %v1628 = vpack.c.b16 %v1614, %v1613
      %v1629 = vpack.c.b16 %v1616, %v1615
      %v1630 = vpack.c.b16 %v1618, %v1617
      %v1631 = vpack.c.b16 %v1620, %v1619
      %v1632 = vpack.c.b16 %v1622, %v1621
      %v1633 = vpack.c.b16 %v1624, %v1623
      %v1634 = vpack.c.b16 %v1626, %v1625
      %v1659 = vunpack.c.l.b16 %v1595
      %v1660 = vunpack.c.l.b16 %v1596
      %v1661 = vunpack.c.l.b16 %v1597
      %v1662 = vunpack.c.l.b16 %v1598
      %v1663 = vunpack.c.l.b16 %v1599
      %v1664 = vunpack.c.l.b16 %v1600
      %v1665 = vunpack.c.l.b16 %v1601
      %v1666 = vunpack.c.l.b16 %v1602
      %v1667 = vunpack.c.l.b16 %v1603
      %v1668 = vunpack.c.l.b16 %v1604
      %v1669 = vunpack.c.l.b16 %v1605
      %v1670 = vunpack.c.l.b16 %v1606
      %v1671 = vunpack.c.l.b16 %v1607
      %v1672 = vunpack.c.l.b16 %v1608
      %v1673 = vunpack.c.l.b16 %v1609
      %v1674 = vunpack.c.l.b16 %v1610
      %v1675 = vpack.c.b16 %v1660, %v1659
      %v1676 = vpack.c.b16 %v1662, %v1661
      %v1677 = vpack.c.b16 %v1664, %v1663
      %v1678 = vpack.c.b16 %v1666, %v1665
      %v1679 = vpack.c.b16 %v1668, %v1667
      %v1680 = vpack.c.b16 %v1670, %v1669
      %v1681 = vpack.c.b16 %v1672, %v1671
      %v1682 = vpack.c.b16 %v1674, %v1673
      %1691 = vmatprep.subr.bf16.mxu0 0
      %1692 = vmatpush1.bf16.msra.mxu0 %v1675
      %1693 = vmatprep.subr.bf16.mxu0 0
      %1694 = vmatpush1.bf16.msra.mxu0 %v1676
      %1695 = vmatprep.subr.bf16.mxu0 0
      %1696 = vmatpush1.bf16.msra.mxu0 %v1677
      %1697 = vmatprep.subr.bf16.mxu0 0
      %1698 = vmatpush1.bf16.msra.mxu0 %v1678
      %1699 = vmatprep.subr.bf16.mxu0 0
      %1700 = vmatpush1.bf16.msra.mxu0 %v1679
      %1701 = vmatprep.subr.bf16.mxu0 0
      %1702 = vmatpush1.bf16.msra.mxu0 %v1680
      %1703 = vmatprep.subr.bf16.mxu0 0
      %1704 = vmatpush1.bf16.msra.mxu0 %v1681
      %1705 = vmatprep.subr.bf16.mxu0 0
      %1706 = vmatpush1.bf16.msra.mxu0 %v1682
      %1707 = vmatprep.subr.bf16.mxu0 0
      %1708 = vmatpush1.bf16.msra.mxu0 0
      %1709 = vmatprep.subr.bf16.mxu0 0
      %1710 = vmatpush1.bf16.msra.mxu0 0
      %1711 = vmatprep.subr.bf16.mxu0 0
      %1712 = vmatpush1.bf16.msra.mxu0 0
      %1713 = vmatprep.subr.bf16.mxu0 0
      %1714 = vmatpush1.bf16.msra.mxu0 0
      %1715 = vmatprep.subr.bf16.mxu0 0
      %1716 = vmatpush1.bf16.msra.mxu0 0
      %1717 = vmatprep.subr.bf16.mxu0 0
      %1718 = vmatpush1.bf16.msra.mxu0 0
      %1719 = vmatprep.subr.bf16.mxu0 0
      %1720 = vmatpush1.bf16.msra.mxu0 0
      %1721 = vmatprep.subr.bf16.mxu0 0
      %1722 = vmatpush1.bf16.msra.mxu0 0
      %1723 = vmatprep.mubr.bf16.mxu0 0
      %1724 = vmatmul.mubr.bf16.gmra.mrb[0].mxu0 %v1627
      %v1725 = vpop.f32.mrb[0].mxu0
      %v1726 = vadd.f32 0.0, %v1725
      %v1727 = vpop.f32.mrb[0].mxu0
      %v1728 = vpop.f32.mrb[0].mxu0
      %v1729 = vadd.f32 0.0, %v1728
      %v1730 = vpop.f32.mrb[0].mxu0
      %1731 = vmatprep.mubr.bf16.mxu0 0
      %1732 = vmatmul.mubr.bf16.gmra.mrb[0].mxu0 %v1628
      %v1733 = vpop.f32.mrb[0].mxu0
      %v1734 = vadd.f32 0.0, %v1733
      %v1735 = vpop.f32.mrb[0].mxu0
      %v1736 = vpop.f32.mrb[0].mxu0
      %v1737 = vadd.f32 0.0, %v1736
      %v1738 = vpop.f32.mrb[0].mxu0
      %1739 = vmatprep.mubr.bf16.mxu0 0
      %1740 = vmatmul.mubr.bf16.gmra.mrb[0].mxu0 %v1629
      %v1741 = vpop.f32.mrb[0].mxu0
      %v1742 = vadd.f32 0.0, %v1741
      %v1743 = vpop.f32.mrb[0].mxu0
      %v1744 = vpop.f32.mrb[0].mxu0
      %v1745 = vadd.f32 0.0, %v1744
      %v1746 = vpop.f32.mrb[0].mxu0
      %1747 = vmatprep.mubr.bf16.mxu0 0
      %1748 = vmatmul.mubr.bf16.gmra.mrb[0].mxu0 %v1630
      %v1749 = vpop.f32.mrb[0].mxu0
      %v1750 = vadd.f32 0.0, %v1749
      %v1751 = vpop.f32.mrb[0].mxu0
      %v1752 = vpop.f32.mrb[0].mxu0
      %v1753 = vadd.f32 0.0, %v1752
      %v1754 = vpop.f32.mrb[0].mxu0
      %1755 = vmatprep.mubr.bf16.mxu0 0
      %1756 = vmatmul.mubr.bf16.gmra.mrb[0].mxu0 %v1631
      %v1757 = vpop.f32.mrb[0].mxu0
      %v1758 = vadd.f32 0.0, %v1757
      %v1759 = vpop.f32.mrb[0].mxu0
      %v1760 = vpop.f32.mrb[0].mxu0
      %v1761 = vadd.f32 0.0, %v1760
      %v1762 = vpop.f32.mrb[0].mxu0
      %1763 = vmatprep.mubr.bf16.mxu0 0
      %1764 = vmatmul.mubr.bf16.gmra.mrb[0].mxu0 %v1632
      %v1765 = vpop.f32.mrb[0].mxu0
      %v1766 = vadd.f32 0.0, %v1765
      %v1767 = vpop.f32.mrb[0].mxu0
      %v1768 = vpop.f32.mrb[0].mxu0
      %v1769 = vadd.f32 0.0, %v1768
      %v1770 = vpop.f32.mrb[0].mxu0
      %1771 = vmatprep.mubr.bf16.mxu0 0
      %1772 = vmatmul.mubr.bf16.gmra.mrb[0].mxu0 %v1633
      %v1773 = vpop.f32.mrb[0].mxu0
      %v1774 = vadd.f32 0.0, %v1773
      %v1775 = vpop.f32.mrb[0].mxu0
      %v1776 = vpop.f32.mrb[0].mxu0
      %v1777 = vadd.f32 0.0, %v1776
      %v1778 = vpop.f32.mrb[0].mxu0
      %1779 = vmatprep.mubr.bf16.mxu0 0
      %1780 = vmatmul.mubr.bf16.gmra.mrb[0].mxu0 %v1634
      %v1781 = vpop.f32.mrb[0].mxu0
      %v1782 = vadd.f32 0.0, %v1781
      %v1783 = vpop.f32.mrb[0].mxu0
      %v1784 = vpop.f32.mrb[0].mxu0
      %v1785 = vadd.f32 0.0, %v1784
      %v1786 = vpop.f32.mrb[0].mxu0
      %1787 = vdwg.mxu0
      %v1788 = vadd.f32 %v1362, %v1726
      %v1789 = vadd.f32 %v1363, %v1729
      %v1790 = vadd.f32 %v1364, %v1734
      %v1791 = vadd.f32 %v1365, %v1737
      %v1792 = vadd.f32 %v1366, %v1742
      %v1793 = vadd.f32 %v1367, %v1745
      %v1794 = vadd.f32 %v1368, %v1750
      %v1795 = vadd.f32 %v1369, %v1753
      %v1796 = vadd.f32 %v1370, %v1758
      %v1797 = vadd.f32 %v1371, %v1761
      %v1798 = vadd.f32 %v1372, %v1766
      %v1799 = vadd.f32 %v1373, %v1769
      %v1800 = vadd.f32 %v1374, %v1774
      %v1801 = vadd.f32 %v1375, %v1777
      %v1802 = vadd.f32 %v1376, %v1782
      %v1803 = vadd.f32 %v1377, %v1785
      %v1804 = vld [vmem:[%s1135] sm:$0xe]
      %v1805 = vld [vmem:[%s1135 + $0xc] sm:$0xe]
      %v1806 = vld [vmem:[%s1135 + $0x18] sm:$0xe]
      %v1807 = vld [vmem:[%s1135 + $0x24] sm:$0xe]
      %v1808 = vld [vmem:[%s1135 + $0x30] sm:$0xe]
      %v1809 = vld [vmem:[%s1135 + $0x3c] sm:$0xe]
      %v1810 = vld [vmem:[%s1135 + $0x48] sm:$0xe]
      %v1811 = vld [vmem:[%s1135 + $0x54] sm:$0xe]
      %v1836 = vrot.slane %v1804, 5
      %v1837 = vrot.slane %v1836, 4
      %v1838 = vrot.slane %v1379, 5
      %v1839 = vsel %vm865, %v1837, %v1838
      %v1840 = vrot.slane %v1838, 4
      %v1841 = vrot.slane %v1380, 5
      %v1842 = vsel %vm865, %v1840, %v1841
      %v1843 = vrot.slane %v1805, 5
      %v1844 = vrot.slane %v1843, 4
      %v1845 = vrot.slane %v1382, 5
      %v1846 = vsel %vm865, %v1844, %v1845
      %v1847 = vrot.slane %v1845, 4
      %v1848 = vrot.slane %v1383, 5
      %v1849 = vsel %vm865, %v1847, %v1848
      %v1850 = vrot.slane %v1806, 5
      %v1851 = vrot.slane %v1850, 4
      %v1852 = vrot.slane %v1385, 5
      %v1853 = vsel %vm865, %v1851, %v1852
      %v1854 = vrot.slane %v1852, 4
      %v1855 = vrot.slane %v1386, 5
      %v1856 = vsel %vm865, %v1854, %v1855
      %v1857 = vrot.slane %v1807, 5
      %v1858 = vrot.slane %v1857, 4
      %v1859 = vrot.slane %v1388, 5
      %v1860 = vsel %vm865, %v1858, %v1859
      %v1861 = vrot.slane %v1859, 4
      %v1862 = vrot.slane %v1389, 5
      %v1863 = vsel %vm865, %v1861, %v1862
      %v1864 = vrot.slane %v1808, 5
      %v1865 = vrot.slane %v1864, 4
      %v1866 = vrot.slane %v1391, 5
      %v1867 = vsel %vm865, %v1865, %v1866
      %v1868 = vrot.slane %v1866, 4
      %v1869 = vrot.slane %v1392, 5
      %v1870 = vsel %vm865, %v1868, %v1869
      %v1871 = vrot.slane %v1809, 5
      %v1872 = vrot.slane %v1871, 4
      %v1873 = vrot.slane %v1394, 5
      %v1874 = vsel %vm865, %v1872, %v1873
      %v1875 = vrot.slane %v1873, 4
      %v1876 = vrot.slane %v1395, 5
      %v1877 = vsel %vm865, %v1875, %v1876
      %v1878 = vrot.slane %v1810, 5
      %v1879 = vrot.slane %v1878, 4
      %v1880 = vrot.slane %v1397, 5
      %v1881 = vsel %vm865, %v1879, %v1880
      %v1882 = vrot.slane %v1880, 4
      %v1883 = vrot.slane %v1398, 5
      %v1884 = vsel %vm865, %v1882, %v1883
      %v1885 = vrot.slane %v1811, 5
      %v1886 = vrot.slane %v1885, 4
      %v1887 = vrot.slane %v1400, 5
      %v1888 = vsel %vm865, %v1886, %v1887
      %v1889 = vrot.slane %v1887, 4
      %v1890 = vrot.slane %v1401, 5
      %v1891 = vsel %vm865, %v1889, %v1890
      %s1892 = scalar_lea.vmem %s1, 320
      %v1893 = vld [vmem:[%s1892] sm:$0xf]
      %v1894 = vld [vmem:[%s1892 + $0x4] sm:$0xf]
      %v1895 = vld [vmem:[%s1892 + $0x8] sm:$0xf]
      %v1896 = vld [vmem:[%s1892 + $0xc] sm:$0xf]
      %v1897 = vld [vmem:[%s1892 + $0x10] sm:$0xf]
      %v1898 = vld [vmem:[%s1892 + $0x14] sm:$0xf]
      %v1899 = vld [vmem:[%s1892 + $0x18] sm:$0xf]
      %v1900 = vld [vmem:[%s1892 + $0x1c] sm:$0xf]
      %v1901 = vld [vmem:[%s1892 + $0x20] sm:$0xf]
      %v1902 = vld [vmem:[%s1892 + $0x24] sm:$0xf]
      %v1903 = vld [vmem:[%s1892 + $0x28] sm:$0xf]
      %v1904 = vld [vmem:[%s1892 + $0x2c] sm:$0xf]
      %v1905 = vld [vmem:[%s1892 + $0x30] sm:$0xf]
      %v1906 = vld [vmem:[%s1892 + $0x34] sm:$0xf]
      %v1907 = vld [vmem:[%s1892 + $0x38] sm:$0xf]
      %v1908 = vld [vmem:[%s1892 + $0x3c] sm:$0xf]
      %v1909 = vunpack.c.l.b16 %v1839
      %v1910 = vunpack.c.l.b16 %v1842
      %v1911 = vunpack.c.l.b16 %v1846
      %v1912 = vunpack.c.l.b16 %v1849
      %v1913 = vunpack.c.l.b16 %v1853
      %v1914 = vunpack.c.l.b16 %v1856
      %v1915 = vunpack.c.l.b16 %v1860
      %v1916 = vunpack.c.l.b16 %v1863
      %v1917 = vunpack.c.l.b16 %v1867
      %v1918 = vunpack.c.l.b16 %v1870
      %v1919 = vunpack.c.l.b16 %v1874
      %v1920 = vunpack.c.l.b16 %v1877
      %v1921 = vunpack.c.l.b16 %v1881
      %v1922 = vunpack.c.l.b16 %v1884
      %v1923 = vunpack.c.l.b16 %v1888
      %v1924 = vunpack.c.l.b16 %v1891
      %v1925 = vpack.c.b16 %v1910, %v1909
      %v1926 = vpack.c.b16 %v1912, %v1911
      %v1927 = vpack.c.b16 %v1914, %v1913
      %v1928 = vpack.c.b16 %v1916, %v1915
      %v1929 = vpack.c.b16 %v1918, %v1917
      %v1930 = vpack.c.b16 %v1920, %v1919
      %v1931 = vpack.c.b16 %v1922, %v1921
      %v1932 = vpack.c.b16 %v1924, %v1923
      %v1957 = vunpack.c.l.b16 %v1893
      %v1958 = vunpack.c.l.b16 %v1894
      %v1959 = vunpack.c.l.b16 %v1895
      %v1960 = vunpack.c.l.b16 %v1896
      %v1961 = vunpack.c.l.b16 %v1897
      %v1962 = vunpack.c.l.b16 %v1898
      %v1963 = vunpack.c.l.b16 %v1899
      %v1964 = vunpack.c.l.b16 %v1900
      %v1965 = vunpack.c.l.b16 %v1901
      %v1966 = vunpack.c.l.b16 %v1902
      %v1967 = vunpack.c.l.b16 %v1903
      %v1968 = vunpack.c.l.b16 %v1904
      %v1969 = vunpack.c.l.b16 %v1905
      %v1970 = vunpack.c.l.b16 %v1906
      %v1971 = vunpack.c.l.b16 %v1907
      %v1972 = vunpack.c.l.b16 %v1908
      %v1973 = vpack.c.b16 %v1958, %v1957
      %v1974 = vpack.c.b16 %v1960, %v1959
      %v1975 = vpack.c.b16 %v1962, %v1961
      %v1976 = vpack.c.b16 %v1964, %v1963
      %v1977 = vpack.c.b16 %v1966, %v1965
      %v1978 = vpack.c.b16 %v1968, %v1967
      %v1979 = vpack.c.b16 %v1970, %v1969
      %v1980 = vpack.c.b16 %v1972, %v1971
      %1989 = vmatprep.subr.bf16.mxu0 0
      %1990 = vmatpush1.bf16.msra.mxu0 %v1973
      %1991 = vmatprep.subr.bf16.mxu0 0
      %1992 = vmatpush1.bf16.msra.mxu0 %v1974
      %1993 = vmatprep.subr.bf16.mxu0 0
      %1994 = vmatpush1.bf16.msra.mxu0 %v1975
      %1995 = vmatprep.subr.bf16.mxu0 0
      %1996 = vmatpush1.bf16.msra.mxu0 %v1976
      %1997 = vmatprep.subr.bf16.mxu0 0
      %1998 = vmatpush1.bf16.msra.mxu0 %v1977
      %1999 = vmatprep.subr.bf16.mxu0 0
      %2000 = vmatpush1.bf16.msra.mxu0 %v1978
      %2001 = vmatprep.subr.bf16.mxu0 0
      %2002 = vmatpush1.bf16.msra.mxu0 %v1979
      %2003 = vmatprep.subr.bf16.mxu0 0
      %2004 = vmatpush1.bf16.msra.mxu0 %v1980
      %2005 = vmatprep.subr.bf16.mxu0 0
      %2006 = vmatpush1.bf16.msra.mxu0 0
      %2007 = vmatprep.subr.bf16.mxu0 0
      %2008 = vmatpush1.bf16.msra.mxu0 0
      %2009 = vmatprep.subr.bf16.mxu0 0
      %2010 = vmatpush1.bf16.msra.mxu0 0
      %2011 = vmatprep.subr.bf16.mxu0 0
      %2012 = vmatpush1.bf16.msra.mxu0 0
      %2013 = vmatprep.subr.bf16.mxu0 0
      %2014 = vmatpush1.bf16.msra.mxu0 0
      %2015 = vmatprep.subr.bf16.mxu0 0
      %2016 = vmatpush1.bf16.msra.mxu0 0
      %2017 = vmatprep.subr.bf16.mxu0 0
      %2018 = vmatpush1.bf16.msra.mxu0 0
      %2019 = vmatprep.subr.bf16.mxu0 0
      %2020 = vmatpush1.bf16.msra.mxu0 0
      %2021 = vmatprep.mubr.bf16.mxu0 0
      %2022 = vmatmul.mubr.bf16.gmra.mrb[0].mxu0 %v1925
      %v2023 = vpop.f32.mrb[0].mxu0
      %v2024 = vadd.f32 0.0, %v2023
      %v2025 = vpop.f32.mrb[0].mxu0
      %v2026 = vpop.f32.mrb[0].mxu0
      %v2027 = vadd.f32 0.0, %v2026
      %v2028 = vpop.f32.mrb[0].mxu0
      %2029 = vmatprep.mubr.bf16.mxu0 0
      %2030 = vmatmul.mubr.bf16.gmra.mrb[0].mxu0 %v1926
      %v2031 = vpop.f32.mrb[0].mxu0
      %v2032 = vadd.f32 0.0, %v2031
      %v2033 = vpop.f32.mrb[0].mxu0
      %v2034 = vpop.f32.mrb[0].mxu0
      %v2035 = vadd.f32 0.0, %v2034
      %v2036 = vpop.f32.mrb[0].mxu0
      %2037 = vmatprep.mubr.bf16.mxu0 0
      %2038 = vmatmul.mubr.bf16.gmra.mrb[0].mxu0 %v1927
      %v2039 = vpop.f32.mrb[0].mxu0
      %v2040 = vadd.f32 0.0, %v2039
      %v2041 = vpop.f32.mrb[0].mxu0
      %v2042 = vpop.f32.mrb[0].mxu0
      %v2043 = vadd.f32 0.0, %v2042
      %v2044 = vpop.f32.mrb[0].mxu0
      %2045 = vmatprep.mubr.bf16.mxu0 0
      %2046 = vmatmul.mubr.bf16.gmra.mrb[0].mxu0 %v1928
      %v2047 = vpop.f32.mrb[0].mxu0
      %v2048 = vadd.f32 0.0, %v2047
      %v2049 = vpop.f32.mrb[0].mxu0
      %v2050 = vpop.f32.mrb[0].mxu0
      %v2051 = vadd.f32 0.0, %v2050
      %v2052 = vpop.f32.mrb[0].mxu0
      %2053 = vmatprep.mubr.bf16.mxu0 0
      %2054 = vmatmul.mubr.bf16.gmra.mrb[0].mxu0 %v1929
      %v2055 = vpop.f32.mrb[0].mxu0
      %v2056 = vadd.f32 0.0, %v2055
      %v2057 = vpop.f32.mrb[0].mxu0
      %v2058 = vpop.f32.mrb[0].mxu0
      %v2059 = vadd.f32 0.0, %v2058
      %v2060 = vpop.f32.mrb[0].mxu0
      %2061 = vmatprep.mubr.bf16.mxu0 0
      %2062 = vmatmul.mubr.bf16.gmra.mrb[0].mxu0 %v1930
      %v2063 = vpop.f32.mrb[0].mxu0
      %v2064 = vadd.f32 0.0, %v2063
      %v2065 = vpop.f32.mrb[0].mxu0
      %v2066 = vpop.f32.mrb[0].mxu0
      %v2067 = vadd.f32 0.0, %v2066
      %v2068 = vpop.f32.mrb[0].mxu0
      %2069 = vmatprep.mubr.bf16.mxu0 0
      %2070 = vmatmul.mubr.bf16.gmra.mrb[0].mxu0 %v1931
      %v2071 = vpop.f32.mrb[0].mxu0
      %v2072 = vadd.f32 0.0, %v2071
      %v2073 = vpop.f32.mrb[0].mxu0
      %v2074 = vpop.f32.mrb[0].mxu0
      %v2075 = vadd.f32 0.0, %v2074
      %v2076 = vpop.f32.mrb[0].mxu0
      %2077 = vmatprep.mubr.bf16.mxu0 0
      %2078 = vmatmul.mubr.bf16.gmra.mrb[0].mxu0 %v1932
      %v2079 = vpop.f32.mrb[0].mxu0
      %v2080 = vadd.f32 0.0, %v2079
      %v2081 = vpop.f32.mrb[0].mxu0
      %v2082 = vpop.f32.mrb[0].mxu0
      %v2083 = vadd.f32 0.0, %v2082
      %v2084 = vpop.f32.mrb[0].mxu0
      %2085 = vdwg.mxu0
      %v2086 = vadd.f32 %v1788, %v2024
      %v2087 = vadd.f32 %v1789, %v2027
      %v2088 = vadd.f32 %v1790, %v2032
      %v2089 = vadd.f32 %v1791, %v2035
      %v2090 = vadd.f32 %v1792, %v2040
      %v2091 = vadd.f32 %v1793, %v2043
      %v2092 = vadd.f32 %v1794, %v2048
      %v2093 = vadd.f32 %v1795, %v2051
      %v2094 = vadd.f32 %v1796, %v2056
      %v2095 = vadd.f32 %v1797, %v2059
      %v2096 = vadd.f32 %v1798, %v2064
      %v2097 = vadd.f32 %v1799, %v2067
      %v2098 = vadd.f32 %v1800, %v2072
      %v2099 = vadd.f32 %v1801, %v2075
      %v2100 = vadd.f32 %v1802, %v2080
      %v2101 = vadd.f32 %v1803, %v2083
      %s2102 = sadd.s32 %s213, 2
      %s2103 = smul.u32 %s2102, 3
      %s2104 = smul.addr %s2103, 4
      %s2105 = scalar_lea.vmem %s191, %s2104
      %v2106 = vld [vmem:[%s2105] sm:$0xf]
      %v2107 = vld [vmem:[%s2105 + $0x4] sm:$0xf]
      %v2108 = vld [vmem:[%s2105 + $0xc] sm:$0xf]
      %v2109 = vld [vmem:[%s2105 + $0x10] sm:$0xf]
      %v2110 = vld [vmem:[%s2105 + $0x18] sm:$0xf]
      %v2111 = vld [vmem:[%s2105 + $0x1c] sm:$0xf]
      %v2112 = vld [vmem:[%s2105 + $0x24] sm:$0xf]
      %v2113 = vld [vmem:[%s2105 + $0x28] sm:$0xf]
      %v2114 = vld [vmem:[%s2105 + $0x30] sm:$0xf]
      %v2115 = vld [vmem:[%s2105 + $0x34] sm:$0xf]
      %v2116 = vld [vmem:[%s2105 + $0x3c] sm:$0xf]
      %v2117 = vld [vmem:[%s2105 + $0x40] sm:$0xf]
      %v2118 = vld [vmem:[%s2105 + $0x48] sm:$0xf]
      %v2119 = vld [vmem:[%s2105 + $0x4c] sm:$0xf]
      %v2120 = vld [vmem:[%s2105 + $0x54] sm:$0xf]
      %v2121 = vld [vmem:[%s2105 + $0x58] sm:$0xf]
      %s2122 = scalar_lea.vmem %s1, 384
      %v2123 = vld [vmem:[%s2122] sm:$0xf]
      %v2124 = vld [vmem:[%s2122 + $0x4] sm:$0xf]
      %v2125 = vld [vmem:[%s2122 + $0x8] sm:$0xf]
      %v2126 = vld [vmem:[%s2122 + $0xc] sm:$0xf]
      %v2127 = vld [vmem:[%s2122 + $0x10] sm:$0xf]
      %v2128 = vld [vmem:[%s2122 + $0x14] sm:$0xf]
      %v2129 = vld [vmem:[%s2122 + $0x18] sm:$0xf]
      %v2130 = vld [vmem:[%s2122 + $0x1c] sm:$0xf]
      %v2131 = vld [vmem:[%s2122 + $0x20] sm:$0xf]
      %v2132 = vld [vmem:[%s2122 + $0x24] sm:$0xf]
      %v2133 = vld [vmem:[%s2122 + $0x28] sm:$0xf]
      %v2134 = vld [vmem:[%s2122 + $0x2c] sm:$0xf]
      %v2135 = vld [vmem:[%s2122 + $0x30] sm:$0xf]
      %v2136 = vld [vmem:[%s2122 + $0x34] sm:$0xf]
      %v2137 = vld [vmem:[%s2122 + $0x38] sm:$0xf]
      %v2138 = vld [vmem:[%s2122 + $0x3c] sm:$0xf]
      %v2155 = vunpack.c.l.b16 %v2106
      %v2156 = vunpack.c.l.b16 %v2107
      %v2157 = vunpack.c.l.b16 %v2108
      %v2158 = vunpack.c.l.b16 %v2109
      %v2159 = vunpack.c.l.b16 %v2110
      %v2160 = vunpack.c.l.b16 %v2111
      %v2161 = vunpack.c.l.b16 %v2112
      %v2162 = vunpack.c.l.b16 %v2113
      %v2163 = vunpack.c.l.b16 %v2114
      %v2164 = vunpack.c.l.b16 %v2115
      %v2165 = vunpack.c.l.b16 %v2116
      %v2166 = vunpack.c.l.b16 %v2117
      %v2167 = vunpack.c.l.b16 %v2118
      %v2168 = vunpack.c.l.b16 %v2119
      %v2169 = vunpack.c.l.b16 %v2120
      %v2170 = vunpack.c.l.b16 %v2121
      %v2171 = vpack.c.b16 %v2156, %v2155
      %v2172 = vpack.c.b16 %v2158, %v2157
      %v2173 = vpack.c.b16 %v2160, %v2159
      %v2174 = vpack.c.b16 %v2162, %v2161
      %v2175 = vpack.c.b16 %v2164, %v2163
      %v2176 = vpack.c.b16 %v2166, %v2165
      %v2177 = vpack.c.b16 %v2168, %v2167
      %v2178 = vpack.c.b16 %v2170, %v2169
      %v2203 = vunpack.c.l.b16 %v2123
      %v2204 = vunpack.c.l.b16 %v2124
      %v2205 = vunpack.c.l.b16 %v2125
      %v2206 = vunpack.c.l.b16 %v2126
      %v2207 = vunpack.c.l.b16 %v2127
      %v2208 = vunpack.c.l.b16 %v2128
      %v2209 = vunpack.c.l.b16 %v2129
      %v2210 = vunpack.c.l.b16 %v2130
      %v2211 = vunpack.c.l.b16 %v2131
      %v2212 = vunpack.c.l.b16 %v2132
      %v2213 = vunpack.c.l.b16 %v2133
      %v2214 = vunpack.c.l.b16 %v2134
      %v2215 = vunpack.c.l.b16 %v2135
      %v2216 = vunpack.c.l.b16 %v2136
      %v2217 = vunpack.c.l.b16 %v2137
      %v2218 = vunpack.c.l.b16 %v2138
      %v2219 = vpack.c.b16 %v2204, %v2203
      %v2220 = vpack.c.b16 %v2206, %v2205
      %v2221 = vpack.c.b16 %v2208, %v2207
      %v2222 = vpack.c.b16 %v2210, %v2209
      %v2223 = vpack.c.b16 %v2212, %v2211
      %v2224 = vpack.c.b16 %v2214, %v2213
      %v2225 = vpack.c.b16 %v2216, %v2215
      %v2226 = vpack.c.b16 %v2218, %v2217
      %2235 = vmatprep.subr.bf16.mxu0 0
      %2236 = vmatpush1.bf16.msra.mxu0 %v2219
      %2237 = vmatprep.subr.bf16.mxu0 0
      %2238 = vmatpush1.bf16.msra.mxu0 %v2220
      %2239 = vmatprep.subr.bf16.mxu0 0
      %2240 = vmatpush1.bf16.msra.mxu0 %v2221
      %2241 = vmatprep.subr.bf16.mxu0 0
      %2242 = vmatpush1.bf16.msra.mxu0 %v2222
      %2243 = vmatprep.subr.bf16.mxu0 0
      %2244 = vmatpush1.bf16.msra.mxu0 %v2223
      %2245 = vmatprep.subr.bf16.mxu0 0
      %2246 = vmatpush1.bf16.msra.mxu0 %v2224
      %2247 = vmatprep.subr.bf16.mxu0 0
      %2248 = vmatpush1.bf16.msra.mxu0 %v2225
      %2249 = vmatprep.subr.bf16.mxu0 0
      %2250 = vmatpush1.bf16.msra.mxu0 %v2226
      %2251 = vmatprep.subr.bf16.mxu0 0
      %2252 = vmatpush1.bf16.msra.mxu0 0
      %2253 = vmatprep.subr.bf16.mxu0 0
      %2254 = vmatpush1.bf16.msra.mxu0 0
      %2255 = vmatprep.subr.bf16.mxu0 0
      %2256 = vmatpush1.bf16.msra.mxu0 0
      %2257 = vmatprep.subr.bf16.mxu0 0
      %2258 = vmatpush1.bf16.msra.mxu0 0
      %2259 = vmatprep.subr.bf16.mxu0 0
      %2260 = vmatpush1.bf16.msra.mxu0 0
      %2261 = vmatprep.subr.bf16.mxu0 0
      %2262 = vmatpush1.bf16.msra.mxu0 0
      %2263 = vmatprep.subr.bf16.mxu0 0
      %2264 = vmatpush1.bf16.msra.mxu0 0
      %2265 = vmatprep.subr.bf16.mxu0 0
      %2266 = vmatpush1.bf16.msra.mxu0 0
      %2267 = vmatprep.mubr.bf16.mxu0 0
      %2268 = vmatmul.mubr.bf16.gmra.mrb[0].mxu0 %v2171
      %v2269 = vpop.f32.mrb[0].mxu0
      %v2270 = vadd.f32 0.0, %v2269
      %v2271 = vpop.f32.mrb[0].mxu0
      %v2272 = vpop.f32.mrb[0].mxu0
      %v2273 = vadd.f32 0.0, %v2272
      %v2274 = vpop.f32.mrb[0].mxu0
      %2275 = vmatprep.mubr.bf16.mxu0 0
      %2276 = vmatmul.mubr.bf16.gmra.mrb[0].mxu0 %v2172
      %v2277 = vpop.f32.mrb[0].mxu0
      %v2278 = vadd.f32 0.0, %v2277
      %v2279 = vpop.f32.mrb[0].mxu0
      %v2280 = vpop.f32.mrb[0].mxu0
      %v2281 = vadd.f32 0.0, %v2280
      %v2282 = vpop.f32.mrb[0].mxu0
      %2283 = vmatprep.mubr.bf16.mxu0 0
      %2284 = vmatmul.mubr.bf16.gmra.mrb[0].mxu0 %v2173
      %v2285 = vpop.f32.mrb[0].mxu0
      %v2286 = vadd.f32 0.0, %v2285
      %v2287 = vpop.f32.mrb[0].mxu0
      %v2288 = vpop.f32.mrb[0].mxu0
      %v2289 = vadd.f32 0.0, %v2288
      %v2290 = vpop.f32.mrb[0].mxu0
      %2291 = vmatprep.mubr.bf16.mxu0 0
      %2292 = vmatmul.mubr.bf16.gmra.mrb[0].mxu0 %v2174
      %v2293 = vpop.f32.mrb[0].mxu0
      %v2294 = vadd.f32 0.0, %v2293
      %v2295 = vpop.f32.mrb[0].mxu0
      %v2296 = vpop.f32.mrb[0].mxu0
      %v2297 = vadd.f32 0.0, %v2296
      %v2298 = vpop.f32.mrb[0].mxu0
      %2299 = vmatprep.mubr.bf16.mxu0 0
      %2300 = vmatmul.mubr.bf16.gmra.mrb[0].mxu0 %v2175
      %v2301 = vpop.f32.mrb[0].mxu0
      %v2302 = vadd.f32 0.0, %v2301
      %v2303 = vpop.f32.mrb[0].mxu0
      %v2304 = vpop.f32.mrb[0].mxu0
      %v2305 = vadd.f32 0.0, %v2304
      %v2306 = vpop.f32.mrb[0].mxu0
      %2307 = vmatprep.mubr.bf16.mxu0 0
      %2308 = vmatmul.mubr.bf16.gmra.mrb[0].mxu0 %v2176
      %v2309 = vpop.f32.mrb[0].mxu0
      %v2310 = vadd.f32 0.0, %v2309
      %v2311 = vpop.f32.mrb[0].mxu0
      %v2312 = vpop.f32.mrb[0].mxu0
      %v2313 = vadd.f32 0.0, %v2312
      %v2314 = vpop.f32.mrb[0].mxu0
      %2315 = vmatprep.mubr.bf16.mxu0 0
      %2316 = vmatmul.mubr.bf16.gmra.mrb[0].mxu0 %v2177
      %v2317 = vpop.f32.mrb[0].mxu0
      %v2318 = vadd.f32 0.0, %v2317
      %v2319 = vpop.f32.mrb[0].mxu0
      %v2320 = vpop.f32.mrb[0].mxu0
      %v2321 = vadd.f32 0.0, %v2320
      %v2322 = vpop.f32.mrb[0].mxu0
      %2323 = vmatprep.mubr.bf16.mxu0 0
      %2324 = vmatmul.mubr.bf16.gmra.mrb[0].mxu0 %v2178
      %v2325 = vpop.f32.mrb[0].mxu0
      %v2326 = vadd.f32 0.0, %v2325
      %v2327 = vpop.f32.mrb[0].mxu0
      %v2328 = vpop.f32.mrb[0].mxu0
      %v2329 = vadd.f32 0.0, %v2328
      %v2330 = vpop.f32.mrb[0].mxu0
      %2331 = vdwg.mxu0
      %v2332 = vadd.f32 %v2086, %v2270
      %v2333 = vadd.f32 %v2087, %v2273
      %v2334 = vadd.f32 %v2088, %v2278
      %v2335 = vadd.f32 %v2089, %v2281
      %v2336 = vadd.f32 %v2090, %v2286
      %v2337 = vadd.f32 %v2091, %v2289
      %v2338 = vadd.f32 %v2092, %v2294
      %v2339 = vadd.f32 %v2093, %v2297
      %v2340 = vadd.f32 %v2094, %v2302
      %v2341 = vadd.f32 %v2095, %v2305
      %v2342 = vadd.f32 %v2096, %v2310
      %v2343 = vadd.f32 %v2097, %v2313
      %v2344 = vadd.f32 %v2098, %v2318
      %v2345 = vadd.f32 %v2099, %v2321
      %v2346 = vadd.f32 %v2100, %v2326
      %v2347 = vadd.f32 %v2101, %v2329
      %v2348 = vld [vmem:[%s2105] sm:$0xf]
      %v2349 = vld [vmem:[%s2105 + $0x4] sm:$0xf]
      %v2350 = vld [vmem:[%s2105 + $0x8] sm:$0x1]
      %v2351 = vld [vmem:[%s2105 + $0xc] sm:$0xf]
      %v2352 = vld [vmem:[%s2105 + $0x10] sm:$0xf]
      %v2353 = vld [vmem:[%s2105 + $0x14] sm:$0x1]
      %v2354 = vld [vmem:[%s2105 + $0x18] sm:$0xf]
      %v2355 = vld [vmem:[%s2105 + $0x1c] sm:$0xf]
      %v2356 = vld [vmem:[%s2105 + $0x20] sm:$0x1]
      %v2357 = vld [vmem:[%s2105 + $0x24] sm:$0xf]
      %v2358 = vld [vmem:[%s2105 + $0x28] sm:$0xf]
      %v2359 = vld [vmem:[%s2105 + $0x2c] sm:$0x1]
      %v2360 = vld [vmem:[%s2105 + $0x30] sm:$0xf]
      %v2361 = vld [vmem:[%s2105 + $0x34] sm:$0xf]
      %v2362 = vld [vmem:[%s2105 + $0x38] sm:$0x1]
      %v2363 = vld [vmem:[%s2105 + $0x3c] sm:$0xf]
      %v2364 = vld [vmem:[%s2105 + $0x40] sm:$0xf]
      %v2365 = vld [vmem:[%s2105 + $0x44] sm:$0x1]
      %v2366 = vld [vmem:[%s2105 + $0x48] sm:$0xf]
      %v2367 = vld [vmem:[%s2105 + $0x4c] sm:$0xf]
      %v2368 = vld [vmem:[%s2105 + $0x50] sm:$0x1]
      %v2369 = vld [vmem:[%s2105 + $0x54] sm:$0xf]
      %v2370 = vld [vmem:[%s2105 + $0x58] sm:$0xf]
      %v2371 = vld [vmem:[%s2105 + $0x5c] sm:$0x1]
      %v2373 = vshrl.u32 %v2348, 16
      %v2375 = vrot.slane %v2373, 4
      %v2376 = vshll.u32 %v2348, 16
      %v2378 = vrot.slane %v2376, 5
      %v2379 = vor.u32 %v2375, %v2378
      %v2380 = vrot.slane %v2379, 4
      %v2382 = vshll.u32 %v2349, 16
      %v2384 = vrot.slane %v2382, 5
      %v2385 = vsel %vm259, %v2380, %v2384
      %v2386 = vshrl.u32 %v2349, 16
      %v2388 = vrot.slane %v2386, 4
      %v2389 = vor.u32 %v2388, %v2384
      %v2390 = vrot.slane %v2389, 4
      %v2392 = vshll.u32 %v2350, 16
      %v2394 = vrot.slane %v2392, 5
      %v2395 = vsel %vm259, %v2390, %v2394
      %v2397 = vshrl.u32 %v2351, 16
      %v2399 = vrot.slane %v2397, 4
      %v2400 = vshll.u32 %v2351, 16
      %v2402 = vrot.slane %v2400, 5
      %v2403 = vor.u32 %v2399, %v2402
      %v2404 = vrot.slane %v2403, 4
      %v2406 = vshll.u32 %v2352, 16
      %v2408 = vrot.slane %v2406, 5
      %v2409 = vsel %vm259, %v2404, %v2408
      %v2410 = vshrl.u32 %v2352, 16
      %v2412 = vrot.slane %v2410, 4
      %v2413 = vor.u32 %v2412, %v2408
      %v2414 = vrot.slane %v2413, 4
      %v2416 = vshll.u32 %v2353, 16
      %v2418 = vrot.slane %v2416, 5
      %v2419 = vsel %vm259, %v2414, %v2418
      %v2421 = vshrl.u32 %v2354, 16
      %v2423 = vrot.slane %v2421, 4
      %v2424 = vshll.u32 %v2354, 16
      %v2426 = vrot.slane %v2424, 5
      %v2427 = vor.u32 %v2423, %v2426
      %v2428 = vrot.slane %v2427, 4
      %v2430 = vshll.u32 %v2355, 16
      %v2432 = vrot.slane %v2430, 5
      %v2433 = vsel %vm259, %v2428, %v2432
      %v2434 = vshrl.u32 %v2355, 16
      %v2436 = vrot.slane %v2434, 4
      %v2437 = vor.u32 %v2436, %v2432
      %v2438 = vrot.slane %v2437, 4
      %v2440 = vshll.u32 %v2356, 16
      %v2442 = vrot.slane %v2440, 5
      %v2443 = vsel %vm259, %v2438, %v2442
      %v2445 = vshrl.u32 %v2357, 16
      %v2447 = vrot.slane %v2445, 4
      %v2448 = vshll.u32 %v2357, 16
      %v2450 = vrot.slane %v2448, 5
      %v2451 = vor.u32 %v2447, %v2450
      %v2452 = vrot.slane %v2451, 4
      %v2454 = vshll.u32 %v2358, 16
      %v2456 = vrot.slane %v2454, 5
      %v2457 = vsel %vm259, %v2452, %v2456
      %v2458 = vshrl.u32 %v2358, 16
      %v2460 = vrot.slane %v2458, 4
      %v2461 = vor.u32 %v2460, %v2456
      %v2462 = vrot.slane %v2461, 4
      %v2464 = vshll.u32 %v2359, 16
      %v2466 = vrot.slane %v2464, 5
      %v2467 = vsel %vm259, %v2462, %v2466
      %v2469 = vshrl.u32 %v2360, 16
      %v2471 = vrot.slane %v2469, 4
      %v2472 = vshll.u32 %v2360, 16
      %v2474 = vrot.slane %v2472, 5
      %v2475 = vor.u32 %v2471, %v2474
      %v2476 = vrot.slane %v2475, 4
      %v2478 = vshll.u32 %v2361, 16
      %v2480 = vrot.slane %v2478, 5
      %v2481 = vsel %vm259, %v2476, %v2480
      %v2482 = vshrl.u32 %v2361, 16
      %v2484 = vrot.slane %v2482, 4
      %v2485 = vor.u32 %v2484, %v2480
      %v2486 = vrot.slane %v2485, 4
      %v2488 = vshll.u32 %v2362, 16
      %v2490 = vrot.slane %v2488, 5
      %v2491 = vsel %vm259, %v2486, %v2490
      %v2493 = vshrl.u32 %v2363, 16
      %v2495 = vrot.slane %v2493, 4
      %v2496 = vshll.u32 %v2363, 16
      %v2498 = vrot.slane %v2496, 5
      %v2499 = vor.u32 %v2495, %v2498
      %v2500 = vrot.slane %v2499, 4
      %v2502 = vshll.u32 %v2364, 16
      %v2504 = vrot.slane %v2502, 5
      %v2505 = vsel %vm259, %v2500, %v2504
      %v2506 = vshrl.u32 %v2364, 16
      %v2508 = vrot.slane %v2506, 4
      %v2509 = vor.u32 %v2508, %v2504
      %v2510 = vrot.slane %v2509, 4
      %v2512 = vshll.u32 %v2365, 16
      %v2514 = vrot.slane %v2512, 5
      %v2515 = vsel %vm259, %v2510, %v2514
      %v2517 = vshrl.u32 %v2366, 16
      %v2519 = vrot.slane %v2517, 4
      %v2520 = vshll.u32 %v2366, 16
      %v2522 = vrot.slane %v2520, 5
      %v2523 = vor.u32 %v2519, %v2522
      %v2524 = vrot.slane %v2523, 4
      %v2526 = vshll.u32 %v2367, 16
      %v2528 = vrot.slane %v2526, 5
      %v2529 = vsel %vm259, %v2524, %v2528
      %v2530 = vshrl.u32 %v2367, 16
      %v2532 = vrot.slane %v2530, 4
      %v2533 = vor.u32 %v2532, %v2528
      %v2534 = vrot.slane %v2533, 4
      %v2536 = vshll.u32 %v2368, 16
      %v2538 = vrot.slane %v2536, 5
      %v2539 = vsel %vm259, %v2534, %v2538
      %v2541 = vshrl.u32 %v2369, 16
      %v2543 = vrot.slane %v2541, 4
      %v2544 = vshll.u32 %v2369, 16
      %v2546 = vrot.slane %v2544, 5
      %v2547 = vor.u32 %v2543, %v2546
      %v2548 = vrot.slane %v2547, 4
      %v2550 = vshll.u32 %v2370, 16
      %v2552 = vrot.slane %v2550, 5
      %v2553 = vsel %vm259, %v2548, %v2552
      %v2554 = vshrl.u32 %v2370, 16
      %v2556 = vrot.slane %v2554, 4
      %v2557 = vor.u32 %v2556, %v2552
      %v2558 = vrot.slane %v2557, 4
      %v2560 = vshll.u32 %v2371, 16
      %v2562 = vrot.slane %v2560, 5
      %v2563 = vsel %vm259, %v2558, %v2562
      %s2564 = scalar_lea.vmem %s1, 448
      %v2565 = vld [vmem:[%s2564] sm:$0xf]
      %v2566 = vld [vmem:[%s2564 + $0x4] sm:$0xf]
      %v2567 = vld [vmem:[%s2564 + $0x8] sm:$0xf]
      %v2568 = vld [vmem:[%s2564 + $0xc] sm:$0xf]
      %v2569 = vld [vmem:[%s2564 + $0x10] sm:$0xf]
      %v2570 = vld [vmem:[%s2564 + $0x14] sm:$0xf]
      %v2571 = vld [vmem:[%s2564 + $0x18] sm:$0xf]
      %v2572 = vld [vmem:[%s2564 + $0x1c] sm:$0xf]
      %v2573 = vld [vmem:[%s2564 + $0x20] sm:$0xf]
      %v2574 = vld [vmem:[%s2564 + $0x24] sm:$0xf]
      %v2575 = vld [vmem:[%s2564 + $0x28] sm:$0xf]
      %v2576 = vld [vmem:[%s2564 + $0x2c] sm:$0xf]
      %v2577 = vld [vmem:[%s2564 + $0x30] sm:$0xf]
      %v2578 = vld [vmem:[%s2564 + $0x34] sm:$0xf]
      %v2579 = vld [vmem:[%s2564 + $0x38] sm:$0xf]
      %v2580 = vld [vmem:[%s2564 + $0x3c] sm:$0xf]
      %v2581 = vunpack.c.l.b16 %v2385
      %v2582 = vunpack.c.l.b16 %v2395
      %v2583 = vunpack.c.l.b16 %v2409
      %v2584 = vunpack.c.l.b16 %v2419
      %v2585 = vunpack.c.l.b16 %v2433
      %v2586 = vunpack.c.l.b16 %v2443
      %v2587 = vunpack.c.l.b16 %v2457
      %v2588 = vunpack.c.l.b16 %v2467
      %v2589 = vunpack.c.l.b16 %v2481
      %v2590 = vunpack.c.l.b16 %v2491
      %v2591 = vunpack.c.l.b16 %v2505
      %v2592 = vunpack.c.l.b16 %v2515
      %v2593 = vunpack.c.l.b16 %v2529
      %v2594 = vunpack.c.l.b16 %v2539
      %v2595 = vunpack.c.l.b16 %v2553
      %v2596 = vunpack.c.l.b16 %v2563
      %v2597 = vpack.c.b16 %v2582, %v2581
      %v2598 = vpack.c.b16 %v2584, %v2583
      %v2599 = vpack.c.b16 %v2586, %v2585
      %v2600 = vpack.c.b16 %v2588, %v2587
      %v2601 = vpack.c.b16 %v2590, %v2589
      %v2602 = vpack.c.b16 %v2592, %v2591
      %v2603 = vpack.c.b16 %v2594, %v2593
      %v2604 = vpack.c.b16 %v2596, %v2595
      %v2629 = vunpack.c.l.b16 %v2565
      %v2630 = vunpack.c.l.b16 %v2566
      %v2631 = vunpack.c.l.b16 %v2567
      %v2632 = vunpack.c.l.b16 %v2568
      %v2633 = vunpack.c.l.b16 %v2569
      %v2634 = vunpack.c.l.b16 %v2570
      %v2635 = vunpack.c.l.b16 %v2571
      %v2636 = vunpack.c.l.b16 %v2572
      %v2637 = vunpack.c.l.b16 %v2573
      %v2638 = vunpack.c.l.b16 %v2574
      %v2639 = vunpack.c.l.b16 %v2575
      %v2640 = vunpack.c.l.b16 %v2576
      %v2641 = vunpack.c.l.b16 %v2577
      %v2642 = vunpack.c.l.b16 %v2578
      %v2643 = vunpack.c.l.b16 %v2579
      %v2644 = vunpack.c.l.b16 %v2580
      %v2645 = vpack.c.b16 %v2630, %v2629
      %v2646 = vpack.c.b16 %v2632, %v2631
      %v2647 = vpack.c.b16 %v2634, %v2633
      %v2648 = vpack.c.b16 %v2636, %v2635
      %v2649 = vpack.c.b16 %v2638, %v2637
      %v2650 = vpack.c.b16 %v2640, %v2639
      %v2651 = vpack.c.b16 %v2642, %v2641
      %v2652 = vpack.c.b16 %v2644, %v2643
      %2661 = vmatprep.subr.bf16.mxu0 0
      %2662 = vmatpush1.bf16.msra.mxu0 %v2645
      %2663 = vmatprep.subr.bf16.mxu0 0
      %2664 = vmatpush1.bf16.msra.mxu0 %v2646
      %2665 = vmatprep.subr.bf16.mxu0 0
      %2666 = vmatpush1.bf16.msra.mxu0 %v2647
      %2667 = vmatprep.subr.bf16.mxu0 0
      %2668 = vmatpush1.bf16.msra.mxu0 %v2648
      %2669 = vmatprep.subr.bf16.mxu0 0
      %2670 = vmatpush1.bf16.msra.mxu0 %v2649
      %2671 = vmatprep.subr.bf16.mxu0 0
      %2672 = vmatpush1.bf16.msra.mxu0 %v2650
      %2673 = vmatprep.subr.bf16.mxu0 0
      %2674 = vmatpush1.bf16.msra.mxu0 %v2651
      %2675 = vmatprep.subr.bf16.mxu0 0
      %2676 = vmatpush1.bf16.msra.mxu0 %v2652
      %2677 = vmatprep.subr.bf16.mxu0 0
      %2678 = vmatpush1.bf16.msra.mxu0 0
      %2679 = vmatprep.subr.bf16.mxu0 0
      %2680 = vmatpush1.bf16.msra.mxu0 0
      %2681 = vmatprep.subr.bf16.mxu0 0
      %2682 = vmatpush1.bf16.msra.mxu0 0
      %2683 = vmatprep.subr.bf16.mxu0 0
      %2684 = vmatpush1.bf16.msra.mxu0 0
      %2685 = vmatprep.subr.bf16.mxu0 0
      %2686 = vmatpush1.bf16.msra.mxu0 0
      %2687 = vmatprep.subr.bf16.mxu0 0
      %2688 = vmatpush1.bf16.msra.mxu0 0
      %2689 = vmatprep.subr.bf16.mxu0 0
      %2690 = vmatpush1.bf16.msra.mxu0 0
      %2691 = vmatprep.subr.bf16.mxu0 0
      %2692 = vmatpush1.bf16.msra.mxu0 0
      %2693 = vmatprep.mubr.bf16.mxu0 0
      %2694 = vmatmul.mubr.bf16.gmra.mrb[0].mxu0 %v2597
      %v2695 = vpop.f32.mrb[0].mxu0
      %v2696 = vadd.f32 0.0, %v2695
      %v2697 = vpop.f32.mrb[0].mxu0
      %v2698 = vpop.f32.mrb[0].mxu0
      %v2699 = vadd.f32 0.0, %v2698
      %v2700 = vpop.f32.mrb[0].mxu0
      %2701 = vmatprep.mubr.bf16.mxu0 0
      %2702 = vmatmul.mubr.bf16.gmra.mrb[0].mxu0 %v2598
      %v2703 = vpop.f32.mrb[0].mxu0
      %v2704 = vadd.f32 0.0, %v2703
      %v2705 = vpop.f32.mrb[0].mxu0
      %v2706 = vpop.f32.mrb[0].mxu0
      %v2707 = vadd.f32 0.0, %v2706
      %v2708 = vpop.f32.mrb[0].mxu0
      %2709 = vmatprep.mubr.bf16.mxu0 0
      %2710 = vmatmul.mubr.bf16.gmra.mrb[0].mxu0 %v2599
      %v2711 = vpop.f32.mrb[0].mxu0
      %v2712 = vadd.f32 0.0, %v2711
      %v2713 = vpop.f32.mrb[0].mxu0
      %v2714 = vpop.f32.mrb[0].mxu0
      %v2715 = vadd.f32 0.0, %v2714
      %v2716 = vpop.f32.mrb[0].mxu0
      %2717 = vmatprep.mubr.bf16.mxu0 0
      %2718 = vmatmul.mubr.bf16.gmra.mrb[0].mxu0 %v2600
      %v2719 = vpop.f32.mrb[0].mxu0
      %v2720 = vadd.f32 0.0, %v2719
      %v2721 = vpop.f32.mrb[0].mxu0
      %v2722 = vpop.f32.mrb[0].mxu0
      %v2723 = vadd.f32 0.0, %v2722
      %v2724 = vpop.f32.mrb[0].mxu0
      %2725 = vmatprep.mubr.bf16.mxu0 0
      %2726 = vmatmul.mubr.bf16.gmra.mrb[0].mxu0 %v2601
      %v2727 = vpop.f32.mrb[0].mxu0
      %v2728 = vadd.f32 0.0, %v2727
      %v2729 = vpop.f32.mrb[0].mxu0
      %v2730 = vpop.f32.mrb[0].mxu0
      %v2731 = vadd.f32 0.0, %v2730
      %v2732 = vpop.f32.mrb[0].mxu0
      %2733 = vmatprep.mubr.bf16.mxu0 0
      %2734 = vmatmul.mubr.bf16.gmra.mrb[0].mxu0 %v2602
      %v2735 = vpop.f32.mrb[0].mxu0
      %v2736 = vadd.f32 0.0, %v2735
      %v2737 = vpop.f32.mrb[0].mxu0
      %v2738 = vpop.f32.mrb[0].mxu0
      %v2739 = vadd.f32 0.0, %v2738
      %v2740 = vpop.f32.mrb[0].mxu0
      %2741 = vmatprep.mubr.bf16.mxu0 0
      %2742 = vmatmul.mubr.bf16.gmra.mrb[0].mxu0 %v2603
      %v2743 = vpop.f32.mrb[0].mxu0
      %v2744 = vadd.f32 0.0, %v2743
      %v2745 = vpop.f32.mrb[0].mxu0
      %v2746 = vpop.f32.mrb[0].mxu0
      %v2747 = vadd.f32 0.0, %v2746
      %v2748 = vpop.f32.mrb[0].mxu0
      %2749 = vmatprep.mubr.bf16.mxu0 0
      %2750 = vmatmul.mubr.bf16.gmra.mrb[0].mxu0 %v2604
      %v2751 = vpop.f32.mrb[0].mxu0
      %v2752 = vadd.f32 0.0, %v2751
      %v2753 = vpop.f32.mrb[0].mxu0
      %v2754 = vpop.f32.mrb[0].mxu0
      %v2755 = vadd.f32 0.0, %v2754
      %v2756 = vpop.f32.mrb[0].mxu0
      %2757 = vdwg.mxu0
      %v2758 = vadd.f32 %v2332, %v2696
      %v2759 = vadd.f32 %v2333, %v2699
      %v2760 = vadd.f32 %v2334, %v2704
      %v2761 = vadd.f32 %v2335, %v2707
      %v2762 = vadd.f32 %v2336, %v2712
      %v2763 = vadd.f32 %v2337, %v2715
      %v2764 = vadd.f32 %v2338, %v2720
      %v2765 = vadd.f32 %v2339, %v2723
      %v2766 = vadd.f32 %v2340, %v2728
      %v2767 = vadd.f32 %v2341, %v2731
      %v2768 = vadd.f32 %v2342, %v2736
      %v2769 = vadd.f32 %v2343, %v2739
      %v2770 = vadd.f32 %v2344, %v2744
      %v2771 = vadd.f32 %v2345, %v2747
      %v2772 = vadd.f32 %v2346, %v2752
      %v2773 = vadd.f32 %v2347, %v2755
      %v2774 = vld [vmem:[%s2105] sm:$0xe]
      %v2775 = vld [vmem:[%s2105 + $0xc] sm:$0xe]
      %v2776 = vld [vmem:[%s2105 + $0x18] sm:$0xe]
      %v2777 = vld [vmem:[%s2105 + $0x24] sm:$0xe]
      %v2778 = vld [vmem:[%s2105 + $0x30] sm:$0xe]
      %v2779 = vld [vmem:[%s2105 + $0x3c] sm:$0xe]
      %v2780 = vld [vmem:[%s2105 + $0x48] sm:$0xe]
      %v2781 = vld [vmem:[%s2105 + $0x54] sm:$0xe]
      %v2806 = vrot.slane %v2774, 5
      %v2807 = vrot.slane %v2806, 4
      %v2808 = vrot.slane %v2349, 5
      %v2809 = vsel %vm865, %v2807, %v2808
      %v2810 = vrot.slane %v2808, 4
      %v2811 = vrot.slane %v2350, 5
      %v2812 = vsel %vm865, %v2810, %v2811
      %v2813 = vrot.slane %v2775, 5
      %v2814 = vrot.slane %v2813, 4
      %v2815 = vrot.slane %v2352, 5
      %v2816 = vsel %vm865, %v2814, %v2815
      %v2817 = vrot.slane %v2815, 4
      %v2818 = vrot.slane %v2353, 5
      %v2819 = vsel %vm865, %v2817, %v2818
      %v2820 = vrot.slane %v2776, 5
      %v2821 = vrot.slane %v2820, 4
      %v2822 = vrot.slane %v2355, 5
      %v2823 = vsel %vm865, %v2821, %v2822
      %v2824 = vrot.slane %v2822, 4
      %v2825 = vrot.slane %v2356, 5
      %v2826 = vsel %vm865, %v2824, %v2825
      %v2827 = vrot.slane %v2777, 5
      %v2828 = vrot.slane %v2827, 4
      %v2829 = vrot.slane %v2358, 5
      %v2830 = vsel %vm865, %v2828, %v2829
      %v2831 = vrot.slane %v2829, 4
      %v2832 = vrot.slane %v2359, 5
      %v2833 = vsel %vm865, %v2831, %v2832
      %v2834 = vrot.slane %v2778, 5
      %v2835 = vrot.slane %v2834, 4
      %v2836 = vrot.slane %v2361, 5
      %v2837 = vsel %vm865, %v2835, %v2836
      %v2838 = vrot.slane %v2836, 4
      %v2839 = vrot.slane %v2362, 5
      %v2840 = vsel %vm865, %v2838, %v2839
      %v2841 = vrot.slane %v2779, 5
      %v2842 = vrot.slane %v2841, 4
      %v2843 = vrot.slane %v2364, 5
      %v2844 = vsel %vm865, %v2842, %v2843
      %v2845 = vrot.slane %v2843, 4
      %v2846 = vrot.slane %v2365, 5
      %v2847 = vsel %vm865, %v2845, %v2846
      %v2848 = vrot.slane %v2780, 5
      %v2849 = vrot.slane %v2848, 4
      %v2850 = vrot.slane %v2367, 5
      %v2851 = vsel %vm865, %v2849, %v2850
      %v2852 = vrot.slane %v2850, 4
      %v2853 = vrot.slane %v2368, 5
      %v2854 = vsel %vm865, %v2852, %v2853
      %v2855 = vrot.slane %v2781, 5
      %v2856 = vrot.slane %v2855, 4
      %v2857 = vrot.slane %v2370, 5
      %v2858 = vsel %vm865, %v2856, %v2857
      %v2859 = vrot.slane %v2857, 4
      %v2860 = vrot.slane %v2371, 5
      %v2861 = vsel %vm865, %v2859, %v2860
      %s2862 = scalar_lea.vmem %s1, 512
      %v2863 = vld [vmem:[%s2862] sm:$0xf]
      %v2864 = vld [vmem:[%s2862 + $0x4] sm:$0xf]
      %v2865 = vld [vmem:[%s2862 + $0x8] sm:$0xf]
      %v2866 = vld [vmem:[%s2862 + $0xc] sm:$0xf]
      %v2867 = vld [vmem:[%s2862 + $0x10] sm:$0xf]
      %v2868 = vld [vmem:[%s2862 + $0x14] sm:$0xf]
      %v2869 = vld [vmem:[%s2862 + $0x18] sm:$0xf]
      %v2870 = vld [vmem:[%s2862 + $0x1c] sm:$0xf]
      %v2871 = vld [vmem:[%s2862 + $0x20] sm:$0xf]
      %v2872 = vld [vmem:[%s2862 + $0x24] sm:$0xf]
      %v2873 = vld [vmem:[%s2862 + $0x28] sm:$0xf]
      %v2874 = vld [vmem:[%s2862 + $0x2c] sm:$0xf]
      %v2875 = vld [vmem:[%s2862 + $0x30] sm:$0xf]
      %v2876 = vld [vmem:[%s2862 + $0x34] sm:$0xf]
      %v2877 = vld [vmem:[%s2862 + $0x38] sm:$0xf]
      %v2878 = vld [vmem:[%s2862 + $0x3c] sm:$0xf]
      %v2879 = vunpack.c.l.b16 %v2809
      %v2880 = vunpack.c.l.b16 %v2812
      %v2881 = vunpack.c.l.b16 %v2816
      %v2882 = vunpack.c.l.b16 %v2819
      %v2883 = vunpack.c.l.b16 %v2823
      %v2884 = vunpack.c.l.b16 %v2826
      %v2885 = vunpack.c.l.b16 %v2830
      %v2886 = vunpack.c.l.b16 %v2833
      %v2887 = vunpack.c.l.b16 %v2837
      %v2888 = vunpack.c.l.b16 %v2840
      %v2889 = vunpack.c.l.b16 %v2844
      %v2890 = vunpack.c.l.b16 %v2847
      %v2891 = vunpack.c.l.b16 %v2851
      %v2892 = vunpack.c.l.b16 %v2854
      %v2893 = vunpack.c.l.b16 %v2858
      %v2894 = vunpack.c.l.b16 %v2861
      %v2895 = vpack.c.b16 %v2880, %v2879
      %v2896 = vpack.c.b16 %v2882, %v2881
      %v2897 = vpack.c.b16 %v2884, %v2883
      %v2898 = vpack.c.b16 %v2886, %v2885
      %v2899 = vpack.c.b16 %v2888, %v2887
      %v2900 = vpack.c.b16 %v2890, %v2889
      %v2901 = vpack.c.b16 %v2892, %v2891
      %v2902 = vpack.c.b16 %v2894, %v2893
      %v2927 = vunpack.c.l.b16 %v2863
      %v2928 = vunpack.c.l.b16 %v2864
      %v2929 = vunpack.c.l.b16 %v2865
      %v2930 = vunpack.c.l.b16 %v2866
      %v2931 = vunpack.c.l.b16 %v2867
      %v2932 = vunpack.c.l.b16 %v2868
      %v2933 = vunpack.c.l.b16 %v2869
      %v2934 = vunpack.c.l.b16 %v2870
      %v2935 = vunpack.c.l.b16 %v2871
      %v2936 = vunpack.c.l.b16 %v2872
      %v2937 = vunpack.c.l.b16 %v2873
      %v2938 = vunpack.c.l.b16 %v2874
      %v2939 = vunpack.c.l.b16 %v2875
      %v2940 = vunpack.c.l.b16 %v2876
      %v2941 = vunpack.c.l.b16 %v2877
      %v2942 = vunpack.c.l.b16 %v2878
      %v2943 = vpack.c.b16 %v2928, %v2927
      %v2944 = vpack.c.b16 %v2930, %v2929
      %v2945 = vpack.c.b16 %v2932, %v2931
      %v2946 = vpack.c.b16 %v2934, %v2933
      %v2947 = vpack.c.b16 %v2936, %v2935
      %v2948 = vpack.c.b16 %v2938, %v2937
      %v2949 = vpack.c.b16 %v2940, %v2939
      %v2950 = vpack.c.b16 %v2942, %v2941
      %2959 = vmatprep.subr.bf16.mxu0 0
      %2960 = vmatpush1.bf16.msra.mxu0 %v2943
      %2961 = vmatprep.subr.bf16.mxu0 0
      %2962 = vmatpush1.bf16.msra.mxu0 %v2944
      %2963 = vmatprep.subr.bf16.mxu0 0
      %2964 = vmatpush1.bf16.msra.mxu0 %v2945
      %2965 = vmatprep.subr.bf16.mxu0 0
      %2966 = vmatpush1.bf16.msra.mxu0 %v2946
      %2967 = vmatprep.subr.bf16.mxu0 0
      %2968 = vmatpush1.bf16.msra.mxu0 %v2947
      %2969 = vmatprep.subr.bf16.mxu0 0
      %2970 = vmatpush1.bf16.msra.mxu0 %v2948
      %2971 = vmatprep.subr.bf16.mxu0 0
      %2972 = vmatpush1.bf16.msra.mxu0 %v2949
      %2973 = vmatprep.subr.bf16.mxu0 0
      %2974 = vmatpush1.bf16.msra.mxu0 %v2950
      %2975 = vmatprep.subr.bf16.mxu0 0
      %2976 = vmatpush1.bf16.msra.mxu0 0
      %2977 = vmatprep.subr.bf16.mxu0 0
      %2978 = vmatpush1.bf16.msra.mxu0 0
      %2979 = vmatprep.subr.bf16.mxu0 0
      %2980 = vmatpush1.bf16.msra.mxu0 0
      %2981 = vmatprep.subr.bf16.mxu0 0
      %2982 = vmatpush1.bf16.msra.mxu0 0
      %2983 = vmatprep.subr.bf16.mxu0 0
      %2984 = vmatpush1.bf16.msra.mxu0 0
      %2985 = vmatprep.subr.bf16.mxu0 0
      %2986 = vmatpush1.bf16.msra.mxu0 0
      %2987 = vmatprep.subr.bf16.mxu0 0
      %2988 = vmatpush1.bf16.msra.mxu0 0
      %2989 = vmatprep.subr.bf16.mxu0 0
      %2990 = vmatpush1.bf16.msra.mxu0 0
      %2991 = vmatprep.mubr.bf16.mxu0 0
      %2992 = vmatmul.mubr.bf16.gmra.mrb[0].mxu0 %v2895
      %v2993 = vpop.f32.mrb[0].mxu0
      %v2994 = vadd.f32 0.0, %v2993
      %v2995 = vpop.f32.mrb[0].mxu0
      %v2996 = vpop.f32.mrb[0].mxu0
      %v2997 = vadd.f32 0.0, %v2996
      %v2998 = vpop.f32.mrb[0].mxu0
      %2999 = vmatprep.mubr.bf16.mxu0 0
      %3000 = vmatmul.mubr.bf16.gmra.mrb[0].mxu0 %v2896
      %v3001 = vpop.f32.mrb[0].mxu0
      %v3002 = vadd.f32 0.0, %v3001
      %v3003 = vpop.f32.mrb[0].mxu0
      %v3004 = vpop.f32.mrb[0].mxu0
      %v3005 = vadd.f32 0.0, %v3004
      %v3006 = vpop.f32.mrb[0].mxu0
      %3007 = vmatprep.mubr.bf16.mxu0 0
      %3008 = vmatmul.mubr.bf16.gmra.mrb[0].mxu0 %v2897
      %v3009 = vpop.f32.mrb[0].mxu0
      %v3010 = vadd.f32 0.0, %v3009
      %v3011 = vpop.f32.mrb[0].mxu0
      %v3012 = vpop.f32.mrb[0].mxu0
      %v3013 = vadd.f32 0.0, %v3012
      %v3014 = vpop.f32.mrb[0].mxu0
      %3015 = vmatprep.mubr.bf16.mxu0 0
      %3016 = vmatmul.mubr.bf16.gmra.mrb[0].mxu0 %v2898
      %v3017 = vpop.f32.mrb[0].mxu0
      %v3018 = vadd.f32 0.0, %v3017
      %v3019 = vpop.f32.mrb[0].mxu0
      %v3020 = vpop.f32.mrb[0].mxu0
      %v3021 = vadd.f32 0.0, %v3020
      %v3022 = vpop.f32.mrb[0].mxu0
      %3023 = vmatprep.mubr.bf16.mxu0 0
      %3024 = vmatmul.mubr.bf16.gmra.mrb[0].mxu0 %v2899
      %v3025 = vpop.f32.mrb[0].mxu0
      %v3026 = vadd.f32 0.0, %v3025
      %v3027 = vpop.f32.mrb[0].mxu0
      %v3028 = vpop.f32.mrb[0].mxu0
      %v3029 = vadd.f32 0.0, %v3028
      %v3030 = vpop.f32.mrb[0].mxu0
      %3031 = vmatprep.mubr.bf16.mxu0 0
      %3032 = vmatmul.mubr.bf16.gmra.mrb[0].mxu0 %v2900
      %v3033 = vpop.f32.mrb[0].mxu0
      %v3034 = vadd.f32 0.0, %v3033
      %v3035 = vpop.f32.mrb[0].mxu0
      %v3036 = vpop.f32.mrb[0].mxu0
      %v3037 = vadd.f32 0.0, %v3036
      %v3038 = vpop.f32.mrb[0].mxu0
      %3039 = vmatprep.mubr.bf16.mxu0 0
      %3040 = vmatmul.mubr.bf16.gmra.mrb[0].mxu0 %v2901
      %v3041 = vpop.f32.mrb[0].mxu0
      %v3042 = vadd.f32 0.0, %v3041
      %v3043 = vpop.f32.mrb[0].mxu0
      %v3044 = vpop.f32.mrb[0].mxu0
      %v3045 = vadd.f32 0.0, %v3044
      %v3046 = vpop.f32.mrb[0].mxu0
      %3047 = vmatprep.mubr.bf16.mxu0 0
      %3048 = vmatmul.mubr.bf16.gmra.mrb[0].mxu0 %v2902
      %v3049 = vpop.f32.mrb[0].mxu0
      %v3050 = vadd.f32 0.0, %v3049
      %v3051 = vpop.f32.mrb[0].mxu0
      %v3052 = vpop.f32.mrb[0].mxu0
      %v3053 = vadd.f32 0.0, %v3052
      %v3054 = vpop.f32.mrb[0].mxu0
      %3055 = vdwg.mxu0
      %v3056 = vadd.f32 %v2758, %v2994
      %v3057 = vadd.f32 %v2759, %v2997
      %v3058 = vadd.f32 %v2760, %v3002
      %v3059 = vadd.f32 %v2761, %v3005
      %v3060 = vadd.f32 %v2762, %v3010
      %v3061 = vadd.f32 %v2763, %v3013
      %v3062 = vadd.f32 %v2764, %v3018
      %v3063 = vadd.f32 %v2765, %v3021
      %v3064 = vadd.f32 %v2766, %v3026
      %v3065 = vadd.f32 %v2767, %v3029
      %v3066 = vadd.f32 %v2768, %v3034
      %v3067 = vadd.f32 %v2769, %v3037
      %v3068 = vadd.f32 %v2770, %v3042
      %v3069 = vadd.f32 %v2771, %v3045
      %v3070 = vadd.f32 %v2772, %v3050
      %v3071 = vadd.f32 %v2773, %v3053
      %3072 = vst [vmem:[%s201] sm:$0xff] %v3056
      %3073 = vst [vmem:[%s201 + $0x8] sm:$0xff] %v3057
      %3074 = vst [vmem:[%s201 + $0x10] sm:$0xff] %v3058
      %3075 = vst [vmem:[%s201 + $0x18] sm:$0xff] %v3059
      %3076 = vst [vmem:[%s201 + $0x20] sm:$0xff] %v3060
      %3077 = vst [vmem:[%s201 + $0x28] sm:$0xff] %v3061
      %3078 = vst [vmem:[%s201 + $0x30] sm:$0xff] %v3062
      %3079 = vst [vmem:[%s201 + $0x38] sm:$0xff] %v3063
      %3080 = vst [vmem:[%s201 + $0x40] sm:$0xff] %v3064
      %3081 = vst [vmem:[%s201 + $0x48] sm:$0xff] %v3065
      %3082 = vst [vmem:[%s201 + $0x50] sm:$0xff] %v3066
      %3083 = vst [vmem:[%s201 + $0x58] sm:$0xff] %v3067
      %3084 = vst [vmem:[%s201 + $0x60] sm:$0xff] %v3068
      %3085 = vst [vmem:[%s201 + $0x68] sm:$0xff] %v3069
      %3086 = vst [vmem:[%s201 + $0x70] sm:$0xff] %v3070
      %3087 = vst [vmem:[%s201 + $0x78] sm:$0xff] %v3071
      %v3088 = vld [vmem:[%s206] sm:$0x3]
      %v3089 = vadd.f32 %v3056, %v3057
      %v3090 = vadd.f32 %v3089, %v3058
      %v3091 = vadd.f32 %v3090, %v3059
      %v3092 = vadd.f32 %v3091, %v3060
      %v3093 = vadd.f32 %v3092, %v3061
      %v3094 = vadd.f32 %v3093, %v3062
      %v3095 = vadd.f32 %v3094, %v3063
      %v3096 = vadd.f32 %v3095, %v3064
      %v3097 = vadd.f32 %v3096, %v3065
      %v3098 = vadd.f32 %v3097, %v3066
      %v3099 = vadd.f32 %v3098, %v3067
      %v3100 = vadd.f32 %v3099, %v3068
      %v3101 = vadd.f32 %v3100, %v3069
      %v3102 = vadd.f32 %v3101, %v3070
      %v3103 = vadd.f32 %v3102, %v3071
      %v3104 = vrot.slane %v3103, 4
      %v3105 = vadd.f32 %v3103, %v3104
      %v3106 = vrot.slane %v3105, 2
      %v3107 = vadd.f32 %v3105, %v3106
      %v3108 = vrot.slane %v3107, 1
      %v3109 = vadd.f32 %v3107, %v3108
      %v3110 = vmul.f32 %v3056, %v3056
      %v3111 = vmul.f32 %v3057, %v3057
      %v3112 = vmul.f32 %v3058, %v3058
      %v3113 = vmul.f32 %v3059, %v3059
      %v3114 = vmul.f32 %v3060, %v3060
      %v3115 = vmul.f32 %v3061, %v3061
      %v3116 = vmul.f32 %v3062, %v3062
      %v3117 = vmul.f32 %v3063, %v3063
      %v3118 = vmul.f32 %v3064, %v3064
      %v3119 = vmul.f32 %v3065, %v3065
      %v3120 = vmul.f32 %v3066, %v3066
      %v3121 = vmul.f32 %v3067, %v3067
      %v3122 = vmul.f32 %v3068, %v3068
      %v3123 = vmul.f32 %v3069, %v3069
      %v3124 = vmul.f32 %v3070, %v3070
      %v3125 = vmul.f32 %v3071, %v3071
      %v3126 = vadd.f32 %v3110, %v3111
      %v3127 = vadd.f32 %v3126, %v3112
      %v3128 = vadd.f32 %v3127, %v3113
      %v3129 = vadd.f32 %v3128, %v3114
      %v3130 = vadd.f32 %v3129, %v3115
      %v3131 = vadd.f32 %v3130, %v3116
      %v3132 = vadd.f32 %v3131, %v3117
      %v3133 = vadd.f32 %v3132, %v3118
      %v3134 = vadd.f32 %v3133, %v3119
      %v3135 = vadd.f32 %v3134, %v3120
      %v3136 = vadd.f32 %v3135, %v3121
      %v3137 = vadd.f32 %v3136, %v3122
      %v3138 = vadd.f32 %v3137, %v3123
      %v3139 = vadd.f32 %v3138, %v3124
      %v3140 = vadd.f32 %v3139, %v3125
      %v3141 = vrot.slane %v3140, 4
      %v3142 = vadd.f32 %v3140, %v3141
      %v3143 = vrot.slane %v3142, 2
      %v3144 = vadd.f32 %v3142, %v3143
      %v3145 = vrot.slane %v3144, 1
      %v3146 = vadd.f32 %v3144, %v3145
      %vm3147 = vcmask 1040384
      %v3148 = vsel %vm3147, %v3109, %v3146
      %v3149 = vadd.f32 %v3088, %v3148
      %3150 = vst [vmem:[%s206] sm:$0x3] %v3149
      %s3151 = smul.u32 8, %s20
      %p3152 = scmp.lt.s32.totalorder %s19, 1
      %s3153 = scalar_select %p3152, %s19, 1
      %p3154 = scmp.lt.s32.totalorder %s3151, 15
      %s3155 = scalar_select %p3154, %s3151, 15
      %s3156 = smul.addr %s3155, 2
      %s3157 = smul.addr %s3153, 32
      %s3158 = sadd.s32 %s3156, %s3157
      %s3159 = smul.addr %s3158, 8
      %s3160 = scalar_lea.vmem %s2, %s3159
      %p3161 = scmp.lt.s32.totalorder %s19, 1
      %s3162 = scalar_select %p3161, %s19, 1
      %s3163 = smul.addr %s3162, 2
      %s3164 = scalar_lea.vmem %s3, %s3163
      // Predicated region
      $region33: #{bottleneck_forward.9} parent=27 // pred_check
        %p3165 = pneg %p94
      $region34: #{bottleneck_forward.9} parent=27 // pred_check_branch
        %3167 = sbr.rel (%p3165) target = $region36
      $region35: #{bottleneck_forward.9} parent=27 // pred_region
        %s3168 = smul.u32 8, %s20
      $region36: #{bottleneck_forward.9} parent=27 // pred_fallthru
        _
      // Predicated region
      $region37: #{bottleneck_forward.9} parent=27 // pred_check
        %p3169 = pneg %p120
      $region38: #{bottleneck_forward.9} parent=27 // pred_check_branch
        %3171 = sbr.rel (%p3169) target = $region40
      $region39: #{bottleneck_forward.9} parent=27 // pred_region
        _
      $region40: #{bottleneck_forward.9} parent=27 // pred_fallthru
        _
    $region28: #{bottleneck_forward.9} parent=5 // pred_fallthru
      _
    %p3172 = scmp.le.s32.totalorder 2, %s10
    // Predicated region
    $region41: #{bottleneck_forward.9} parent=5 // pred_check
      %p3173 = pneg %p3172
    $region42: #{bottleneck_forward.9} parent=5 // pred_check_branch
      %3175 = sbr.rel (%p3173) target = $region44
    $region43: #{bottleneck_forward.9} parent=5 // pred_region
      %s3176 = ssub.s32 %s10, 2
      // Predicated region
      $region45: #{bottleneck_forward.9} parent=43 // pred_check
        %p3177 = pneg %p100
      $region46: #{bottleneck_forward.9} parent=43 // pred_check_branch
        %3179 = sbr.rel (%p3177) target = $region48
      $region47: #{bottleneck_forward.9} parent=43 // pred_region
        %s3180 = smul.u32 8, %s22
        %p3181 = scmp.lt.s32.totalorder %s21, 1
        %s3182 = scalar_select %p3181, %s21, 1
        %p3183 = scmp.lt.s32.totalorder %s3180, 15
        %s3184 = scalar_select %p3183, %s3180, 15
        %s3185 = smul.addr %s3184, 2
        %s3186 = smul.addr %s3182, 32
        %s3187 = sadd.s32 %s3185, %s3186
        %s3188 = smul.addr %s3187, 8
        %s3189 = scalar_lea.vmem %s2, %s3188
      $region48: #{bottleneck_forward.9} parent=43 // pred_fallthru
        _
      // Predicated region
      $region49: #{bottleneck_forward.9} parent=43 // pred_check
        %p3190 = pneg %p126
      $region50: #{bottleneck_forward.9} parent=43 // pred_check_branch
        %3192 = sbr.rel (%p3190) target = $region52
      $region51: #{bottleneck_forward.9} parent=43 // pred_region
        %p3193 = scmp.lt.s32.totalorder %s21, 1
        %s3194 = scalar_select %p3193, %s21, 1
        %s3195 = smul.addr %s3194, 2
        %s3196 = scalar_lea.vmem %s3, %s3195
      $region52: #{bottleneck_forward.9} parent=43 // pred_fallthru
        _
    $region44: #{bottleneck_forward.9} parent=5 // pred_fallthru
      _
  $region6: #{bottleneck_forward.9} parent=0 // loop_footer
    %s14 = sadd.s32 1, %s10
  $region7: #{bottleneck_forward.9} parent=0 // loop_footer_branch
    %9 = sbr.rel target = $region3
  $region8: #{bottleneck_forward.9} parent=0 // loop_exit
    _

</llo_original>
